<compile_context>
chip_gen: v5e
topology: v5e:2x2
jax: 0.10.0
libtpu: 0.0.40
codegen_flags: <defaults>
</compile_context>

<pallas_src>
import jax
import jax.numpy as jnp
from jax.experimental import pallas as pl
from jax.experimental.pallas import tpu as pltpu

_BN_EPS = 1e-5
_VMEM_LIMIT = 32 * 1024 * 1024


def _pick_tile(total, target, unit=1):
    """Largest divisor d of `total` with d <= target and (d*unit) % 8 == 0; else `total`."""
    target = max(1, min(int(target), int(total)))
    for d in range(target, 0, -1):
        if total % d == 0 and (d * unit) % 8 == 0:
            return d
    return total


# --------------------------------------------------------------------------
# Pass 1: conv3x3 as 3 MXU matmuls with K = 3*Cin (+bias/+ReLU, + BN partials)
# --------------------------------------------------------------------------
def _make_conv_kernel(tile_rows, wpix, kdim, cout, use_bias, use_relu, emit_stats):
    tm = tile_rows * wpix  # output pixels handled by this grid step

    def kernel(*refs):
        i = 0
        x_ref = refs[i]; i += 1            # (tile_rows, wpix+2, kdim) bf16  dy-stacked rows
        w_ref = refs[i]; i += 1            # (3, kdim, cout)           bf16
        b_ref = None
        if use_bias:
            b_ref = refs[i]; i += 1        # (1, cout) f32
        o_ref = refs[i]; i += 1            # (tm, cout) f32
        sum_ref = ssq_ref = None
        if emit_stats:
            sum_ref = refs[i]              # (1, 1, cout) f32
            ssq_ref = refs[i + 1]          # (1, 1, cout) f32

        acc = None
        for dx in range(3):                # statically unrolled; dx taps via sublane shift
            xt = x_ref[:, dx:dx + wpix, :].reshape(tm, kdim)
            p = jnp.dot(xt, w_ref[dx], preferred_element_type=jnp.float32)
            acc = p if acc is None else acc + p
        if use_bias:
            acc = acc + b_ref[...]
        if use_relu:
            acc = jnp.maximum(acc, 0.0)
        o_ref[...] = acc
        if emit_stats:
            sum_ref[...] = jnp.sum(acc, axis=0, keepdims=True).reshape(1, 1, cout)
            ssq_ref[...] = jnp.sum(acc * acc, axis=0, keepdims=True).reshape(1, 1, cout)

    return kernel


# --------------------------------------------------------------------------
# Pass 2: BN apply (+ReLU, +residual) on a lane-dense (rows, 128) view
# --------------------------------------------------------------------------
def _make_bn_apply_kernel(m_total, use_relu, use_res, eps=_BN_EPS):
    inv_m = 1.0 / float(m_total)

    def kernel(*refs):
        i = 0
        y_ref = refs[i]; i += 1            # (trn, L) f32   lane-dense conv output tile
        sum_ref = refs[i]; i += 1          # (T, 1, C) f32  per-conv-tile partial sums
        ssq_ref = refs[i]; i += 1          # (T, 1, C) f32  per-conv-tile partial sum-sq
        g_ref = refs[i]; i += 1            # (1, C) f32     gamma
        b_ref = refs[i]; i += 1            # (1, C) f32     beta
        rep_ref = refs[i]; i += 1          # (C, L) f32     channel -> lane replication
        r_ref = None
        if use_res:
            r_ref = refs[i]; i += 1        # (trn, L) f32   residual (aliased with output)
        o_ref = refs[i]                    # (trn, L) f32

        # Reduce the per-tile partials (two-pass BN: correct under any M tiling).
        mean = jnp.sum(sum_ref[...], axis=0) * inv_m             # (1, C)
        ex2 = jnp.sum(ssq_ref[...], axis=0) * inv_m              # (1, C)
        var = jnp.maximum(ex2 - mean * mean, 0.0)                # biased variance
        inv_std = jax.lax.rsqrt(var + eps)
        scale = g_ref[...] * inv_std                             # (1, C)
        shift = b_ref[...] - mean * scale                        # (1, C)
        # Replicate per-channel scale/shift across the lane-dense layout with a
        # tiny MXU matmul (rep[c, l] = 1 iff l % C == c).
        cdim = scale.shape[1]
        sc8 = jnp.broadcast_to(scale, (8, cdim))
        sh8 = jnp.broadcast_to(shift, (8, cdim))
        scale_l = jnp.dot(sc8, rep_ref[...], preferred_element_type=jnp.float32)[0:1, :]
        shift_l = jnp.dot(sh8, rep_ref[...], preferred_element_type=jnp.float32)[0:1, :]

        y = y_ref[...] * scale_l + shift_l
        if use_relu:
            y = jnp.maximum(y, 0.0)
        if use_res:
            y = y + r_ref[...]
        o_ref[...] = y

    return kernel


# --------------------------------------------------------------------------
# One fused conv block: conv(+bias/+ReLU)  [+ BN(+ReLU)(+residual) second pass]
# --------------------------------------------------------------------------
def conv3x3(x_nhwc, w3, *, bias=None, bn=None, relu=False, residual=None,
            pad_mode='zeros', conv_tile_pix=4096, norm_tile_rows=2048):
    N, H, W, Cin = x_nhwc.shape
    Cout = w3.shape[-1]
    kdim = w3.shape[1]                     # 3 * Cin
    M = N * H * W
    assert residual is None or bn is not None

    # ---- layout glue (XLA): pad + dy-stack (3x expansion, dx taps formed in-kernel) ----
    mode = 'reflect' if pad_mode == 'reflection' else 'constant'
    xp = jnp.pad(x_nhwc, ((0, 0), (1, 1), (1, 1), (0, 0)), mode=mode)
    xs = jnp.concatenate([xp[:, dy:dy + H, :, :] for dy in range(3)], axis=-1)
    xrows = xs.reshape(N * H, W + 2, kdim).astype(jnp.bfloat16)

    tile_rows = _pick_tile(N * H, max(1, conv_tile_pix // W), unit=W)
    n_tiles = (N * H) // tile_rows
    tm = tile_rows * W
    emit_stats = bn is not None

    conv_args = [xrows, w3]
    in_specs = [
        pl.BlockSpec((tile_rows, W + 2, kdim), lambda i: (i, 0, 0)),
        pl.BlockSpec((3, kdim, Cout), lambda i: (0, 0, 0)),
    ]
    if bias is not None:
        conv_args.append(bias)
        in_specs.append(pl.BlockSpec((1, Cout), lambda i: (0, 0)))

    y_shape = jax.ShapeDtypeStruct((M, Cout), jnp.float32)
    y_spec = pl.BlockSpec((tm, Cout), lambda i: (i, 0))
    if emit_stats:
        st_shape = jax.ShapeDtypeStruct((n_tiles, 1, Cout), jnp.float32)
        st_spec = pl.BlockSpec((1, 1, Cout), lambda i: (i, 0, 0))
        out_shape = (y_shape, st_shape, st_shape)
        out_specs = (y_spec, st_spec, st_spec)
    else:
        out_shape = y_shape
        out_specs = y_spec

    cparams = pltpu.CompilerParams(dimension_semantics=("parallel",),
                                   vmem_limit_bytes=_VMEM_LIMIT)
    conv_kernel = _make_conv_kernel(tile_rows, W, kdim, Cout,
                                    use_bias=bias is not None,
                                    use_relu=relu and not emit_stats,
                                    emit_stats=emit_stats)
    res = pl.pallas_call(
        conv_kernel,
        grid=(n_tiles,),
        in_specs=in_specs,
        out_specs=out_specs,
        out_shape=out_shape,
        compiler_params=cparams,
    )(*conv_args)

    if not emit_stats:
        return res.reshape(N, H, W, Cout)

    y, sums, ssqs = res
    gamma, beta = bn

    # Lane-dense view of the (M, Cout) slab for the elementwise BN/ReLU/residual pass.
    if 128 % Cout == 0 and (M * Cout) % 128 == 0:
        lanes = 128
    else:
        lanes = Cout
    rows = (M * Cout) // lanes
    rep = (jnp.arange(lanes)[None, :] % Cout ==
           jnp.arange(Cout)[:, None]).astype(jnp.float32)        # (Cout, lanes)

    trn = _pick_tile(rows, norm_tile_rows, unit=1)
    n_ntiles = rows // trn

    norm_args = [y.reshape(rows, lanes), sums, ssqs, gamma, beta, rep]
    norm_specs = [
        pl.BlockSpec((trn, lanes), lambda i: (i, 0)),
        pl.BlockSpec((n_tiles, 1, Cout), lambda i: (0, 0, 0)),
        pl.BlockSpec((n_tiles, 1, Cout), lambda i: (0, 0, 0)),
        pl.BlockSpec((1, Cout), lambda i: (0, 0)),
        pl.BlockSpec((1, Cout), lambda i: (0, 0)),
        pl.BlockSpec((Cout, lanes), lambda i: (0, 0)),
    ]
    io_alias = {}
    if residual is not None:
        norm_args.append(residual.astype(jnp.float32).reshape(rows, lanes))
        norm_specs.append(pl.BlockSpec((trn, lanes), lambda i: (i, 0)))
        io_alias = {len(norm_args) - 1: 0}    # write result in place of the residual buffer

    bn_kernel = _make_bn_apply_kernel(M, use_relu=relu, use_res=residual is not None)
    out = pl.pallas_call(
        bn_kernel,
        grid=(n_ntiles,),
        in_specs=norm_specs,
        out_specs=pl.BlockSpec((trn, lanes), lambda i: (i, 0)),
        out_shape=jax.ShapeDtypeStruct((rows, lanes), jnp.float32),
        input_output_aliases=io_alias,
        compiler_params=cparams,
    )(*norm_args)
    return out.reshape(N, H, W, Cout)


# --------------------------------------------------------------------------
# Parameters & forward
# --------------------------------------------------------------------------
def init_params(key, nch_in, nch_out, nch_ker, nblk):
    keys = iter(jax.random.split(key, 7 + 6 * nblk))

    def conv_w(k, cin, cout):
        bound = (cin * 9) ** -0.5           # PyTorch kaiming-uniform-style bound
        return jax.random.uniform(k, (3, 3, cin, cout), jnp.float32, -bound, bound)

    def conv_b(k, cin, cout):
        bound = (cin * 9) ** -0.5
        return jax.random.uniform(k, (cout,), jnp.float32, -bound, bound)

    params = {
        'enc_w': conv_w(next(keys), nch_in, nch_ker),
        'enc_b': conv_b(next(keys), nch_in, nch_ker),
        'blocks': [],
    }
    for _ in range(nblk):
        params['blocks'].append({
            'w1': conv_w(next(keys), nch_ker, nch_ker),
            'g1': 1.0 + 0.1 * jax.random.normal(next(keys), (nch_ker,), jnp.float32),
            'b1': 0.1 * jax.random.normal(next(keys), (nch_ker,), jnp.float32),
            'w2': conv_w(next(keys), nch_ker, nch_ker),
            'g2': 1.0 + 0.1 * jax.random.normal(next(keys), (nch_ker,), jnp.float32),
            'b2': 0.1 * jax.random.normal(next(keys), (nch_ker,), jnp.float32),
        })
    params['dec_w'] = conv_w(next(keys), nch_ker, nch_ker)
    params['dec_g'] = 1.0 + 0.1 * jax.random.normal(next(keys), (nch_ker,), jnp.float32)
    params['dec_b'] = 0.1 * jax.random.normal(next(keys), (nch_ker,), jnp.float32)
    params['out_w'] = conv_w(next(keys), nch_ker, nch_out)
    params['out_b'] = conv_b(next(keys), nch_ker, nch_out)
    return params


def _prep_conv_w(w_hwio):
    """(dy, dx, Cin, Cout) -> (dx, 3*Cin, Cout) bf16 with w3[dx, dy*Cin + c, o] = w[dy, dx, c, o]."""
    ky, kx, cin, cout = w_hwio.shape
    return jnp.transpose(w_hwio, (1, 0, 2, 3)).reshape(kx, ky * cin, cout).astype(jnp.bfloat16)


def resnet_forward(params, x_nchw, *, conv_tile_pix=4096, norm_tile_rows=2048):
    """Matches ResNet.forward: enc1 -> nblk ResBlocks -> dec1 (+x0) -> conv1."""
    x = jnp.transpose(x_nchw, (0, 2, 3, 1)).astype(jnp.float32)   # NCHW -> NHWC

    # Hoist all weight/bias/affine re-layouts & casts once per forward (not per call).
    enc_w = _prep_conv_w(params['enc_w'])
    enc_b = params['enc_b'].reshape(1, -1).astype(jnp.float32)
    blocks = []
    for blk in params['blocks']:
        blocks.append(dict(
            w1=_prep_conv_w(blk['w1']),
            bn1=(blk['g1'].reshape(1, -1).astype(jnp.float32),
                 blk['b1'].reshape(1, -1).astype(jnp.float32)),
            w2=_prep_conv_w(blk['w2']),
            bn2=(blk['g2'].reshape(1, -1).astype(jnp.float32),
                 blk['b2'].reshape(1, -1).astype(jnp.float32)),
        ))
    dec_w = _prep_conv_w(params['dec_w'])
    dec_bn = (params['dec_g'].reshape(1, -1).astype(jnp.float32),
              params['dec_b'].reshape(1, -1).astype(jnp.float32))
    out_w = _prep_conv_w(params['out_w'])
    out_b = params['out_b'].reshape(1, -1).astype(jnp.float32)

    kw = dict(conv_tile_pix=conv_tile_pix, norm_tile_rows=norm_tile_rows)

    # enc1: CNR2d(norm=[], relu=0.0) -> conv(bias, zero pad) + ReLU (fused in conv pass)
    x = conv3x3(x, enc_w, bias=enc_b, relu=True, pad_mode='zeros', **kw)
    x0 = x
    # res: nblk x ResBlock (reflection pad, bnorm, relu then no relu, + skip)
    for blk in blocks:
        h = conv3x3(x, blk['w1'], bn=blk['bn1'], relu=True,
                    pad_mode='reflection', **kw)
        x = conv3x3(h, blk['w2'], bn=blk['bn2'], relu=False, residual=x,
                    pad_mode='reflection', **kw)
    # dec1: conv(no bias, zero pad) + bnorm, then x = x + x0 (fused into BN-apply pass)
    x = conv3x3(x, dec_w, bn=dec_bn, relu=False, residual=x0,
                pad_mode='zeros', **kw)
    # conv1: plain conv(bias, zero pad)
    x = conv3x3(x, out_w, bias=out_b, relu=False, pad_mode='zeros', **kw)
    return jnp.transpose(x, (0, 3, 1, 2))                          # NHWC -> NCHW


if __name__ == "__main__":
    key = jax.random.PRNGKey(0)
    kx, kp = jax.random.split(key)

    # Small shapes consistent with the module (nch_in=3, nch_out=3, nch_ker=32, nblk=4)
    N, nch_in, H, W = 2, 3, 16, 16
    nch_out, nch_ker, nblk = 3, 32, 4

    x = jax.random.normal(kx, (N, nch_in, H, W), jnp.float32)      # PyTorch-style NCHW
    params = init_params(kp, nch_in, nch_out, nch_ker, nblk)

    # Small tiles so the multi-tile grid + cross-tile two-pass BN path is exercised
    # even at this toy spatial size (realistic sizes use the larger defaults).
    fwd = jax.jit(lambda p, xx: resnet_forward(p, xx,
                                               conv_tile_pix=128, norm_tile_rows=32))
    y = jax.block_until_ready(fwd(params, x))

    assert y.shape == (N, nch_out, H, W), y.shape
    assert bool(jnp.all(jnp.isfinite(y)))
    print("KERNEL_OK")
</pallas_src>

<mosaic_0001>
module attributes {stable_mosaic.version = 11 : i64} {
  func.func @kernel(%arg0: i32, %arg1: memref<8x18x9xbf16, #tpu.memory_space<vmem>>, %arg2: memref<3x9x32xbf16, #tpu.memory_space<vmem>>, %arg3: memref<1x32xf32, #tpu.memory_space<vmem>>, %arg4: memref<128x32xf32, #tpu.memory_space<vmem>>) attributes {dimension_semantics = [#tpu.dimension_semantics<parallel>], iteration_bounds = array<i64: 4>, scalar_prefetch = 0 : i64, scratch_operands = 0 : i64, tpu.core_type = #tpu.core_type<tc>, window_params = [{transform_indices = @transform_0, window_bounds = array<i64: 8, 18, 9>}, {pipeline_mode = #tpu.pipeline_mode<synchronous>, transform_indices = @transform_1, window_bounds = array<i64: 3, 9, 32>}, {pipeline_mode = #tpu.pipeline_mode<synchronous>, transform_indices = @transform_2, window_bounds = array<i64: 1, 32>}, {transform_indices = @transform_3, window_bounds = array<i64: 128, 32>}]} {
    %c0 = arith.constant 0 : index
    %c0_0 = arith.constant 0 : index
    %c0_1 = arith.constant 0 : index
    %0 = vector.load %arg1[%c0, %c0_0, %c0_1] : memref<8x18x9xbf16, #tpu.memory_space<vmem>>, vector<8x16x9xbf16>
    %1 = vector.shape_cast %0 : vector<8x16x9xbf16> to vector<128x9xbf16>
    %c0_2 = arith.constant 0 : index
    %c0_3 = arith.constant 0 : index
    %c0_4 = arith.constant 0 : index
    %2 = vector.load %arg2[%c0_2, %c0_3, %c0_4] : memref<3x9x32xbf16, #tpu.memory_space<vmem>>, vector<1x9x32xbf16>
    %3 = vector.shape_cast %2 : vector<1x9x32xbf16> to vector<9x32xbf16>
    %cst = arith.constant dense<0.000000e+00> : vector<128x32xf32>
    %4 = tpu.matmul %1, %3, %cst {dimension_numbers = #tpu.dot_dimension_numbers<[1], [0], [0], [1], [0, 0, 1, 1], [], []>} : vector<128x9xbf16>, vector<9x32xbf16>, vector<128x32xf32> -> vector<128x32xf32>
    %c0_5 = arith.constant 0 : index
    %c1 = arith.constant 1 : index
    %c0_6 = arith.constant 0 : index
    %5 = vector.load %arg1[%c0_5, %c1, %c0_6] : memref<8x18x9xbf16, #tpu.memory_space<vmem>>, vector<8x16x9xbf16>
    %6 = vector.shape_cast %5 : vector<8x16x9xbf16> to vector<128x9xbf16>
    %c1_7 = arith.constant 1 : index
    %c0_8 = arith.constant 0 : index
    %c0_9 = arith.constant 0 : index
    %7 = vector.load %arg2[%c1_7, %c0_8, %c0_9] : memref<3x9x32xbf16, #tpu.memory_space<vmem>>, vector<1x9x32xbf16>
    %8 = vector.shape_cast %7 : vector<1x9x32xbf16> to vector<9x32xbf16>
    %cst_10 = arith.constant dense<0.000000e+00> : vector<128x32xf32>
    %9 = tpu.matmul %6, %8, %cst_10 {dimension_numbers = #tpu.dot_dimension_numbers<[1], [0], [0], [1], [0, 0, 1, 1], [], []>} : vector<128x9xbf16>, vector<9x32xbf16>, vector<128x32xf32> -> vector<128x32xf32>
    %10 = arith.addf %4, %9 : vector<128x32xf32>
    %c0_11 = arith.constant 0 : index
    %c2 = arith.constant 2 : index
    %c0_12 = arith.constant 0 : index
    %11 = vector.load %arg1[%c0_11, %c2, %c0_12] : memref<8x18x9xbf16, #tpu.memory_space<vmem>>, vector<8x16x9xbf16>
    %12 = vector.shape_cast %11 : vector<8x16x9xbf16> to vector<128x9xbf16>
    %c2_13 = arith.constant 2 : index
    %c0_14 = arith.constant 0 : index
    %c0_15 = arith.constant 0 : index
    %13 = vector.load %arg2[%c2_13, %c0_14, %c0_15] : memref<3x9x32xbf16, #tpu.memory_space<vmem>>, vector<1x9x32xbf16>
    %14 = vector.shape_cast %13 : vector<1x9x32xbf16> to vector<9x32xbf16>
    %cst_16 = arith.constant dense<0.000000e+00> : vector<128x32xf32>
    %15 = tpu.matmul %12, %14, %cst_16 {dimension_numbers = #tpu.dot_dimension_numbers<[1], [0], [0], [1], [0, 0, 1, 1], [], []>} : vector<128x9xbf16>, vector<9x32xbf16>, vector<128x32xf32> -> vector<128x32xf32>
    %16 = arith.addf %10, %15 : vector<128x32xf32>
    %c0_17 = arith.constant 0 : index
    %c0_18 = arith.constant 0 : index
    %17 = vector.load %arg3[%c0_17, %c0_18] : memref<1x32xf32, #tpu.memory_space<vmem>>, vector<1x32xf32>
    %18 = vector.broadcast %17 : vector<1x32xf32> to vector<128x32xf32>
    %19 = arith.addf %16, %18 : vector<128x32xf32>
    %cst_19 = arith.constant 0.000000e+00 : f32
    %20 = vector.broadcast %cst_19 : f32 to vector<128x32xf32>
    %21 = arith.maximumf %19, %20 : vector<128x32xf32>
    %c0_20 = arith.constant 0 : index
    %c0_21 = arith.constant 0 : index
    %22 = vector.load %arg4[%c0_20, %c0_21] : memref<128x32xf32, #tpu.memory_space<vmem>>, vector<128x32xf32>
    tpu.vector_store %arg4[%c0_20, %c0_21], %21 {strides = array<i32>} : memref<128x32xf32, #tpu.memory_space<vmem>>, vector<128x32xf32>,
    return
  }
  func.func @transform_0(%arg0: i32) -> (i32, i32, i32) {
    %c0_i32 = arith.constant 0 : i32
    %c0_i32_0 = arith.constant 0 : i32
    %c0_i32_1 = arith.constant 0 : i32
    return %arg0, %c0_i32, %c0_i32_0 : i32, i32, i32
  }
  func.func @transform_1(%arg0: i32) -> (i32, i32, i32) {
    %c0_i32 = arith.constant 0 : i32
    %c0_i32_0 = arith.constant 0 : i32
    %c0_i32_1 = arith.constant 0 : i32
    %c0_i32_2 = arith.constant 0 : i32
    return %c0_i32, %c0_i32_0, %c0_i32_1 : i32, i32, i32
  }
  func.func @transform_2(%arg0: i32) -> (i32, i32) {
    %c0_i32 = arith.constant 0 : i32
    %c0_i32_0 = arith.constant 0 : i32
    %c0_i32_1 = arith.constant 0 : i32
    return %c0_i32, %c0_i32_0 : i32, i32
  }
  func.func @transform_3(%arg0: i32) -> (i32, i32) {
    %c0_i32 = arith.constant 0 : i32
    %c0_i32_0 = arith.constant 0 : i32
    return %arg0, %c0_i32 : i32, i32
  }
}

module attributes {stable_mosaic.version = 11 : i64} {
  func.func @kernel(%arg0: i32, %arg1: memref<8x18x96xbf16, #tpu.memory_space<vmem>>, %arg2: memref<3x96x32xbf16, #tpu.memory_space<vmem>>, %arg3: memref<128x32xf32, #tpu.memory_space<vmem>>, %arg4: memref<1x1x32xf32, #tpu.memory_space<vmem>>, %arg5: memref<1x1x32xf32, #tpu.memory_space<vmem>>) attributes {dimension_semantics = [#tpu.dimension_semantics<parallel>], iteration_bounds = array<i64: 4>, scalar_prefetch = 0 : i64, scratch_operands = 0 : i64, tpu.core_type = #tpu.core_type<tc>, window_params = [{transform_indices = @transform_0, window_bounds = array<i64: 8, 18, 96>}, {pipeline_mode = #tpu.pipeline_mode<synchronous>, transform_indices = @transform_1, window_bounds = array<i64: 3, 96, 32>}, {transform_indices = @transform_2, window_bounds = array<i64: 128, 32>}, {transform_indices = @transform_3, window_bounds = array<i64: 1, 1, 32>}, {transform_indices = @transform_4, window_bounds = array<i64: 1, 1, 32>}]} {
    %c0 = arith.constant 0 : index
    %c0_0 = arith.constant 0 : index
    %c0_1 = arith.constant 0 : index
    %0 = vector.load %arg1[%c0, %c0_0, %c0_1] : memref<8x18x96xbf16, #tpu.memory_space<vmem>>, vector<8x16x96xbf16>
    %1 = vector.shape_cast %0 : vector<8x16x96xbf16> to vector<128x96xbf16>
    %c0_2 = arith.constant 0 : index
    %c0_3 = arith.constant 0 : index
    %c0_4 = arith.constant 0 : index
    %2 = vector.load %arg2[%c0_2, %c0_3, %c0_4] : memref<3x96x32xbf16, #tpu.memory_space<vmem>>, vector<1x96x32xbf16>
    %3 = vector.shape_cast %2 : vector<1x96x32xbf16> to vector<96x32xbf16>
    %cst = arith.constant dense<0.000000e+00> : vector<128x32xf32>
    %4 = tpu.matmul %1, %3, %cst {dimension_numbers = #tpu.dot_dimension_numbers<[1], [0], [0], [1], [0, 0, 1, 1], [], []>} : vector<128x96xbf16>, vector<96x32xbf16>, vector<128x32xf32> -> vector<128x32xf32>
    %c0_5 = arith.constant 0 : index
    %c1 = arith.constant 1 : index
    %c0_6 = arith.constant 0 : index
    %5 = vector.load %arg1[%c0_5, %c1, %c0_6] : memref<8x18x96xbf16, #tpu.memory_space<vmem>>, vector<8x16x96xbf16>
    %6 = vector.shape_cast %5 : vector<8x16x96xbf16> to vector<128x96xbf16>
    %c1_7 = arith.constant 1 : index
    %c0_8 = arith.constant 0 : index
    %c0_9 = arith.constant 0 : index
    %7 = vector.load %arg2[%c1_7, %c0_8, %c0_9] : memref<3x96x32xbf16, #tpu.memory_space<vmem>>, vector<1x96x32xbf16>
    %8 = vector.shape_cast %7 : vector<1x96x32xbf16> to vector<96x32xbf16>
    %cst_10 = arith.constant dense<0.000000e+00> : vector<128x32xf32>
    %9 = tpu.matmul %6, %8, %cst_10 {dimension_numbers = #tpu.dot_dimension_numbers<[1], [0], [0], [1], [0, 0, 1, 1], [], []>} : vector<128x96xbf16>, vector<96x32xbf16>, vector<128x32xf32> -> vector<128x32xf32>
    %10 = arith.addf %4, %9 : vector<128x32xf32>
    %c0_11 = arith.constant 0 : index
    %c2 = arith.constant 2 : index
    %c0_12 = arith.constant 0 : index
    %11 = vector.load %arg1[%c0_11, %c2, %c0_12] : memref<8x18x96xbf16, #tpu.memory_space<vmem>>, vector<8x16x96xbf16>
    %12 = vector.shape_cast %11 : vector<8x16x96xbf16> to vector<128x96xbf16>
    %c2_13 = arith.constant 2 : index
    %c0_14 = arith.constant 0 : index
    %c0_15 = arith.constant 0 : index
    %13 = vector.load %arg2[%c2_13, %c0_14, %c0_15] : memref<3x96x32xbf16, #tpu.memory_space<vmem>>, vector<1x96x32xbf16>
    %14 = vector.shape_cast %13 : vector<1x96x32xbf16> to vector<96x32xbf16>
    %cst_16 = arith.constant dense<0.000000e+00> : vector<128x32xf32>
    %15 = tpu.matmul %12, %14, %cst_16 {dimension_numbers = #tpu.dot_dimension_numbers<[1], [0], [0], [1], [0, 0, 1, 1], [], []>} : vector<128x96xbf16>, vector<96x32xbf16>, vector<128x32xf32> -> vector<128x32xf32>
    %16 = arith.addf %10, %15 : vector<128x32xf32>
    %c0_17 = arith.constant 0 : index
    %c0_18 = arith.constant 0 : index
    %17 = vector.load %arg3[%c0_17, %c0_18] : memref<128x32xf32, #tpu.memory_space<vmem>>, vector<128x32xf32>
    tpu.vector_store %arg3[%c0_17, %c0_18], %16 {strides = array<i32>} : memref<128x32xf32, #tpu.memory_space<vmem>>, vector<128x32xf32>,
    %cst_19 = arith.constant dense<0.000000e+00> : vector<32xf32>
    %18 = vector.multi_reduction <add>, %16, %cst_19 [0] : vector<128x32xf32> to vector<32xf32>
    %19 = vector.shape_cast %18 : vector<32xf32> to vector<1x32xf32>
    %20 = vector.shape_cast %19 : vector<1x32xf32> to vector<1x1x32xf32>
    %c0_20 = arith.constant 0 : index
    %c0_21 = arith.constant 0 : index
    %c0_22 = arith.constant 0 : index
    %21 = vector.load %arg4[%c0_20, %c0_21, %c0_22] : memref<1x1x32xf32, #tpu.memory_space<vmem>>, vector<1x1x32xf32>
    tpu.vector_store %arg4[%c0_20, %c0_21, %c0_22], %20 {strides = array<i32>} : memref<1x1x32xf32, #tpu.memory_space<vmem>>, vector<1x1x32xf32>,
    %22 = arith.mulf %16, %16 : vector<128x32xf32>
    %cst_23 = arith.constant dense<0.000000e+00> : vector<32xf32>
    %23 = vector.multi_reduction <add>, %22, %cst_23 [0] : vector<128x32xf32> to vector<32xf32>
    %24 = vector.shape_cast %23 : vector<32xf32> to vector<1x32xf32>
    %25 = vector.shape_cast %24 : vector<1x32xf32> to vector<1x1x32xf32>
    %c0_24 = arith.constant 0 : index
    %c0_25 = arith.constant 0 : index
    %c0_26 = arith.constant 0 : index
    %26 = vector.load %arg5[%c0_24, %c0_25, %c0_26] : memref<1x1x32xf32, #tpu.memory_space<vmem>>, vector<1x1x32xf32>
    tpu.vector_store %arg5[%c0_24, %c0_25, %c0_26], %25 {strides = array<i32>} : memref<1x1x32xf32, #tpu.memory_space<vmem>>, vector<1x1x32xf32>,
    return
  }
  func.func @transform_0(%arg0: i32) -> (i32, i32, i32) {
    %c0_i32 = arith.constant 0 : i32
    %c0_i32_0 = arith.constant 0 : i32
    %c0_i32_1 = arith.constant 0 : i32
    return %arg0, %c0_i32, %c0_i32_0 : i32, i32, i32
  }
  func.func @transform_1(%arg0: i32) -> (i32, i32, i32) {
    %c0_i32 = arith.constant 0 : i32
    %c0_i32_0 = arith.constant 0 : i32
    %c0_i32_1 = arith.constant 0 : i32
    %c0_i32_2 = arith.constant 0 : i32
    return %c0_i32, %c0_i32_0, %c0_i32_1 : i32, i32, i32
  }
  func.func @transform_2(%arg0: i32) -> (i32, i32) {
    %c0_i32 = arith.constant 0 : i32
    %c0_i32_0 = arith.constant 0 : i32
    return %arg0, %c0_i32 : i32, i32
  }
  func.func @transform_3(%arg0: i32) -> (i32, i32, i32) {
    %c0_i32 = arith.constant 0 : i32
    %c0_i32_0 = arith.constant 0 : i32
    %c0_i32_1 = arith.constant 0 : i32
    return %arg0, %c0_i32, %c0_i32_0 : i32, i32, i32
  }
  func.func @transform_4(%arg0: i32) -> (i32, i32, i32) {
    %c0_i32 = arith.constant 0 : i32
    %c0_i32_0 = arith.constant 0 : i32
    %c0_i32_1 = arith.constant 0 : i32
    return %arg0, %c0_i32, %c0_i32_0 : i32, i32, i32
  }
}

module attributes {stable_mosaic.version = 11 : i64} {
  func.func @kernel(%arg0: i32, %arg1: memref<32x128xf32, #tpu.memory_space<vmem>>, %arg2: memref<4x1x32xf32, #tpu.memory_space<vmem>>, %arg3: memref<4x1x32xf32, #tpu.memory_space<vmem>>, %arg4: memref<1x32xf32, #tpu.memory_space<vmem>>, %arg5: memref<1x32xf32, #tpu.memory_space<vmem>>, %arg6: memref<32x128xf32, #tpu.memory_space<vmem>>, %arg7: memref<32x128xf32, #tpu.memory_space<vmem>>) attributes {dimension_semantics = [#tpu.dimension_semantics<parallel>], iteration_bounds = array<i64: 4>, scalar_prefetch = 0 : i64, scratch_operands = 0 : i64, tpu.core_type = #tpu.core_type<tc>, window_params = [{transform_indices = @transform_0, window_bounds = array<i64: 32, 128>}, {pipeline_mode = #tpu.pipeline_mode<synchronous>, transform_indices = @transform_1, window_bounds = array<i64: 4, 1, 32>}, {pipeline_mode = #tpu.pipeline_mode<synchronous>, transform_indices = @transform_2, window_bounds = array<i64: 4, 1, 32>}, {pipeline_mode = #tpu.pipeline_mode<synchronous>, transform_indices = @transform_3, window_bounds = array<i64: 1, 32>}, {pipeline_mode = #tpu.pipeline_mode<synchronous>, transform_indices = @transform_4, window_bounds = array<i64: 1, 32>}, {pipeline_mode = #tpu.pipeline_mode<synchronous>, transform_indices = @transform_5, window_bounds = array<i64: 32, 128>}, {transform_indices = @transform_6, window_bounds = array<i64: 32, 128>}]} {
    %c0 = arith.constant 0 : index
    %c0_0 = arith.constant 0 : index
    %c0_1 = arith.constant 0 : index
    %0 = vector.load %arg2[%c0, %c0_0, %c0_1] : memref<4x1x32xf32, #tpu.memory_space<vmem>>, vector<4x1x32xf32>
    %cst = arith.constant dense<0.000000e+00> : vector<1x32xf32>
    %1 = vector.multi_reduction <add>, %0, %cst [0] : vector<4x1x32xf32> to vector<1x32xf32>
    %cst_2 = arith.constant 0.001953125 : f32
    %2 = vector.broadcast %cst_2 : f32 to vector<1x32xf32>
    %3 = arith.mulf %1, %2 : vector<1x32xf32>
    %c0_3 = arith.constant 0 : index
    %c0_4 = arith.constant 0 : index
    %c0_5 = arith.constant 0 : index
    %4 = vector.load %arg3[%c0_3, %c0_4, %c0_5] : memref<4x1x32xf32, #tpu.memory_space<vmem>>, vector<4x1x32xf32>
    %cst_6 = arith.constant dense<0.000000e+00> : vector<1x32xf32>
    %5 = vector.multi_reduction <add>, %4, %cst_6 [0] : vector<4x1x32xf32> to vector<1x32xf32>
    %cst_7 = arith.constant 0.001953125 : f32
    %6 = vector.broadcast %cst_7 : f32 to vector<1x32xf32>
    %7 = arith.mulf %5, %6 : vector<1x32xf32>
    %8 = arith.mulf %3, %3 : vector<1x32xf32>
    %9 = arith.subf %7, %8 : vector<1x32xf32>
    %cst_8 = arith.constant 0.000000e+00 : f32
    %10 = vector.broadcast %cst_8 : f32 to vector<1x32xf32>
    %11 = arith.maximumf %9, %10 : vector<1x32xf32>
    %cst_9 = arith.constant 9.99999974E-6 : f32
    %12 = vector.broadcast %cst_9 : f32 to vector<1x32xf32>
    %13 = arith.addf %11, %12 : vector<1x32xf32>
    %14 = math.rsqrt %13 : vector<1x32xf32>
    %c0_10 = arith.constant 0 : index
    %c0_11 = arith.constant 0 : index
    %15 = vector.load %arg4[%c0_10, %c0_11] : memref<1x32xf32, #tpu.memory_space<vmem>>, vector<1x32xf32>
    %16 = arith.mulf %15, %14 : vector<1x32xf32>
    %c0_12 = arith.constant 0 : index
    %c0_13 = arith.constant 0 : index
    %17 = vector.load %arg5[%c0_12, %c0_13] : memref<1x32xf32, #tpu.memory_space<vmem>>, vector<1x32xf32>
    %18 = arith.mulf %3, %16 : vector<1x32xf32>
    %19 = arith.subf %17, %18 : vector<1x32xf32>
    %20 = vector.shape_cast %16 : vector<1x32xf32> to vector<1x32xf32>
    %21 = vector.broadcast %20 : vector<1x32xf32> to vector<8x32xf32>
    %22 = vector.shape_cast %19 : vector<1x32xf32> to vector<1x32xf32>
    %23 = vector.broadcast %22 : vector<1x32xf32> to vector<8x32xf32>
    %c0_14 = arith.constant 0 : index
    %c0_15 = arith.constant 0 : index
    %24 = vector.load %arg6[%c0_14, %c0_15] : memref<32x128xf32, #tpu.memory_space<vmem>>, vector<32x128xf32>
    %cst_16 = arith.constant dense<0.000000e+00> : vector<8x128xf32>
    %25 = tpu.matmul %21, %24, %cst_16 {dimension_numbers = #tpu.dot_dimension_numbers<[1], [0], [0], [1], [0, 0, 1, 1], [], []>} : vector<8x32xf32>, vector<32x128xf32>, vector<8x128xf32> -> vector<8x128xf32>
    %26 = vector.extract_strided_slice %25 {offsets = [0, 0], sizes = [1, 128], strides = [1, 1]} : vector<8x128xf32> to vector<1x128xf32>
    %c0_17 = arith.constant 0 : index
    %c0_18 = arith.constant 0 : index
    %27 = vector.load %arg6[%c0_17, %c0_18] : memref<32x128xf32, #tpu.memory_space<vmem>>, vector<32x128xf32>
    %cst_19 = arith.constant dense<0.000000e+00> : vector<8x128xf32>
    %28 = tpu.matmul %23, %27, %cst_19 {dimension_numbers = #tpu.dot_dimension_numbers<[1], [0], [0], [1], [0, 0, 1, 1], [], []>} : vector<8x32xf32>, vector<32x128xf32>, vector<8x128xf32> -> vector<8x128xf32>
    %29 = vector.extract_strided_slice %28 {offsets = [0, 0], sizes = [1, 128], strides = [1, 1]} : vector<8x128xf32> to vector<1x128xf32>
    %c0_20 = arith.constant 0 : index
    %c0_21 = arith.constant 0 : index
    %30 = vector.load %arg1[%c0_20, %c0_21] : memref<32x128xf32, #tpu.memory_space<vmem>>, vector<32x128xf32>
    %31 = vector.broadcast %26 : vector<1x128xf32> to vector<32x128xf32>
    %32 = arith.mulf %30, %31 : vector<32x128xf32>
    %33 = vector.broadcast %29 : vector<1x128xf32> to vector<32x128xf32>
    %34 = arith.addf %32, %33 : vector<32x128xf32>
    %cst_22 = arith.constant 0.000000e+00 : f32
    %35 = vector.broadcast %cst_22 : f32 to vector<32x128xf32>
    %36 = arith.maximumf %34, %35 : vector<32x128xf32>
    %c0_23 = arith.constant 0 : index
    %c0_24 = arith.constant 0 : index
    %37 = vector.load %arg7[%c0_23, %c0_24] : memref<32x128xf32, #tpu.memory_space<vmem>>, vector<32x128xf32>
    tpu.vector_store %arg7[%c0_23, %c0_24], %36 {strides = array<i32>} : memref<32x128xf32, #tpu.memory_space<vmem>>, vector<32x128xf32>,
    return
  }
  func.func @transform_0(%arg0: i32) -> (i32, i32) {
    %c0_i32 = arith.constant 0 : i32
    %c0_i32_0 = arith.constant 0 : i32
    return %arg0, %c0_i32 : i32, i32
  }
  func.func @transform_1(%arg0: i32) -> (i32, i32, i32) {
    %c0_i32 = arith.constant 0 : i32
    %c0_i32_0 = arith.constant 0 : i32
    %c0_i32_1 = arith.constant 0 : i32
    %c0_i32_2 = arith.constant 0 : i32
    return %c0_i32, %c0_i32_0, %c0_i32_1 : i32, i32, i32
  }
  func.func @transform_2(%arg0: i32) -> (i32, i32, i32) {
    %c0_i32 = arith.constant 0 : i32
    %c0_i32_0 = arith.constant 0 : i32
    %c0_i32_1 = arith.constant 0 : i32
    %c0_i32_2 = arith.constant 0 : i32
    return %c0_i32, %c0_i32_0, %c0_i32_1 : i32, i32, i32
  }
  func.func @transform_3(%arg0: i32) -> (i32, i32) {
    %c0_i32 = arith.constant 0 : i32
    %c0_i32_0 = arith.constant 0 : i32
    %c0_i32_1 = arith.constant 0 : i32
    return %c0_i32, %c0_i32_0 : i32, i32
  }
  func.func @transform_4(%arg0: i32) -> (i32, i32) {
    %c0_i32 = arith.constant 0 : i32
    %c0_i32_0 = arith.constant 0 : i32
    %c0_i32_1 = arith.constant 0 : i32
    return %c0_i32, %c0_i32_0 : i32, i32
  }
  func.func @transform_5(%arg0: i32) -> (i32, i32) {
    %c0_i32 = arith.constant 0 : i32
    %c0_i32_0 = arith.constant 0 : i32
    %c0_i32_1 = arith.constant 0 : i32
    return %c0_i32, %c0_i32_0 : i32, i32
  }
  func.func @transform_6(%arg0: i32) -> (i32, i32) {
    %c0_i32 = arith.constant 0 : i32
    %c0_i32_0 = arith.constant 0 : i32
    return %arg0, %c0_i32 : i32, i32
  }
}

module attributes {stable_mosaic.version = 11 : i64} {
  func.func @kernel(%arg0: i32, %arg1: memref<32x128xf32, #tpu.memory_space<vmem>>, %arg2: memref<4x1x32xf32, #tpu.memory_space<vmem>>, %arg3: memref<4x1x32xf32, #tpu.memory_space<vmem>>, %arg4: memref<1x32xf32, #tpu.memory_space<vmem>>, %arg5: memref<1x32xf32, #tpu.memory_space<vmem>>, %arg6: memref<32x128xf32, #tpu.memory_space<vmem>>, %arg7: memref<32x128xf32, #tpu.memory_space<vmem>>, %arg8: memref<32x128xf32, #tpu.memory_space<vmem>>) attributes {dimension_semantics = [#tpu.dimension_semantics<parallel>], iteration_bounds = array<i64: 4>, scalar_prefetch = 0 : i64, scratch_operands = 0 : i64, tpu.core_type = #tpu.core_type<tc>, window_params = [{transform_indices = @transform_0, window_bounds = array<i64: 32, 128>}, {pipeline_mode = #tpu.pipeline_mode<synchronous>, transform_indices = @transform_1, window_bounds = array<i64: 4, 1, 32>}, {pipeline_mode = #tpu.pipeline_mode<synchronous>, transform_indices = @transform_2, window_bounds = array<i64: 4, 1, 32>}, {pipeline_mode = #tpu.pipeline_mode<synchronous>, transform_indices = @transform_3, window_bounds = array<i64: 1, 32>}, {pipeline_mode = #tpu.pipeline_mode<synchronous>, transform_indices = @transform_4, window_bounds = array<i64: 1, 32>}, {pipeline_mode = #tpu.pipeline_mode<synchronous>, transform_indices = @transform_5, window_bounds = array<i64: 32, 128>}, {transform_indices = @transform_6, window_bounds = array<i64: 32, 128>}, {transform_indices = @transform_7, window_bounds = array<i64: 32, 128>}]} {
    %c0 = arith.constant 0 : index
    %c0_0 = arith.constant 0 : index
    %c0_1 = arith.constant 0 : index
    %0 = vector.load %arg2[%c0, %c0_0, %c0_1] : memref<4x1x32xf32, #tpu.memory_space<vmem>>, vector<4x1x32xf32>
    %cst = arith.constant dense<0.000000e+00> : vector<1x32xf32>
    %1 = vector.multi_reduction <add>, %0, %cst [0] : vector<4x1x32xf32> to vector<1x32xf32>
    %cst_2 = arith.constant 0.001953125 : f32
    %2 = vector.broadcast %cst_2 : f32 to vector<1x32xf32>
    %3 = arith.mulf %1, %2 : vector<1x32xf32>
    %c0_3 = arith.constant 0 : index
    %c0_4 = arith.constant 0 : index
    %c0_5 = arith.constant 0 : index
    %4 = vector.load %arg3[%c0_3, %c0_4, %c0_5] : memref<4x1x32xf32, #tpu.memory_space<vmem>>, vector<4x1x32xf32>
    %cst_6 = arith.constant dense<0.000000e+00> : vector<1x32xf32>
    %5 = vector.multi_reduction <add>, %4, %cst_6 [0] : vector<4x1x32xf32> to vector<1x32xf32>
    %cst_7 = arith.constant 0.001953125 : f32
    %6 = vector.broadcast %cst_7 : f32 to vector<1x32xf32>
    %7 = arith.mulf %5, %6 : vector<1x32xf32>
    %8 = arith.mulf %3, %3 : vector<1x32xf32>
    %9 = arith.subf %7, %8 : vector<1x32xf32>
    %cst_8 = arith.constant 0.000000e+00 : f32
    %10 = vector.broadcast %cst_8 : f32 to vector<1x32xf32>
    %11 = arith.maximumf %9, %10 : vector<1x32xf32>
    %cst_9 = arith.constant 9.99999974E-6 : f32
    %12 = vector.broadcast %cst_9 : f32 to vector<1x32xf32>
    %13 = arith.addf %11, %12 : vector<1x32xf32>
    %14 = math.rsqrt %13 : vector<1x32xf32>
    %c0_10 = arith.constant 0 : index
    %c0_11 = arith.constant 0 : index
    %15 = vector.load %arg4[%c0_10, %c0_11] : memref<1x32xf32, #tpu.memory_space<vmem>>, vector<1x32xf32>
    %16 = arith.mulf %15, %14 : vector<1x32xf32>
    %c0_12 = arith.constant 0 : index
    %c0_13 = arith.constant 0 : index
    %17 = vector.load %arg5[%c0_12, %c0_13] : memref<1x32xf32, #tpu.memory_space<vmem>>, vector<1x32xf32>
    %18 = arith.mulf %3, %16 : vector<1x32xf32>
    %19 = arith.subf %17, %18 : vector<1x32xf32>
    %20 = vector.shape_cast %16 : vector<1x32xf32> to vector<1x32xf32>
    %21 = vector.broadcast %20 : vector<1x32xf32> to vector<8x32xf32>
    %22 = vector.shape_cast %19 : vector<1x32xf32> to vector<1x32xf32>
    %23 = vector.broadcast %22 : vector<1x32xf32> to vector<8x32xf32>
    %c0_14 = arith.constant 0 : index
    %c0_15 = arith.constant 0 : index
    %24 = vector.load %arg6[%c0_14, %c0_15] : memref<32x128xf32, #tpu.memory_space<vmem>>, vector<32x128xf32>
    %cst_16 = arith.constant dense<0.000000e+00> : vector<8x128xf32>
    %25 = tpu.matmul %21, %24, %cst_16 {dimension_numbers = #tpu.dot_dimension_numbers<[1], [0], [0], [1], [0, 0, 1, 1], [], []>} : vector<8x32xf32>, vector<32x128xf32>, vector<8x128xf32> -> vector<8x128xf32>
    %26 = vector.extract_strided_slice %25 {offsets = [0, 0], sizes = [1, 128], strides = [1, 1]} : vector<8x128xf32> to vector<1x128xf32>
    %c0_17 = arith.constant 0 : index
    %c0_18 = arith.constant 0 : index
    %27 = vector.load %arg6[%c0_17, %c0_18] : memref<32x128xf32, #tpu.memory_space<vmem>>, vector<32x128xf32>
    %cst_19 = arith.constant dense<0.000000e+00> : vector<8x128xf32>
    %28 = tpu.matmul %23, %27, %cst_19 {dimension_numbers = #tpu.dot_dimension_numbers<[1], [0], [0], [1], [0, 0, 1, 1], [], []>} : vector<8x32xf32>, vector<32x128xf32>, vector<8x128xf32> -> vector<8x128xf32>
    %29 = vector.extract_strided_slice %28 {offsets = [0, 0], sizes = [1, 128], strides = [1, 1]} : vector<8x128xf32> to vector<1x128xf32>
    %c0_20 = arith.constant 0 : index
    %c0_21 = arith.constant 0 : index
    %30 = vector.load %arg1[%c0_20, %c0_21] : memref<32x128xf32, #tpu.memory_space<vmem>>, vector<32x128xf32>
    %31 = vector.broadcast %26 : vector<1x128xf32> to vector<32x128xf32>
    %32 = arith.mulf %30, %31 : vector<32x128xf32>
    %33 = vector.broadcast %29 : vector<1x128xf32> to vector<32x128xf32>
    %34 = arith.addf %32, %33 : vector<32x128xf32>
    %c0_22 = arith.constant 0 : index
    %c0_23 = arith.constant 0 : index
    %35 = vector.load %arg7[%c0_22, %c0_23] : memref<32x128xf32, #tpu.memory_space<vmem>>, vector<32x128xf32>
    %36 = arith.addf %34, %35 : vector<32x128xf32>
    %c0_24 = arith.constant 0 : index
    %c0_25 = arith.constant 0 : index
    %37 = vector.load %arg8[%c0_24, %c0_25] : memref<32x128xf32, #tpu.memory_space<vmem>>, vector<32x128xf32>
    tpu.vector_store %arg8[%c0_24, %c0_25], %36 {strides = array<i32>} : memref<32x128xf32, #tpu.memory_space<vmem>>, vector<32x128xf32>,
    return
  }
  func.func @transform_0(%arg0: i32) -> (i32, i32) {
    %c0_i32 = arith.constant 0 : i32
    %c0_i32_0 = arith.constant 0 : i32
    return %arg0, %c0_i32 : i32, i32
  }
  func.func @transform_1(%arg0: i32) -> (i32, i32, i32) {
    %c0_i32 = arith.constant 0 : i32
    %c0_i32_0 = arith.constant 0 : i32
    %c0_i32_1 = arith.constant 0 : i32
    %c0_i32_2 = arith.constant 0 : i32
    return %c0_i32, %c0_i32_0, %c0_i32_1 : i32, i32, i32
  }
  func.func @transform_2(%arg0: i32) -> (i32, i32, i32) {
    %c0_i32 = arith.constant 0 : i32
    %c0_i32_0 = arith.constant 0 : i32
    %c0_i32_1 = arith.constant 0 : i32
    %c0_i32_2 = arith.constant 0 : i32
    return %c0_i32, %c0_i32_0, %c0_i32_1 : i32, i32, i32
  }
  func.func @transform_3(%arg0: i32) -> (i32, i32) {
    %c0_i32 = arith.constant 0 : i32
    %c0_i32_0 = arith.constant 0 : i32
    %c0_i32_1 = arith.constant 0 : i32
    return %c0_i32, %c0_i32_0 : i32, i32
  }
  func.func @transform_4(%arg0: i32) -> (i32, i32) {
    %c0_i32 = arith.constant 0 : i32
    %c0_i32_0 = arith.constant 0 : i32
    %c0_i32_1 = arith.constant 0 : i32
    return %c0_i32, %c0_i32_0 : i32, i32
  }
  func.func @transform_5(%arg0: i32) -> (i32, i32) {
    %c0_i32 = arith.constant 0 : i32
    %c0_i32_0 = arith.constant 0 : i32
    %c0_i32_1 = arith.constant 0 : i32
    return %c0_i32, %c0_i32_0 : i32, i32
  }
  func.func @transform_6(%arg0: i32) -> (i32, i32) {
    %c0_i32 = arith.constant 0 : i32
    %c0_i32_0 = arith.constant 0 : i32
    return %arg0, %c0_i32 : i32, i32
  }
  func.func @transform_7(%arg0: i32) -> (i32, i32) {
    %c0_i32 = arith.constant 0 : i32
    %c0_i32_0 = arith.constant 0 : i32
    return %arg0, %c0_i32 : i32, i32
  }
}

module attributes {stable_mosaic.version = 11 : i64} {
  func.func @kernel(%arg0: i32, %arg1: memref<8x18x96xbf16, #tpu.memory_space<vmem>>, %arg2: memref<3x96x3xbf16, #tpu.memory_space<vmem>>, %arg3: memref<1x3xf32, #tpu.memory_space<vmem>>, %arg4: memref<128x3xf32, #tpu.memory_space<vmem>>) attributes {dimension_semantics = [#tpu.dimension_semantics<parallel>], iteration_bounds = array<i64: 4>, scalar_prefetch = 0 : i64, scratch_operands = 0 : i64, tpu.core_type = #tpu.core_type<tc>, window_params = [{transform_indices = @transform_0, window_bounds = array<i64: 8, 18, 96>}, {pipeline_mode = #tpu.pipeline_mode<synchronous>, transform_indices = @transform_1, window_bounds = array<i64: 3, 96, 3>}, {pipeline_mode = #tpu.pipeline_mode<synchronous>, transform_indices = @transform_2, window_bounds = array<i64: 1, 3>}, {transform_indices = @transform_3, window_bounds = array<i64: 128, 3>}]} {
    %c0 = arith.constant 0 : index
    %c0_0 = arith.constant 0 : index
    %c0_1 = arith.constant 0 : index
    %0 = vector.load %arg1[%c0, %c0_0, %c0_1] : memref<8x18x96xbf16, #tpu.memory_space<vmem>>, vector<8x16x96xbf16>
    %1 = vector.shape_cast %0 : vector<8x16x96xbf16> to vector<128x96xbf16>
    %c0_2 = arith.constant 0 : index
    %c0_3 = arith.constant 0 : index
    %c0_4 = arith.constant 0 : index
    %2 = vector.load %arg2[%c0_2, %c0_3, %c0_4] : memref<3x96x3xbf16, #tpu.memory_space<vmem>>, vector<1x96x3xbf16>
    %3 = vector.shape_cast %2 : vector<1x96x3xbf16> to vector<96x3xbf16>
    %cst = arith.constant dense<0.000000e+00> : vector<128x3xf32>
    %4 = tpu.matmul %1, %3, %cst {dimension_numbers = #tpu.dot_dimension_numbers<[1], [0], [0], [1], [0, 0, 1, 1], [], []>} : vector<128x96xbf16>, vector<96x3xbf16>, vector<128x3xf32> -> vector<128x3xf32>
    %c0_5 = arith.constant 0 : index
    %c1 = arith.constant 1 : index
    %c0_6 = arith.constant 0 : index
    %5 = vector.load %arg1[%c0_5, %c1, %c0_6] : memref<8x18x96xbf16, #tpu.memory_space<vmem>>, vector<8x16x96xbf16>
    %6 = vector.shape_cast %5 : vector<8x16x96xbf16> to vector<128x96xbf16>
    %c1_7 = arith.constant 1 : index
    %c0_8 = arith.constant 0 : index
    %c0_9 = arith.constant 0 : index
    %7 = vector.load %arg2[%c1_7, %c0_8, %c0_9] : memref<3x96x3xbf16, #tpu.memory_space<vmem>>, vector<1x96x3xbf16>
    %8 = vector.shape_cast %7 : vector<1x96x3xbf16> to vector<96x3xbf16>
    %cst_10 = arith.constant dense<0.000000e+00> : vector<128x3xf32>
    %9 = tpu.matmul %6, %8, %cst_10 {dimension_numbers = #tpu.dot_dimension_numbers<[1], [0], [0], [1], [0, 0, 1, 1], [], []>} : vector<128x96xbf16>, vector<96x3xbf16>, vector<128x3xf32> -> vector<128x3xf32>
    %10 = arith.addf %4, %9 : vector<128x3xf32>
    %c0_11 = arith.constant 0 : index
    %c2 = arith.constant 2 : index
    %c0_12 = arith.constant 0 : index
    %11 = vector.load %arg1[%c0_11, %c2, %c0_12] : memref<8x18x96xbf16, #tpu.memory_space<vmem>>, vector<8x16x96xbf16>
    %12 = vector.shape_cast %11 : vector<8x16x96xbf16> to vector<128x96xbf16>
    %c2_13 = arith.constant 2 : index
    %c0_14 = arith.constant 0 : index
    %c0_15 = arith.constant 0 : index
    %13 = vector.load %arg2[%c2_13, %c0_14, %c0_15] : memref<3x96x3xbf16, #tpu.memory_space<vmem>>, vector<1x96x3xbf16>
    %14 = vector.shape_cast %13 : vector<1x96x3xbf16> to vector<96x3xbf16>
    %cst_16 = arith.constant dense<0.000000e+00> : vector<128x3xf32>
    %15 = tpu.matmul %12, %14, %cst_16 {dimension_numbers = #tpu.dot_dimension_numbers<[1], [0], [0], [1], [0, 0, 1, 1], [], []>} : vector<128x96xbf16>, vector<96x3xbf16>, vector<128x3xf32> -> vector<128x3xf32>
    %16 = arith.addf %10, %15 : vector<128x3xf32>
    %c0_17 = arith.constant 0 : index
    %c0_18 = arith.constant 0 : index
    %17 = vector.load %arg3[%c0_17, %c0_18] : memref<1x3xf32, #tpu.memory_space<vmem>>, vector<1x3xf32>
    %18 = vector.broadcast %17 : vector<1x3xf32> to vector<128x3xf32>
    %19 = arith.addf %16, %18 : vector<128x3xf32>
    %c0_19 = arith.constant 0 : index
    %c0_20 = arith.constant 0 : index
    %20 = vector.load %arg4[%c0_19, %c0_20] : memref<128x3xf32, #tpu.memory_space<vmem>>, vector<128x3xf32>
    tpu.vector_store %arg4[%c0_19, %c0_20], %19 {strides = array<i32>} : memref<128x3xf32, #tpu.memory_space<vmem>>, vector<128x3xf32>,
    return
  }
  func.func @transform_0(%arg0: i32) -> (i32, i32, i32) {
    %c0_i32 = arith.constant 0 : i32
    %c0_i32_0 = arith.constant 0 : i32
    %c0_i32_1 = arith.constant 0 : i32
    return %arg0, %c0_i32, %c0_i32_0 : i32, i32, i32
  }
  func.func @transform_1(%arg0: i32) -> (i32, i32, i32) {
    %c0_i32 = arith.constant 0 : i32
    %c0_i32_0 = arith.constant 0 : i32
    %c0_i32_1 = arith.constant 0 : i32
    %c0_i32_2 = arith.constant 0 : i32
    return %c0_i32, %c0_i32_0, %c0_i32_1 : i32, i32, i32
  }
  func.func @transform_2(%arg0: i32) -> (i32, i32) {
    %c0_i32 = arith.constant 0 : i32
    %c0_i32_0 = arith.constant 0 : i32
    %c0_i32_1 = arith.constant 0 : i32
    return %c0_i32, %c0_i32_0 : i32, i32
  }
  func.func @transform_3(%arg0: i32) -> (i32, i32) {
    %c0_i32 = arith.constant 0 : i32
    %c0_i32_0 = arith.constant 0 : i32
    return %arg0, %c0_i32 : i32, i32
  }
}

</mosaic_0001>

<llo_original>
// kernel: _lambda_.20
$region0: #{_lambda_.20}
  #allocation0 [shape = 'u32[]', space=smem, size = 0x4, offset = 0x4, fixed_abs, tag = 'smem constant byte address 0x4 - core index']
  #allocation1 [shape = 'u32[72,128]{1,0:T(1,128)}', space=vmem, size = 0x9000, scoped, tag = 'internal scratch']
  %s0 = inlined_call_operand.vmem [shape: bf16[32,18,9], index: 0, kind: input, shape index: {}]
  %s1 = inlined_call_operand.vmem [shape: bf16[3,9,32], index: 1, kind: input, shape index: {}]
  %s2 = inlined_call_operand.vmem [shape: f32[1,32], index: 2, kind: input, shape index: {}]
  %s3 = inlined_call_operand.vmem [shape: f32[512,32], index: 3, kind: output, shape index: {}]
  %s4 = sld [smem:[#allocation0]]
  $region45: #{_lambda_.20} parent=0
    _
  %s6 = ssub.s32 1, %s4
  %s7 = scalar_select 0, %s6, %s4
  loop: start=0, step=1, limit=6
  $region2: #{_lambda_.20} parent=0 // loop_pre_header
    _
  $region3: #{_lambda_.20} parent=0 // loop_header
    %s9 = sphi 0, %s13
    %p10 = scmp.ge.s32.totalorder %s9, 6
    %s19 = sphi 0, %s21
    %s22 = sphi 0, %s19
    %s23 = sphi 0, %s22
    %s39 = sphi 0, %s23
    %s43 = sphi 0, %s43
    %s45 = sphi 0, %s43
    %s46 = sphi 0, %s45
    %s60 = sphi 0, %s46
    %s64 = sphi 0, %s64
    %s66 = sphi 0, %s64
    %s67 = sphi 0, %s66
    %s81 = sphi 0, %s67
    %s87 = sphi 0, %s89
    %s90 = sphi 0, %s87
    %s91 = sphi 0, %s90
    %s107 = sphi 0, %s91
  $region4: #{_lambda_.20} parent=0 // loop_header_branch
    %12 = sbr.rel (%p10) target = $region8
  $region5: #{_lambda_.20} parent=0 // loop_body
    %s14 = ssub.s32 %s9, 1
    %s15 = ssub.s32 %s9, 2
    %s16 = sadd.s32 %s9, 1
    %s17 = ssub.s32 %s9, %s16
    %p18 = scmp.eq.s32.totalorder %s17, 0
    %s20 = sadd.s32 %s19, 1
    %s21 = scalar_select %p18, %s19, %s20
    %p24 = pneg %p18
    %p25 = scmp.eq.s32.totalorder %s9, 3
    %p26 = por %p24, %p25
    %p27 = scmp.ne.s32.totalorder %s19, %s22
    %p28 = scmp.eq.s32.totalorder %s9, 0
    %p29 = por %p27, %p28
    %p30 = scmp.ne.s32.totalorder %s19, %s22
    %p31 = scmp.eq.s32.totalorder %s14, 3
    %p32 = por %p30, %p31
    %p33 = scmp.ne.s32.totalorder %s22, %s23
    %p34 = scmp.eq.s32.totalorder %s14, 0
    %p35 = por %p33, %p34
    %p36 = scmp.ne.s32.totalorder %s22, %s23
    %p37 = scmp.eq.s32.totalorder %s15, 3
    %p38 = por %p36, %p37
    %p40 = scmp.ne.s32.totalorder %s23, %s39
    %p41 = scmp.eq.s32.totalorder %s15, 0
    %p42 = por %p40, %p41
    %s44 = sadd.s32 %s43, 1
    %p47 = scmp.eq.s32.totalorder %s9, 3
    %p48 = scmp.ne.s32.totalorder %s43, %s45
    %p49 = scmp.eq.s32.totalorder %s9, 0
    %p50 = por %p48, %p49
    %p51 = scmp.ne.s32.totalorder %s43, %s45
    %p52 = scmp.eq.s32.totalorder %s14, 3
    %p53 = por %p51, %p52
    %p54 = scmp.ne.s32.totalorder %s45, %s46
    %p55 = scmp.eq.s32.totalorder %s14, 0
    %p56 = por %p54, %p55
    %p57 = scmp.ne.s32.totalorder %s45, %s46
    %p58 = scmp.eq.s32.totalorder %s15, 3
    %p59 = por %p57, %p58
    %p61 = scmp.ne.s32.totalorder %s46, %s60
    %p62 = scmp.eq.s32.totalorder %s15, 0
    %p63 = por %p61, %p62
    %s65 = sadd.s32 %s64, 1
    %p68 = scmp.eq.s32.totalorder %s9, 3
    %p69 = scmp.ne.s32.totalorder %s64, %s66
    %p70 = scmp.eq.s32.totalorder %s9, 0
    %p71 = por %p69, %p70
    %p72 = scmp.ne.s32.totalorder %s64, %s66
    %p73 = scmp.eq.s32.totalorder %s14, 3
    %p74 = por %p72, %p73
    %p75 = scmp.ne.s32.totalorder %s66, %s67
    %p76 = scmp.eq.s32.totalorder %s14, 0
    %p77 = por %p75, %p76
    %p78 = scmp.ne.s32.totalorder %s66, %s67
    %p79 = scmp.eq.s32.totalorder %s15, 3
    %p80 = por %p78, %p79
    %p82 = scmp.ne.s32.totalorder %s67, %s81
    %p83 = scmp.eq.s32.totalorder %s15, 0
    %p84 = por %p82, %p83
    %s85 = ssub.s32 %s9, %s16
    %p86 = scmp.eq.s32.totalorder %s85, 0
    %s88 = sadd.s32 %s87, 1
    %s89 = scalar_select %p86, %s87, %s88
    %p92 = pneg %p86
    %p93 = scmp.eq.s32.totalorder %s9, 3
    %p94 = por %p92, %p93
    %p95 = scmp.ne.s32.totalorder %s87, %s90
    %p96 = scmp.eq.s32.totalorder %s9, 0
    %p97 = por %p95, %p96
    %p98 = scmp.ne.s32.totalorder %s87, %s90
    %p99 = scmp.eq.s32.totalorder %s14, 3
    %p100 = por %p98, %p99
    %p101 = scmp.ne.s32.totalorder %s90, %s91
    %p102 = scmp.eq.s32.totalorder %s14, 0
    %p103 = por %p101, %p102
    %p104 = scmp.ne.s32.totalorder %s90, %s91
    %p105 = scmp.eq.s32.totalorder %s15, 3
    %p106 = por %p104, %p105
    %p108 = scmp.ne.s32.totalorder %s91, %s107
    %p109 = scmp.eq.s32.totalorder %s15, 0
    %p110 = por %p108, %p109
    %p111 = scmp.le.s32.totalorder 1, %s9
    %p112 = scmp.lt.s32.totalorder %s9, 5
    %p113 = pnand %p111, %p112
    %p114 = pneg %p113
    // Predicated region
    $region9: #{_lambda_.20} parent=5 // pred_check
      _
    $region10: #{_lambda_.20} parent=5 // pred_check_branch
      %116 = sbr.rel (%p113) target = $region12
    $region11: #{_lambda_.20} parent=5 // pred_region
      %s117 = ssub.s32 %s9, 1
      // Predicated region
      $region13: #{_lambda_.20} parent=11 // pred_check
        %p118 = pneg %p56
      $region14: #{_lambda_.20} parent=11 // pred_check_branch
        %120 = sbr.rel (%p118) target = $region16
      $region15: #{_lambda_.20} parent=11 // pred_region
        _
      $region16: #{_lambda_.20} parent=11 // pred_fallthru
        _
      // Predicated region
      $region17: #{_lambda_.20} parent=11 // pred_check
        %p121 = pneg %p77
      $region18: #{_lambda_.20} parent=11 // pred_check_branch
        %123 = sbr.rel (%p121) target = $region20
      $region19: #{_lambda_.20} parent=11 // pred_region
        _
      $region20: #{_lambda_.20} parent=11 // pred_fallthru
        _
    $region12: #{_lambda_.20} parent=5 // pred_fallthru
      _
    %p124 = scmp.lt.s32.totalorder %s9, 4
    // Predicated region
    $region21: #{_lambda_.20} parent=5 // pred_check
      %p125 = pneg %p124
    $region22: #{_lambda_.20} parent=5 // pred_check_branch
      %127 = sbr.rel (%p125) target = $region24
    $region23: #{_lambda_.20} parent=5 // pred_region
      // Predicated region
      $region25: #{_lambda_.20} parent=23 // pred_check
        %p128 = pneg %p29
      $region26: #{_lambda_.20} parent=23 // pred_check_branch
        %130 = sbr.rel (%p128) target = $region28
      $region27: #{_lambda_.20} parent=23 // pred_region
        %s131 = smul.u32 8, %s9
        %p132 = scmp.lt.s32.totalorder %s131, 31
        %s133 = scalar_select %p132, %s131, 31
        %s134 = smul.addr %s133, 3
        %s135 = smul.addr %s134, 4
        %s136 = scalar_lea.vmem %s0, %s135
        %s137 = smul.u32 8, %s9
      $region28: #{_lambda_.20} parent=23 // pred_fallthru
        _
    $region24: #{_lambda_.20} parent=5 // pred_fallthru
      _
    %p138 = scmp.le.s32.totalorder 1, %s9
    %p139 = scmp.lt.s32.totalorder %s9, 5
    %p140 = pnand %p138, %p139
    %p141 = pneg %p140
    // Predicated region
    $region29: #{_lambda_.20} parent=5 // pred_check
      _
    $region30: #{_lambda_.20} parent=5 // pred_check_branch
      %143 = sbr.rel (%p140) target = $region32
    $region31: #{_lambda_.20} parent=5 // pred_region
      %s144 = ssub.s32 %s9, 1
      %s145 = smul.u32 8, %s14
      %p146 = scmp.lt.s32.totalorder %s145, 31
      %s147 = scalar_select %p146, %s145, 31
      %s148 = smul.addr %s147, 3
      %s149 = smul.addr %s148, 4
      %s150 = scalar_lea.vmem %s0, %s149
      %p151 = pneg %p35
      %p152 = pneg %p32
      %p153 = pneg %p56
      %p154 = pneg %p53
      %p155 = pneg %p77
      %p156 = pneg %p74
      %p157 = pneg %p103
      %p158 = pneg %p100
      %s159 = smul.u32 16, %s14
      %p160 = scmp.lt.s32.totalorder %s159, 63
      %s161 = scalar_select %p160, %s159, 63
      %s162 = smul.addr %s161, 8
      %s163 = scalar_lea.vmem %s3, %s162
      %s164 = smul.u32 8, %s14
      %p165 = scmp.lt.s32.totalorder %s164, 31
      %s166 = scalar_select %p165, %s164, 31
      %s167 = smul.addr %s166, 3
      %s168 = smul.addr %s167, 4
      %s169 = scalar_lea.vmem %s0, %s168
      %s170 = smul.u32 8, %s14
      %s171 = smul.u32 16, %s14
      %p172 = scmp.lt.s32.totalorder %s171, 63
      %s173 = scalar_select %p172, %s171, 63
      %s174 = smul.addr %s173, 8
      %s175 = scalar_lea.vmem %s3, %s174
      %s176 = smul.u32 16, %s14
      %v178 = vld [vmem:[%s169] sm:$0xf]
      %v179 = vld [vmem:[%s169 + $0x4] sm:$0xf]
      %v180 = vld [vmem:[%s169 + $0xc] sm:$0xf]
      %v181 = vld [vmem:[%s169 + $0x10] sm:$0xf]
      %v182 = vld [vmem:[%s169 + $0x18] sm:$0xf]
      %v183 = vld [vmem:[%s169 + $0x1c] sm:$0xf]
      %v184 = vld [vmem:[%s169 + $0x24] sm:$0xf]
      %v185 = vld [vmem:[%s169 + $0x28] sm:$0xf]
      %v186 = vld [vmem:[%s169 + $0x30] sm:$0xf]
      %v187 = vld [vmem:[%s169 + $0x34] sm:$0xf]
      %v188 = vld [vmem:[%s169 + $0x3c] sm:$0xf]
      %v189 = vld [vmem:[%s169 + $0x40] sm:$0xf]
      %v190 = vld [vmem:[%s169 + $0x48] sm:$0xf]
      %v191 = vld [vmem:[%s169 + $0x4c] sm:$0xf]
      %v192 = vld [vmem:[%s169 + $0x54] sm:$0xf]
      %v193 = vld [vmem:[%s169 + $0x58] sm:$0xf]
      %v194 = vld [vmem:[%s1] sm:$0xf]
      %v195 = vld [vmem:[%s1 + $0x4] sm:$0x1]
      %v196 = vld [vmem:[%s169 + $0x8] sm:$0x1]
      %v197 = vld [vmem:[%s169 + $0x14] sm:$0x1]
      %v198 = vld [vmem:[%s169 + $0x20] sm:$0x1]
      %v199 = vld [vmem:[%s169 + $0x2c] sm:$0x1]
      %v200 = vld [vmem:[%s169 + $0x38] sm:$0x1]
      %v201 = vld [vmem:[%s169 + $0x44] sm:$0x1]
      %v202 = vld [vmem:[%s169 + $0x50] sm:$0x1]
      %v203 = vld [vmem:[%s169 + $0x5c] sm:$0x1]
      %vm204 = vsmask.f32 3328
      %vm205 = vsmask.f32 7440
      %vm206 = vmor %vm204, %vm205
      %v208 = vshrl.u32 %v178, 16
      %v210 = vrot.slane %v208, 4
      %v211 = vshll.u32 %v178, 16
      %v213 = vrot.slane %v211, 5
      %v214 = vor.u32 %v210, %v213
      %v215 = vrot.slane %v214, 4
      %v217 = vshll.u32 %v179, 16
      %v219 = vrot.slane %v217, 5
      %v220 = vsel %vm206, %v215, %v219
      %v221 = vshrl.u32 %v179, 16
      %v223 = vrot.slane %v221, 4
      %v224 = vor.u32 %v223, %v219
      %v225 = vrot.slane %v224, 4
      %v227 = vshll.u32 %v196, 16
      %v229 = vrot.slane %v227, 5
      %v230 = vsel %vm206, %v225, %v229
      %v232 = vshrl.u32 %v180, 16
      %v234 = vrot.slane %v232, 4
      %v235 = vshll.u32 %v180, 16
      %v237 = vrot.slane %v235, 5
      %v238 = vor.u32 %v234, %v237
      %v239 = vrot.slane %v238, 4
      %v241 = vshll.u32 %v181, 16
      %v243 = vrot.slane %v241, 5
      %v244 = vsel %vm206, %v239, %v243
      %v245 = vshrl.u32 %v181, 16
      %v247 = vrot.slane %v245, 4
      %v248 = vor.u32 %v247, %v243
      %v249 = vrot.slane %v248, 4
      %v251 = vshll.u32 %v197, 16
      %v253 = vrot.slane %v251, 5
      %v254 = vsel %vm206, %v249, %v253
      %v256 = vshrl.u32 %v182, 16
      %v258 = vrot.slane %v256, 4
      %v259 = vshll.u32 %v182, 16
      %v261 = vrot.slane %v259, 5
      %v262 = vor.u32 %v258, %v261
      %v263 = vrot.slane %v262, 4
      %v265 = vshll.u32 %v183, 16
      %v267 = vrot.slane %v265, 5
      %v268 = vsel %vm206, %v263, %v267
      %v269 = vshrl.u32 %v183, 16
      %v271 = vrot.slane %v269, 4
      %v272 = vor.u32 %v271, %v267
      %v273 = vrot.slane %v272, 4
      %v275 = vshll.u32 %v198, 16
      %v277 = vrot.slane %v275, 5
      %v278 = vsel %vm206, %v273, %v277
      %v280 = vshrl.u32 %v184, 16
      %v282 = vrot.slane %v280, 4
      %v283 = vshll.u32 %v184, 16
      %v285 = vrot.slane %v283, 5
      %v286 = vor.u32 %v282, %v285
      %v287 = vrot.slane %v286, 4
      %v289 = vshll.u32 %v185, 16
      %v291 = vrot.slane %v289, 5
      %v292 = vsel %vm206, %v287, %v291
      %v293 = vshrl.u32 %v185, 16
      %v295 = vrot.slane %v293, 4
      %v296 = vor.u32 %v295, %v291
      %v297 = vrot.slane %v296, 4
      %v299 = vshll.u32 %v199, 16
      %v301 = vrot.slane %v299, 5
      %v302 = vsel %vm206, %v297, %v301
      %v304 = vshrl.u32 %v186, 16
      %v306 = vrot.slane %v304, 4
      %v307 = vshll.u32 %v186, 16
      %v309 = vrot.slane %v307, 5
      %v310 = vor.u32 %v306, %v309
      %v311 = vrot.slane %v310, 4
      %v313 = vshll.u32 %v187, 16
      %v315 = vrot.slane %v313, 5
      %v316 = vsel %vm206, %v311, %v315
      %v317 = vshrl.u32 %v187, 16
      %v319 = vrot.slane %v317, 4
      %v320 = vor.u32 %v319, %v315
      %v321 = vrot.slane %v320, 4
      %v323 = vshll.u32 %v200, 16
      %v325 = vrot.slane %v323, 5
      %v326 = vsel %vm206, %v321, %v325
      %v328 = vshrl.u32 %v188, 16
      %v330 = vrot.slane %v328, 4
      %v331 = vshll.u32 %v188, 16
      %v333 = vrot.slane %v331, 5
      %v334 = vor.u32 %v330, %v333
      %v335 = vrot.slane %v334, 4
      %v337 = vshll.u32 %v189, 16
      %v339 = vrot.slane %v337, 5
      %v340 = vsel %vm206, %v335, %v339
      %v341 = vshrl.u32 %v189, 16
      %v343 = vrot.slane %v341, 4
      %v344 = vor.u32 %v343, %v339
      %v345 = vrot.slane %v344, 4
      %v347 = vshll.u32 %v201, 16
      %v349 = vrot.slane %v347, 5
      %v350 = vsel %vm206, %v345, %v349
      %v352 = vshrl.u32 %v190, 16
      %v354 = vrot.slane %v352, 4
      %v355 = vshll.u32 %v190, 16
      %v357 = vrot.slane %v355, 5
      %v358 = vor.u32 %v354, %v357
      %v359 = vrot.slane %v358, 4
      %v361 = vshll.u32 %v191, 16
      %v363 = vrot.slane %v361, 5
      %v364 = vsel %vm206, %v359, %v363
      %v365 = vshrl.u32 %v191, 16
      %v367 = vrot.slane %v365, 4
      %v368 = vor.u32 %v367, %v363
      %v369 = vrot.slane %v368, 4
      %v371 = vshll.u32 %v202, 16
      %v373 = vrot.slane %v371, 5
      %v374 = vsel %vm206, %v369, %v373
      %v376 = vshrl.u32 %v192, 16
      %v378 = vrot.slane %v376, 4
      %v379 = vshll.u32 %v192, 16
      %v381 = vrot.slane %v379, 5
      %v382 = vor.u32 %v378, %v381
      %v383 = vrot.slane %v382, 4
      %v385 = vshll.u32 %v193, 16
      %v387 = vrot.slane %v385, 5
      %v388 = vsel %vm206, %v383, %v387
      %v389 = vshrl.u32 %v193, 16
      %v391 = vrot.slane %v389, 4
      %v392 = vor.u32 %v391, %v387
      %v393 = vrot.slane %v392, 4
      %v395 = vshll.u32 %v203, 16
      %v397 = vrot.slane %v395, 5
      %v398 = vsel %vm206, %v393, %v397
      %s399 = scalar_lea.vmem %s1, 8
      %v400 = vld [vmem:[%s399] sm:$0xf]
      %v401 = vld [vmem:[%s399 + $0x4] sm:$0x1]
      %v402 = vunpack.c.l.b16 %v220
      %v403 = vunpack.c.l.b16 %v230
      %v404 = vunpack.c.l.b16 %v244
      %v405 = vunpack.c.l.b16 %v254
      %v406 = vunpack.c.l.b16 %v268
      %v407 = vunpack.c.l.b16 %v278
      %v408 = vunpack.c.l.b16 %v292
      %v409 = vunpack.c.l.b16 %v302
      %v410 = vunpack.c.l.b16 %v316
      %v411 = vunpack.c.l.b16 %v326
      %v412 = vunpack.c.l.b16 %v340
      %v413 = vunpack.c.l.b16 %v350
      %v414 = vunpack.c.l.b16 %v364
      %v415 = vunpack.c.l.b16 %v374
      %v416 = vunpack.c.l.b16 %v388
      %v417 = vunpack.c.l.b16 %v398
      %v418 = vpack.c.b16 %v403, %v402
      %v419 = vpack.c.b16 %v405, %v404
      %v420 = vpack.c.b16 %v407, %v406
      %v421 = vpack.c.b16 %v409, %v408
      %v422 = vpack.c.b16 %v411, %v410
      %v423 = vpack.c.b16 %v413, %v412
      %v424 = vpack.c.b16 %v415, %v414
      %v425 = vpack.c.b16 %v417, %v416
      %v428 = vunpack.c.l.b16 %v400
      %v429 = vunpack.c.l.b16 %v401
      %v430 = vpack.c.b16 %v429, %v428
      %vm431 = vcmask 72704
      %v433 = vsel %vm431, %v418, 0
      %v436 = vsel %vm431, %v419, 0
      %v439 = vsel %vm431, %v420, 0
      %v442 = vsel %vm431, %v421, 0
      %v445 = vsel %vm431, %v422, 0
      %v448 = vsel %vm431, %v423, 0
      %v451 = vsel %vm431, %v424, 0
      %v454 = vsel %vm431, %v425, 0
      %vm456 = vcmask 1043456
      %vm457 = vcmask 1044480
      %v458 = vsel %vm456, 4294967295, 65535
      %v459 = vsel %vm457, %v458, 0
      %v461 = vand.u32 %v430, %v459
      %463 = vmatpush.bf16.msra.mxu0 0
      %464 = vmatpush.bf16.msra.mxu0 0
      %465 = vmatpush.bf16.msra.mxu0 0
      %466 = vmatpush.bf16.msra.mxu0 0
      %467 = vmatpush.bf16.msra.mxu0 0
      %468 = vmatpush.bf16.msra.mxu0 0
      %469 = vmatpush.bf16.msra.mxu0 0
      %470 = vmatpush.bf16.msra.mxu0 %v461
      %471 = vmatmul.bf16.gmra.mxu0 %v433
      %v472 = vpop.f32.mrf.mxu0
      %v473 = vadd.f32 0.0, %v472
      %v474 = vpop.f32.mrf.mxu0
      %v475 = vadd.f32 0.0, %v474
      %476 = vmatmul.bf16.gmra.mxu0 %v436
      %v477 = vpop.f32.mrf.mxu0
      %v478 = vadd.f32 0.0, %v477
      %v479 = vpop.f32.mrf.mxu0
      %v480 = vadd.f32 0.0, %v479
      %481 = vmatmul.bf16.gmra.mxu0 %v439
      %v482 = vpop.f32.mrf.mxu0
      %v483 = vadd.f32 0.0, %v482
      %v484 = vpop.f32.mrf.mxu0
      %v485 = vadd.f32 0.0, %v484
      %486 = vmatmul.bf16.gmra.mxu0 %v442
      %v487 = vpop.f32.mrf.mxu0
      %v488 = vadd.f32 0.0, %v487
      %v489 = vpop.f32.mrf.mxu0
      %v490 = vadd.f32 0.0, %v489
      %491 = vmatmul.bf16.gmra.mxu0 %v445
      %v492 = vpop.f32.mrf.mxu0
      %v493 = vadd.f32 0.0, %v492
      %v494 = vpop.f32.mrf.mxu0
      %v495 = vadd.f32 0.0, %v494
      %496 = vmatmul.bf16.gmra.mxu0 %v448
      %v497 = vpop.f32.mrf.mxu0
      %v498 = vadd.f32 0.0, %v497
      %v499 = vpop.f32.mrf.mxu0
      %v500 = vadd.f32 0.0, %v499
      %501 = vmatmul.bf16.gmra.mxu0 %v451
      %v502 = vpop.f32.mrf.mxu0
      %v503 = vadd.f32 0.0, %v502
      %v504 = vpop.f32.mrf.mxu0
      %v505 = vadd.f32 0.0, %v504
      %506 = vmatmul.bf16.gmra.mxu0 %v454
      %v507 = vpop.f32.mrf.mxu0
      %v508 = vadd.f32 0.0, %v507
      %v509 = vpop.f32.mrf.mxu0
      %v510 = vadd.f32 0.0, %v509
      %511 = vdwg.mxu0
      %v528 = vunpack.c.l.b16 %v178
      %v529 = vunpack.c.l.b16 %v179
      %v530 = vunpack.c.l.b16 %v180
      %v531 = vunpack.c.l.b16 %v181
      %v532 = vunpack.c.l.b16 %v182
      %v533 = vunpack.c.l.b16 %v183
      %v534 = vunpack.c.l.b16 %v184
      %v535 = vunpack.c.l.b16 %v185
      %v536 = vunpack.c.l.b16 %v186
      %v537 = vunpack.c.l.b16 %v187
      %v538 = vunpack.c.l.b16 %v188
      %v539 = vunpack.c.l.b16 %v189
      %v540 = vunpack.c.l.b16 %v190
      %v541 = vunpack.c.l.b16 %v191
      %v542 = vunpack.c.l.b16 %v192
      %v543 = vunpack.c.l.b16 %v193
      %v544 = vpack.c.b16 %v529, %v528
      %v545 = vpack.c.b16 %v531, %v530
      %v546 = vpack.c.b16 %v533, %v532
      %v547 = vpack.c.b16 %v535, %v534
      %v548 = vpack.c.b16 %v537, %v536
      %v549 = vpack.c.b16 %v539, %v538
      %v550 = vpack.c.b16 %v541, %v540
      %v551 = vpack.c.b16 %v543, %v542
      %v554 = vunpack.c.l.b16 %v194
      %v555 = vunpack.c.l.b16 %v195
      %v556 = vpack.c.b16 %v555, %v554
      %v558 = vsel %vm431, %v544, 0
      %v561 = vsel %vm431, %v545, 0
      %v564 = vsel %vm431, %v546, 0
      %v567 = vsel %vm431, %v547, 0
      %v570 = vsel %vm431, %v548, 0
      %v573 = vsel %vm431, %v549, 0
      %v576 = vsel %vm431, %v550, 0
      %v579 = vsel %vm431, %v551, 0
      %v582 = vand.u32 %v556, %v459
      %584 = vmatpush.bf16.msra.mxu0 0
      %585 = vmatpush.bf16.msra.mxu0 0
      %586 = vmatpush.bf16.msra.mxu0 0
      %587 = vmatpush.bf16.msra.mxu0 0
      %588 = vmatpush.bf16.msra.mxu0 0
      %589 = vmatpush.bf16.msra.mxu0 0
      %590 = vmatpush.bf16.msra.mxu0 0
      %591 = vmatpush.bf16.msra.mxu0 %v582
      %592 = vmatmul.bf16.gmra.mxu0 %v558
      %v593 = vpop.f32.mrf.mxu0
      %v594 = vadd.f32 %v473, %v593
      %v595 = vpop.f32.mrf.mxu0
      %v596 = vadd.f32 %v475, %v595
      %597 = vmatmul.bf16.gmra.mxu0 %v561
      %v598 = vpop.f32.mrf.mxu0
      %v599 = vadd.f32 %v478, %v598
      %v600 = vpop.f32.mrf.mxu0
      %v601 = vadd.f32 %v480, %v600
      %602 = vmatmul.bf16.gmra.mxu0 %v564
      %v603 = vpop.f32.mrf.mxu0
      %v604 = vadd.f32 %v483, %v603
      %v605 = vpop.f32.mrf.mxu0
      %v606 = vadd.f32 %v485, %v605
      %607 = vmatmul.bf16.gmra.mxu0 %v567
      %v608 = vpop.f32.mrf.mxu0
      %v609 = vadd.f32 %v488, %v608
      %v610 = vpop.f32.mrf.mxu0
      %v611 = vadd.f32 %v490, %v610
      %612 = vmatmul.bf16.gmra.mxu0 %v570
      %v613 = vpop.f32.mrf.mxu0
      %v614 = vadd.f32 %v493, %v613
      %v615 = vpop.f32.mrf.mxu0
      %v616 = vadd.f32 %v495, %v615
      %617 = vmatmul.bf16.gmra.mxu0 %v573
      %v618 = vpop.f32.mrf.mxu0
      %v619 = vadd.f32 %v498, %v618
      %v620 = vpop.f32.mrf.mxu0
      %v621 = vadd.f32 %v500, %v620
      %622 = vmatmul.bf16.gmra.mxu0 %v576
      %v623 = vpop.f32.mrf.mxu0
      %v624 = vadd.f32 %v503, %v623
      %v625 = vpop.f32.mrf.mxu0
      %v626 = vadd.f32 %v505, %v625
      %627 = vmatmul.bf16.gmra.mxu0 %v579
      %v628 = vpop.f32.mrf.mxu0
      %v629 = vadd.f32 %v508, %v628
      %v630 = vpop.f32.mrf.mxu0
      %v631 = vadd.f32 %v510, %v630
      %632 = vdwg.mxu0
      %v633 = vld [vmem:[%s169] sm:$0xe]
      %v634 = vld [vmem:[%s169 + $0xc] sm:$0xe]
      %v635 = vld [vmem:[%s169 + $0x18] sm:$0xe]
      %v636 = vld [vmem:[%s169 + $0x24] sm:$0xe]
      %v637 = vld [vmem:[%s169 + $0x30] sm:$0xe]
      %v638 = vld [vmem:[%s169 + $0x3c] sm:$0xe]
      %v639 = vld [vmem:[%s169 + $0x48] sm:$0xe]
      %v640 = vld [vmem:[%s169 + $0x54] sm:$0xe]
      %vm657 = vcmask 1042432
      %vm658 = vcmask 1046532
      %vm659 = vmor %vm657, %vm658
      %v660 = vrot.slane %v633, 5
      %v661 = vrot.slane %v660, 4
      %v662 = vrot.slane %v179, 5
      %v663 = vsel %vm659, %v661, %v662
      %v664 = vrot.slane %v662, 4
      %v665 = vrot.slane %v196, 5
      %v666 = vsel %vm659, %v664, %v665
      %v667 = vrot.slane %v634, 5
      %v668 = vrot.slane %v667, 4
      %v669 = vrot.slane %v181, 5
      %v670 = vsel %vm659, %v668, %v669
      %v671 = vrot.slane %v669, 4
      %v672 = vrot.slane %v197, 5
      %v673 = vsel %vm659, %v671, %v672
      %v674 = vrot.slane %v635, 5
      %v675 = vrot.slane %v674, 4
      %v676 = vrot.slane %v183, 5
      %v677 = vsel %vm659, %v675, %v676
      %v678 = vrot.slane %v676, 4
      %v679 = vrot.slane %v198, 5
      %v680 = vsel %vm659, %v678, %v679
      %v681 = vrot.slane %v636, 5
      %v682 = vrot.slane %v681, 4
      %v683 = vrot.slane %v185, 5
      %v684 = vsel %vm659, %v682, %v683
      %v685 = vrot.slane %v683, 4
      %v686 = vrot.slane %v199, 5
      %v687 = vsel %vm659, %v685, %v686
      %v688 = vrot.slane %v637, 5
      %v689 = vrot.slane %v688, 4
      %v690 = vrot.slane %v187, 5
      %v691 = vsel %vm659, %v689, %v690
      %v692 = vrot.slane %v690, 4
      %v693 = vrot.slane %v200, 5
      %v694 = vsel %vm659, %v692, %v693
      %v695 = vrot.slane %v638, 5
      %v696 = vrot.slane %v695, 4
      %v697 = vrot.slane %v189, 5
      %v698 = vsel %vm659, %v696, %v697
      %v699 = vrot.slane %v697, 4
      %v700 = vrot.slane %v201, 5
      %v701 = vsel %vm659, %v699, %v700
      %v702 = vrot.slane %v639, 5
      %v703 = vrot.slane %v702, 4
      %v704 = vrot.slane %v191, 5
      %v705 = vsel %vm659, %v703, %v704
      %v706 = vrot.slane %v704, 4
      %v707 = vrot.slane %v202, 5
      %v708 = vsel %vm659, %v706, %v707
      %v709 = vrot.slane %v640, 5
      %v710 = vrot.slane %v709, 4
      %v711 = vrot.slane %v193, 5
      %v712 = vsel %vm659, %v710, %v711
      %v713 = vrot.slane %v711, 4
      %v714 = vrot.slane %v203, 5
      %v715 = vsel %vm659, %v713, %v714
      %s716 = scalar_lea.vmem %s1, 16
      %v717 = vld [vmem:[%s716] sm:$0xf]
      %v718 = vld [vmem:[%s716 + $0x4] sm:$0x1]
      %v719 = vunpack.c.l.b16 %v663
      %v720 = vunpack.c.l.b16 %v666
      %v721 = vunpack.c.l.b16 %v670
      %v722 = vunpack.c.l.b16 %v673
      %v723 = vunpack.c.l.b16 %v677
      %v724 = vunpack.c.l.b16 %v680
      %v725 = vunpack.c.l.b16 %v684
      %v726 = vunpack.c.l.b16 %v687
      %v727 = vunpack.c.l.b16 %v691
      %v728 = vunpack.c.l.b16 %v694
      %v729 = vunpack.c.l.b16 %v698
      %v730 = vunpack.c.l.b16 %v701
      %v731 = vunpack.c.l.b16 %v705
      %v732 = vunpack.c.l.b16 %v708
      %v733 = vunpack.c.l.b16 %v712
      %v734 = vunpack.c.l.b16 %v715
      %v735 = vpack.c.b16 %v720, %v719
      %v736 = vpack.c.b16 %v722, %v721
      %v737 = vpack.c.b16 %v724, %v723
      %v738 = vpack.c.b16 %v726, %v725
      %v739 = vpack.c.b16 %v728, %v727
      %v740 = vpack.c.b16 %v730, %v729
      %v741 = vpack.c.b16 %v732, %v731
      %v742 = vpack.c.b16 %v734, %v733
      %v745 = vunpack.c.l.b16 %v717
      %v746 = vunpack.c.l.b16 %v718
      %v747 = vpack.c.b16 %v746, %v745
      %v749 = vsel %vm431, %v735, 0
      %v752 = vsel %vm431, %v736, 0
      %v755 = vsel %vm431, %v737, 0
      %v758 = vsel %vm431, %v738, 0
      %v761 = vsel %vm431, %v739, 0
      %v764 = vsel %vm431, %v740, 0
      %v767 = vsel %vm431, %v741, 0
      %v770 = vsel %vm431, %v742, 0
      %v773 = vand.u32 %v747, %v459
      %775 = vmatpush.bf16.msra.mxu0 0
      %776 = vmatpush.bf16.msra.mxu0 0
      %777 = vmatpush.bf16.msra.mxu0 0
      %778 = vmatpush.bf16.msra.mxu0 0
      %779 = vmatpush.bf16.msra.mxu0 0
      %780 = vmatpush.bf16.msra.mxu0 0
      %781 = vmatpush.bf16.msra.mxu0 0
      %782 = vmatpush.bf16.msra.mxu0 %v773
      %783 = vmatmul.bf16.gmra.mxu0 %v749
      %v784 = vpop.f32.mrf.mxu0
      %v785 = vadd.f32 0.0, %v784
      %v786 = vpop.f32.mrf.mxu0
      %v787 = vadd.f32 0.0, %v786
      %788 = vmatmul.bf16.gmra.mxu0 %v752
      %v789 = vpop.f32.mrf.mxu0
      %v790 = vadd.f32 0.0, %v789
      %v791 = vpop.f32.mrf.mxu0
      %v792 = vadd.f32 0.0, %v791
      %793 = vmatmul.bf16.gmra.mxu0 %v755
      %v794 = vpop.f32.mrf.mxu0
      %v795 = vadd.f32 0.0, %v794
      %v796 = vpop.f32.mrf.mxu0
      %v797 = vadd.f32 0.0, %v796
      %798 = vmatmul.bf16.gmra.mxu0 %v758
      %v799 = vpop.f32.mrf.mxu0
      %v800 = vadd.f32 0.0, %v799
      %v801 = vpop.f32.mrf.mxu0
      %v802 = vadd.f32 0.0, %v801
      %803 = vmatmul.bf16.gmra.mxu0 %v761
      %v804 = vpop.f32.mrf.mxu0
      %v805 = vadd.f32 0.0, %v804
      %v806 = vpop.f32.mrf.mxu0
      %v807 = vadd.f32 0.0, %v806
      %808 = vmatmul.bf16.gmra.mxu0 %v764
      %v809 = vpop.f32.mrf.mxu0
      %v810 = vadd.f32 0.0, %v809
      %v811 = vpop.f32.mrf.mxu0
      %v812 = vadd.f32 0.0, %v811
      %813 = vmatmul.bf16.gmra.mxu0 %v767
      %v814 = vpop.f32.mrf.mxu0
      %v815 = vadd.f32 0.0, %v814
      %v816 = vpop.f32.mrf.mxu0
      %v817 = vadd.f32 0.0, %v816
      %818 = vmatmul.bf16.gmra.mxu0 %v770
      %v819 = vpop.f32.mrf.mxu0
      %v820 = vadd.f32 0.0, %v819
      %v821 = vpop.f32.mrf.mxu0
      %v822 = vadd.f32 0.0, %v821
      %823 = vdwg.mxu0
      %v824 = vadd.f32 %v594, %v785
      %v825 = vadd.f32 %v596, %v787
      %v826 = vadd.f32 %v599, %v790
      %v827 = vadd.f32 %v601, %v792
      %v828 = vadd.f32 %v604, %v795
      %v829 = vadd.f32 %v606, %v797
      %v830 = vadd.f32 %v609, %v800
      %v831 = vadd.f32 %v611, %v802
      %v832 = vadd.f32 %v614, %v805
      %v833 = vadd.f32 %v616, %v807
      %v834 = vadd.f32 %v619, %v810
      %v835 = vadd.f32 %v621, %v812
      %v836 = vadd.f32 %v624, %v815
      %v837 = vadd.f32 %v626, %v817
      %v838 = vadd.f32 %v629, %v820
      %v839 = vadd.f32 %v631, %v822
      %v840 = vld [vmem:[%s2] sm:$0x1]
      %v842 = vperm.slane %v840, 0
      %v844 = vadd.f32 %v824, %v842
      %v845 = vadd.f32 %v825, %v842
      %v846 = vadd.f32 %v826, %v842
      %v847 = vadd.f32 %v827, %v842
      %v848 = vadd.f32 %v828, %v842
      %v849 = vadd.f32 %v829, %v842
      %v850 = vadd.f32 %v830, %v842
      %v851 = vadd.f32 %v831, %v842
      %v852 = vadd.f32 %v832, %v842
      %v853 = vadd.f32 %v833, %v842
      %v854 = vadd.f32 %v834, %v842
      %v855 = vadd.f32 %v835, %v842
      %v856 = vadd.f32 %v836, %v842
      %v857 = vadd.f32 %v837, %v842
      %v858 = vadd.f32 %v838, %v842
      %v859 = vadd.f32 %v839, %v842
      %v860 = vmax.f32 %v844, 0.0
      %v861 = vmax.f32 %v845, 0.0
      %v862 = vmax.f32 %v846, 0.0
      %v863 = vmax.f32 %v847, 0.0
      %v864 = vmax.f32 %v848, 0.0
      %v865 = vmax.f32 %v849, 0.0
      %v866 = vmax.f32 %v850, 0.0
      %v867 = vmax.f32 %v851, 0.0
      %v868 = vmax.f32 %v852, 0.0
      %v869 = vmax.f32 %v853, 0.0
      %v870 = vmax.f32 %v854, 0.0
      %v871 = vmax.f32 %v855, 0.0
      %v872 = vmax.f32 %v856, 0.0
      %v873 = vmax.f32 %v857, 0.0
      %v874 = vmax.f32 %v858, 0.0
      %v875 = vmax.f32 %v859, 0.0
      %vm876 = vcmask 261120
      %877 = vst.msk [vmem:[%s175] sm:$0xff] %vm876, %v860
      %878 = vst.msk [vmem:[%s175 + $0x8] sm:$0xff] %vm876, %v861
      %879 = vst.msk [vmem:[%s175 + $0x10] sm:$0xff] %vm876, %v862
      %880 = vst.msk [vmem:[%s175 + $0x18] sm:$0xff] %vm876, %v863
      %881 = vst.msk [vmem:[%s175 + $0x20] sm:$0xff] %vm876, %v864
      %882 = vst.msk [vmem:[%s175 + $0x28] sm:$0xff] %vm876, %v865
      %883 = vst.msk [vmem:[%s175 + $0x30] sm:$0xff] %vm876, %v866
      %884 = vst.msk [vmem:[%s175 + $0x38] sm:$0xff] %vm876, %v867
      %885 = vst.msk [vmem:[%s175 + $0x40] sm:$0xff] %vm876, %v868
      %886 = vst.msk [vmem:[%s175 + $0x48] sm:$0xff] %vm876, %v869
      %887 = vst.msk [vmem:[%s175 + $0x50] sm:$0xff] %vm876, %v870
      %888 = vst.msk [vmem:[%s175 + $0x58] sm:$0xff] %vm876, %v871
      %889 = vst.msk [vmem:[%s175 + $0x60] sm:$0xff] %vm876, %v872
      %890 = vst.msk [vmem:[%s175 + $0x68] sm:$0xff] %vm876, %v873
      %891 = vst.msk [vmem:[%s175 + $0x70] sm:$0xff] %vm876, %v874
      %892 = vst.msk [vmem:[%s175 + $0x78] sm:$0xff] %vm876, %v875
      %s893 = smul.u32 16, %s14
      %p894 = scmp.lt.s32.totalorder %s893, 63
      %s895 = scalar_select %p894, %s893, 63
      %s896 = smul.addr %s895, 8
      %s897 = scalar_lea.vmem %s3, %s896
      // Predicated region
      $region33: #{_lambda_.20} parent=31 // pred_check
        %p898 = pneg %p100
      $region34: #{_lambda_.20} parent=31 // pred_check_branch
        %900 = sbr.rel (%p898) target = $region36
      $region35: #{_lambda_.20} parent=31 // pred_region
        %s901 = smul.u32 16, %s14
      $region36: #{_lambda_.20} parent=31 // pred_fallthru
        _
    $region32: #{_lambda_.20} parent=5 // pred_fallthru
      _
    %p902 = scmp.le.s32.totalorder 2, %s9
    // Predicated region
    $region37: #{_lambda_.20} parent=5 // pred_check
      %p903 = pneg %p902
    $region38: #{_lambda_.20} parent=5 // pred_check_branch
      %905 = sbr.rel (%p903) target = $region40
    $region39: #{_lambda_.20} parent=5 // pred_region
      %s906 = ssub.s32 %s9, 2
      // Predicated region
      $region41: #{_lambda_.20} parent=39 // pred_check
        %p907 = pneg %p106
      $region42: #{_lambda_.20} parent=39 // pred_check_branch
        %909 = sbr.rel (%p907) target = $region44
      $region43: #{_lambda_.20} parent=39 // pred_region
        %s910 = smul.u32 16, %s15
        %p911 = scmp.lt.s32.totalorder %s910, 63
        %s912 = scalar_select %p911, %s910, 63
        %s913 = smul.addr %s912, 8
        %s914 = scalar_lea.vmem %s3, %s913
      $region44: #{_lambda_.20} parent=39 // pred_fallthru
        _
    $region40: #{_lambda_.20} parent=5 // pred_fallthru
      _
  $region6: #{_lambda_.20} parent=0 // loop_footer
    %s13 = sadd.s32 1, %s9
  $region7: #{_lambda_.20} parent=0 // loop_footer_branch
    %8 = sbr.rel target = $region3
  $region8: #{_lambda_.20} parent=0 // loop_exit
    _

// kernel: _lambda_.22
$region0: #{_lambda_.22}
  #allocation0 [shape = 'u32[]', space=smem, size = 0x4, offset = 0x4, fixed_abs, tag = 'smem constant byte address 0x4 - core index']
  #allocation1 [shape = 'u32[72,128]{1,0:T(1,128)}', space=vmem, size = 0x9000, scoped, tag = 'internal scratch']
  %s0 = inlined_call_operand.vmem [shape: f32[128,128], index: 0, kind: input, shape index: {}]
  %s1 = inlined_call_operand.vmem [shape: f32[4,1,32], index: 1, kind: input, shape index: {}]
  %s2 = inlined_call_operand.vmem [shape: f32[4,1,32], index: 2, kind: input, shape index: {}]
  %s3 = inlined_call_operand.vmem [shape: f32[1,32], index: 3, kind: input, shape index: {}]
  %s4 = inlined_call_operand.vmem [shape: f32[1,32], index: 4, kind: input, shape index: {}]
  %s5 = inlined_call_operand.vmem [shape: f32[32,128], index: 5, kind: input, shape index: {}]
  %s6 = inlined_call_operand.vmem [shape: f32[128,128], index: 6, kind: output, shape index: {}]
  %s7 = sld [smem:[#allocation0]]
  $region57: #{_lambda_.22} parent=0
    _
  %s9 = ssub.s32 1, %s7
  %s10 = scalar_select 0, %s9, %s7
  loop: start=0, step=1, limit=6
  $region2: #{_lambda_.22} parent=0 // loop_pre_header
    _
  $region3: #{_lambda_.22} parent=0 // loop_header
    %s12 = sphi 0, %s16
    %p13 = scmp.ge.s32.totalorder %s12, 6
    %s22 = sphi 0, %s24
    %s25 = sphi 0, %s22
    %s26 = sphi 0, %s25
    %s42 = sphi 0, %s26
    %s46 = sphi 0, %s46
    %s48 = sphi 0, %s46
    %s49 = sphi 0, %s48
    %s63 = sphi 0, %s49
    %s67 = sphi 0, %s67
    %s69 = sphi 0, %s67
    %s70 = sphi 0, %s69
    %s84 = sphi 0, %s70
    %s88 = sphi 0, %s88
    %s90 = sphi 0, %s88
    %s91 = sphi 0, %s90
    %s105 = sphi 0, %s91
    %s109 = sphi 0, %s109
    %s111 = sphi 0, %s109
    %s112 = sphi 0, %s111
    %s126 = sphi 0, %s112
    %s130 = sphi 0, %s130
    %s132 = sphi 0, %s130
    %s133 = sphi 0, %s132
    %s147 = sphi 0, %s133
    %s153 = sphi 0, %s155
    %s156 = sphi 0, %s153
    %s157 = sphi 0, %s156
    %s173 = sphi 0, %s157
  $region4: #{_lambda_.22} parent=0 // loop_header_branch
    %15 = sbr.rel (%p13) target = $region8
  $region5: #{_lambda_.22} parent=0 // loop_body
    %s17 = ssub.s32 %s12, 1
    %s18 = ssub.s32 %s12, 2
    %s19 = sadd.s32 %s12, 1
    %s20 = ssub.s32 %s12, %s19
    %p21 = scmp.eq.s32.totalorder %s20, 0
    %s23 = sadd.s32 %s22, 1
    %s24 = scalar_select %p21, %s22, %s23
    %p27 = pneg %p21
    %p28 = scmp.eq.s32.totalorder %s12, 3
    %p29 = por %p27, %p28
    %p30 = scmp.ne.s32.totalorder %s22, %s25
    %p31 = scmp.eq.s32.totalorder %s12, 0
    %p32 = por %p30, %p31
    %p33 = scmp.ne.s32.totalorder %s22, %s25
    %p34 = scmp.eq.s32.totalorder %s17, 3
    %p35 = por %p33, %p34
    %p36 = scmp.ne.s32.totalorder %s25, %s26
    %p37 = scmp.eq.s32.totalorder %s17, 0
    %p38 = por %p36, %p37
    %p39 = scmp.ne.s32.totalorder %s25, %s26
    %p40 = scmp.eq.s32.totalorder %s18, 3
    %p41 = por %p39, %p40
    %p43 = scmp.ne.s32.totalorder %s26, %s42
    %p44 = scmp.eq.s32.totalorder %s18, 0
    %p45 = por %p43, %p44
    %s47 = sadd.s32 %s46, 1
    %p50 = scmp.eq.s32.totalorder %s12, 3
    %p51 = scmp.ne.s32.totalorder %s46, %s48
    %p52 = scmp.eq.s32.totalorder %s12, 0
    %p53 = por %p51, %p52
    %p54 = scmp.ne.s32.totalorder %s46, %s48
    %p55 = scmp.eq.s32.totalorder %s17, 3
    %p56 = por %p54, %p55
    %p57 = scmp.ne.s32.totalorder %s48, %s49
    %p58 = scmp.eq.s32.totalorder %s17, 0
    %p59 = por %p57, %p58
    %p60 = scmp.ne.s32.totalorder %s48, %s49
    %p61 = scmp.eq.s32.totalorder %s18, 3
    %p62 = por %p60, %p61
    %p64 = scmp.ne.s32.totalorder %s49, %s63
    %p65 = scmp.eq.s32.totalorder %s18, 0
    %p66 = por %p64, %p65
    %s68 = sadd.s32 %s67, 1
    %p71 = scmp.eq.s32.totalorder %s12, 3
    %p72 = scmp.ne.s32.totalorder %s67, %s69
    %p73 = scmp.eq.s32.totalorder %s12, 0
    %p74 = por %p72, %p73
    %p75 = scmp.ne.s32.totalorder %s67, %s69
    %p76 = scmp.eq.s32.totalorder %s17, 3
    %p77 = por %p75, %p76
    %p78 = scmp.ne.s32.totalorder %s69, %s70
    %p79 = scmp.eq.s32.totalorder %s17, 0
    %p80 = por %p78, %p79
    %p81 = scmp.ne.s32.totalorder %s69, %s70
    %p82 = scmp.eq.s32.totalorder %s18, 3
    %p83 = por %p81, %p82
    %p85 = scmp.ne.s32.totalorder %s70, %s84
    %p86 = scmp.eq.s32.totalorder %s18, 0
    %p87 = por %p85, %p86
    %s89 = sadd.s32 %s88, 1
    %p92 = scmp.eq.s32.totalorder %s12, 3
    %p93 = scmp.ne.s32.totalorder %s88, %s90
    %p94 = scmp.eq.s32.totalorder %s12, 0
    %p95 = por %p93, %p94
    %p96 = scmp.ne.s32.totalorder %s88, %s90
    %p97 = scmp.eq.s32.totalorder %s17, 3
    %p98 = por %p96, %p97
    %p99 = scmp.ne.s32.totalorder %s90, %s91
    %p100 = scmp.eq.s32.totalorder %s17, 0
    %p101 = por %p99, %p100
    %p102 = scmp.ne.s32.totalorder %s90, %s91
    %p103 = scmp.eq.s32.totalorder %s18, 3
    %p104 = por %p102, %p103
    %p106 = scmp.ne.s32.totalorder %s91, %s105
    %p107 = scmp.eq.s32.totalorder %s18, 0
    %p108 = por %p106, %p107
    %s110 = sadd.s32 %s109, 1
    %p113 = scmp.eq.s32.totalorder %s12, 3
    %p114 = scmp.ne.s32.totalorder %s109, %s111
    %p115 = scmp.eq.s32.totalorder %s12, 0
    %p116 = por %p114, %p115
    %p117 = scmp.ne.s32.totalorder %s109, %s111
    %p118 = scmp.eq.s32.totalorder %s17, 3
    %p119 = por %p117, %p118
    %p120 = scmp.ne.s32.totalorder %s111, %s112
    %p121 = scmp.eq.s32.totalorder %s17, 0
    %p122 = por %p120, %p121
    %p123 = scmp.ne.s32.totalorder %s111, %s112
    %p124 = scmp.eq.s32.totalorder %s18, 3
    %p125 = por %p123, %p124
    %p127 = scmp.ne.s32.totalorder %s112, %s126
    %p128 = scmp.eq.s32.totalorder %s18, 0
    %p129 = por %p127, %p128
    %s131 = sadd.s32 %s130, 1
    %p134 = scmp.eq.s32.totalorder %s12, 3
    %p135 = scmp.ne.s32.totalorder %s130, %s132
    %p136 = scmp.eq.s32.totalorder %s12, 0
    %p137 = por %p135, %p136
    %p138 = scmp.ne.s32.totalorder %s130, %s132
    %p139 = scmp.eq.s32.totalorder %s17, 3
    %p140 = por %p138, %p139
    %p141 = scmp.ne.s32.totalorder %s132, %s133
    %p142 = scmp.eq.s32.totalorder %s17, 0
    %p143 = por %p141, %p142
    %p144 = scmp.ne.s32.totalorder %s132, %s133
    %p145 = scmp.eq.s32.totalorder %s18, 3
    %p146 = por %p144, %p145
    %p148 = scmp.ne.s32.totalorder %s133, %s147
    %p149 = scmp.eq.s32.totalorder %s18, 0
    %p150 = por %p148, %p149
    %s151 = ssub.s32 %s12, %s19
    %p152 = scmp.eq.s32.totalorder %s151, 0
    %s154 = sadd.s32 %s153, 1
    %s155 = scalar_select %p152, %s153, %s154
    %p158 = pneg %p152
    %p159 = scmp.eq.s32.totalorder %s12, 3
    %p160 = por %p158, %p159
    %p161 = scmp.ne.s32.totalorder %s153, %s156
    %p162 = scmp.eq.s32.totalorder %s12, 0
    %p163 = por %p161, %p162
    %p164 = scmp.ne.s32.totalorder %s153, %s156
    %p165 = scmp.eq.s32.totalorder %s17, 3
    %p166 = por %p164, %p165
    %p167 = scmp.ne.s32.totalorder %s156, %s157
    %p168 = scmp.eq.s32.totalorder %s17, 0
    %p169 = por %p167, %p168
    %p170 = scmp.ne.s32.totalorder %s156, %s157
    %p171 = scmp.eq.s32.totalorder %s18, 3
    %p172 = por %p170, %p171
    %p174 = scmp.ne.s32.totalorder %s157, %s173
    %p175 = scmp.eq.s32.totalorder %s18, 0
    %p176 = por %p174, %p175
    %p177 = scmp.le.s32.totalorder 1, %s12
    %p178 = scmp.lt.s32.totalorder %s12, 5
    %p179 = pnand %p177, %p178
    %p180 = pneg %p179
    // Predicated region
    $region9: #{_lambda_.22} parent=5 // pred_check
      _
    $region10: #{_lambda_.22} parent=5 // pred_check_branch
      %182 = sbr.rel (%p179) target = $region12
    $region11: #{_lambda_.22} parent=5 // pred_region
      %s183 = ssub.s32 %s12, 1
      // Predicated region
      $region13: #{_lambda_.22} parent=11 // pred_check
        %p184 = pneg %p59
      $region14: #{_lambda_.22} parent=11 // pred_check_branch
        %186 = sbr.rel (%p184) target = $region16
      $region15: #{_lambda_.22} parent=11 // pred_region
        _
      $region16: #{_lambda_.22} parent=11 // pred_fallthru
        _
      // Predicated region
      $region17: #{_lambda_.22} parent=11 // pred_check
        %p187 = pneg %p80
      $region18: #{_lambda_.22} parent=11 // pred_check_branch
        %189 = sbr.rel (%p187) target = $region20
      $region19: #{_lambda_.22} parent=11 // pred_region
        _
      $region20: #{_lambda_.22} parent=11 // pred_fallthru
        _
      // Predicated region
      $region21: #{_lambda_.22} parent=11 // pred_check
        %p190 = pneg %p101
      $region22: #{_lambda_.22} parent=11 // pred_check_branch
        %192 = sbr.rel (%p190) target = $region24
      $region23: #{_lambda_.22} parent=11 // pred_region
        _
      $region24: #{_lambda_.22} parent=11 // pred_fallthru
        _
      // Predicated region
      $region25: #{_lambda_.22} parent=11 // pred_check
        %p193 = pneg %p122
      $region26: #{_lambda_.22} parent=11 // pred_check_branch
        %195 = sbr.rel (%p193) target = $region28
      $region27: #{_lambda_.22} parent=11 // pred_region
        _
      $region28: #{_lambda_.22} parent=11 // pred_fallthru
        _
      // Predicated region
      $region29: #{_lambda_.22} parent=11 // pred_check
        %p196 = pneg %p143
      $region30: #{_lambda_.22} parent=11 // pred_check_branch
        %198 = sbr.rel (%p196) target = $region32
      $region31: #{_lambda_.22} parent=11 // pred_region
        _
      $region32: #{_lambda_.22} parent=11 // pred_fallthru
        _
    $region12: #{_lambda_.22} parent=5 // pred_fallthru
      _
    %p199 = scmp.lt.s32.totalorder %s12, 4
    // Predicated region
    $region33: #{_lambda_.22} parent=5 // pred_check
      %p200 = pneg %p199
    $region34: #{_lambda_.22} parent=5 // pred_check_branch
      %202 = sbr.rel (%p200) target = $region36
    $region35: #{_lambda_.22} parent=5 // pred_region
      // Predicated region
      $region37: #{_lambda_.22} parent=35 // pred_check
        %p203 = pneg %p32
      $region38: #{_lambda_.22} parent=35 // pred_check_branch
        %205 = sbr.rel (%p203) target = $region40
      $region39: #{_lambda_.22} parent=35 // pred_region
        %s206 = smul.u32 4, %s12
        %p207 = scmp.lt.s32.totalorder %s206, 15
        %s208 = scalar_select %p207, %s206, 15
        %s209 = smul.addr %s208, 8
        %s210 = scalar_lea.vmem %s0, %s209
        %s211 = smul.u32 4, %s12
      $region40: #{_lambda_.22} parent=35 // pred_fallthru
        _
    $region36: #{_lambda_.22} parent=5 // pred_fallthru
      _
    %p212 = scmp.le.s32.totalorder 1, %s12
    %p213 = scmp.lt.s32.totalorder %s12, 5
    %p214 = pnand %p212, %p213
    %p215 = pneg %p214
    // Predicated region
    $region41: #{_lambda_.22} parent=5 // pred_check
      _
    $region42: #{_lambda_.22} parent=5 // pred_check_branch
      %217 = sbr.rel (%p214) target = $region44
    $region43: #{_lambda_.22} parent=5 // pred_region
      %s218 = ssub.s32 %s12, 1
      %s219 = smul.u32 4, %s17
      %p220 = scmp.lt.s32.totalorder %s219, 15
      %s221 = scalar_select %p220, %s219, 15
      %s222 = smul.addr %s221, 8
      %s223 = scalar_lea.vmem %s0, %s222
      %p224 = pneg %p38
      %p225 = pneg %p35
      %p226 = pneg %p59
      %p227 = pneg %p56
      %p228 = pneg %p80
      %p229 = pneg %p77
      %p230 = pneg %p101
      %p231 = pneg %p98
      %p232 = pneg %p122
      %p233 = pneg %p119
      %p234 = pneg %p143
      %p235 = pneg %p140
      %p236 = pneg %p169
      %p237 = pneg %p166
      %s238 = smul.u32 4, %s17
      %p239 = scmp.lt.s32.totalorder %s238, 15
      %s240 = scalar_select %p239, %s238, 15
      %s241 = smul.addr %s240, 8
      %s242 = scalar_lea.vmem %s6, %s241
      %s243 = smul.u32 4, %s17
      %p244 = scmp.lt.s32.totalorder %s243, 15
      %s245 = scalar_select %p244, %s243, 15
      %s246 = smul.addr %s245, 8
      %s247 = scalar_lea.vmem %s0, %s246
      %s248 = smul.u32 4, %s17
      %s249 = smul.u32 4, %s17
      %p250 = scmp.lt.s32.totalorder %s249, 15
      %s251 = scalar_select %p250, %s249, 15
      %s252 = smul.addr %s251, 8
      %s253 = scalar_lea.vmem %s6, %s252
      %s254 = smul.u32 4, %s17
      %v255 = vld [vmem:[%s1] sm:$0x1]
      %v256 = vld [vmem:[%s1 + $0x1] sm:$0x1]
      %v257 = vld [vmem:[%s1 + $0x2] sm:$0x1]
      %v258 = vld [vmem:[%s1 + $0x3] sm:$0x1]
      %vm259 = vcmask 253952
      %v260 = vsel %vm259, %v255, 0.0
      %v261 = vsel %vm259, %v256, 0.0
      %v262 = vadd.f32 %v260, %v261
      %v263 = vsel %vm259, %v257, 0.0
      %v264 = vadd.f32 %v262, %v263
      %v265 = vsel %vm259, %v258, 0.0
      %v266 = vadd.f32 %v264, %v265
      %v267 = vmul.f32 %v266, 0.001953125
      %v268 = vld [vmem:[%s2] sm:$0x1]
      %v269 = vld [vmem:[%s2 + $0x1] sm:$0x1]
      %v270 = vld [vmem:[%s2 + $0x2] sm:$0x1]
      %v271 = vld [vmem:[%s2 + $0x3] sm:$0x1]
      %v272 = vsel %vm259, %v268, 0.0
      %v273 = vsel %vm259, %v269, 0.0
      %v274 = vadd.f32 %v272, %v273
      %v275 = vsel %vm259, %v270, 0.0
      %v276 = vadd.f32 %v274, %v275
      %v277 = vsel %vm259, %v271, 0.0
      %v278 = vadd.f32 %v276, %v277
      %v279 = vmul.f32 %v278, 0.001953125
      %v280 = vmul.f32 %v267, %v267
      %v281 = vsub.f32 %v279, %v280
      %v282 = vmax.f32 %v281, 0.0
      %v283 = vadd.f32 %v282, 1e-05
      %v284 = vrsqrt.pop %v283
      %v285 = vmul.f32 %v284, %v283
      %v286 = vmul.f32 %v285, %v284
      %v287 = vmul.f32 0.5, %v286
      %v288 = vsub.f32 1.5, %v287
      %v289 = vmul.f32 %v284, %v288
      %vm290 = vweird.f32 %v283
      %vm291 = vweird.f32 %v284
      %vm292 = vmor %vm290, %vm291
      %v293 = vsel %vm292, %v284, %v289
      %v294 = vld [vmem:[%s3] sm:$0x1]
      %v295 = vmul.f32 %v294, %v293
      %v296 = vld [vmem:[%s4] sm:$0x1]
      %v297 = vmul.f32 %v267, %v295
      %v298 = vsub.f32 %v296, %v297
      %v300 = vperm.slane %v295, 0
      %v302 = vperm.slane %v298, 0
      %v303 = vld [vmem:[%s5] sm:$0xff]
      %v304 = vld [vmem:[%s5 + $0x8] sm:$0xff]
      %v305 = vld [vmem:[%s5 + $0x10] sm:$0xff]
      %v306 = vld [vmem:[%s5 + $0x18] sm:$0xff]
      %vm307 = vcmask 261120
      %v308 = vsel %vm307, %v300, 0
      %310 = vmatpush.msra.mxu0 0.0
      %311 = vmatpush.msra.mxu0 0.0
      %312 = vmatpush.msra.mxu0 0.0
      %313 = vmatpush.msra.mxu0 0.0
      %314 = vmatpush.msra.mxu0 0.0
      %315 = vmatpush.msra.mxu0 0.0
      %316 = vmatpush.msra.mxu0 0.0
      %317 = vmatpush.msra.mxu0 0.0
      %318 = vmatpush.msra.mxu0 0.0
      %319 = vmatpush.msra.mxu0 0.0
      %320 = vmatpush.msra.mxu0 0.0
      %321 = vmatpush.msra.mxu0 0.0
      %322 = vmatpush.msra.mxu0 %v306
      %323 = vmatpush.msra.mxu0 %v305
      %324 = vmatpush.msra.mxu0 %v304
      %325 = vmatpush.msra.mxu0 %v303
      %326 = vmatmul.f32.gmra.mxu0 %v308
      %v327 = vpop.f32.mrf.mxu0
      %v328 = vadd.f32 0.0, %v327
      %329 = vdwg.mxu0
      %v330 = vsel %vm307, %v302, 0
      %332 = vmatpush.msra.mxu0 0.0
      %333 = vmatpush.msra.mxu0 0.0
      %334 = vmatpush.msra.mxu0 0.0
      %335 = vmatpush.msra.mxu0 0.0
      %336 = vmatpush.msra.mxu0 0.0
      %337 = vmatpush.msra.mxu0 0.0
      %338 = vmatpush.msra.mxu0 0.0
      %339 = vmatpush.msra.mxu0 0.0
      %340 = vmatpush.msra.mxu0 0.0
      %341 = vmatpush.msra.mxu0 0.0
      %342 = vmatpush.msra.mxu0 0.0
      %343 = vmatpush.msra.mxu0 0.0
      %344 = vmatpush.msra.mxu0 %v306
      %345 = vmatpush.msra.mxu0 %v305
      %346 = vmatpush.msra.mxu0 %v304
      %347 = vmatpush.msra.mxu0 %v303
      %348 = vmatmul.f32.gmra.mxu0 %v330
      %v349 = vpop.f32.mrf.mxu0
      %v350 = vadd.f32 0.0, %v349
      %351 = vdwg.mxu0
      %v352 = vld [vmem:[%s247] sm:$0xff]
      %v353 = vld [vmem:[%s247 + $0x8] sm:$0xff]
      %v354 = vld [vmem:[%s247 + $0x10] sm:$0xff]
      %v355 = vld [vmem:[%s247 + $0x18] sm:$0xff]
      %v356 = vperm.slane %v328, 0
      %v357 = vmul.f32 %v352, %v356
      %v358 = vmul.f32 %v353, %v356
      %v359 = vmul.f32 %v354, %v356
      %v360 = vmul.f32 %v355, %v356
      %v361 = vperm.slane %v350, 0
      %v362 = vadd.f32 %v357, %v361
      %v363 = vadd.f32 %v358, %v361
      %v364 = vadd.f32 %v359, %v361
      %v365 = vadd.f32 %v360, %v361
      %v366 = vmax.f32 %v362, 0.0
      %v367 = vmax.f32 %v363, 0.0
      %v368 = vmax.f32 %v364, 0.0
      %v369 = vmax.f32 %v365, 0.0
      %370 = vst [vmem:[%s253] sm:$0xff] %v366
      %371 = vst [vmem:[%s253 + $0x8] sm:$0xff] %v367
      %372 = vst [vmem:[%s253 + $0x10] sm:$0xff] %v368
      %373 = vst [vmem:[%s253 + $0x18] sm:$0xff] %v369
      %s374 = smul.u32 4, %s17
      %p375 = scmp.lt.s32.totalorder %s374, 15
      %s376 = scalar_select %p375, %s374, 15
      %s377 = smul.addr %s376, 8
      %s378 = scalar_lea.vmem %s6, %s377
      // Predicated region
      $region45: #{_lambda_.22} parent=43 // pred_check
        %p379 = pneg %p166
      $region46: #{_lambda_.22} parent=43 // pred_check_branch
        %381 = sbr.rel (%p379) target = $region48
      $region47: #{_lambda_.22} parent=43 // pred_region
        %s382 = smul.u32 4, %s17
      $region48: #{_lambda_.22} parent=43 // pred_fallthru
        _
    $region44: #{_lambda_.22} parent=5 // pred_fallthru
      _
    %p383 = scmp.le.s32.totalorder 2, %s12
    // Predicated region
    $region49: #{_lambda_.22} parent=5 // pred_check
      %p384 = pneg %p383
    $region50: #{_lambda_.22} parent=5 // pred_check_branch
      %386 = sbr.rel (%p384) target = $region52
    $region51: #{_lambda_.22} parent=5 // pred_region
      %s387 = ssub.s32 %s12, 2
      // Predicated region
      $region53: #{_lambda_.22} parent=51 // pred_check
        %p388 = pneg %p172
      $region54: #{_lambda_.22} parent=51 // pred_check_branch
        %390 = sbr.rel (%p388) target = $region56
      $region55: #{_lambda_.22} parent=51 // pred_region
        %s391 = smul.u32 4, %s18
        %p392 = scmp.lt.s32.totalorder %s391, 15
        %s393 = scalar_select %p392, %s391, 15
        %s394 = smul.addr %s393, 8
        %s395 = scalar_lea.vmem %s6, %s394
      $region56: #{_lambda_.22} parent=51 // pred_fallthru
        _
    $region52: #{_lambda_.22} parent=5 // pred_fallthru
      _
  $region6: #{_lambda_.22} parent=0 // loop_footer
    %s16 = sadd.s32 1, %s12
  $region7: #{_lambda_.22} parent=0 // loop_footer_branch
    %11 = sbr.rel target = $region3
  $region8: #{_lambda_.22} parent=0 // loop_exit
    _

// kernel: _lambda_.21
$region0: #{_lambda_.21}
  #allocation0 [shape = 'u32[]', space=smem, size = 0x4, offset = 0x4, fixed_abs, tag = 'smem constant byte address 0x4 - core index']
  #allocation1 [shape = 'u32[72,128]{1,0:T(1,128)}', space=vmem, size = 0x9000, scoped, tag = 'internal scratch']
  %s0 = inlined_call_operand.vmem [shape: bf16[32,18,96], index: 0, kind: input, shape index: {}]
  %s1 = inlined_call_operand.vmem [shape: bf16[3,96,32], index: 1, kind: input, shape index: {}]
  %s2 = inlined_call_operand.vmem [shape: f32[512,32], index: 2, kind: output, shape index: {0}]
  %s3 = inlined_call_operand.vmem [shape: f32[4,1,32], index: 3, kind: output, shape index: {1}]
  %s4 = inlined_call_operand.vmem [shape: f32[4,1,32], index: 4, kind: output, shape index: {2}]
  %5 = xla_tuple %s2, %s3, %s4
  %s6 = sld [smem:[#allocation0]]
  $region57: #{_lambda_.21} parent=0
    _
  %s8 = ssub.s32 1, %s6
  %s9 = scalar_select 0, %s8, %s6
  loop: start=0, step=1, limit=6
  $region2: #{_lambda_.21} parent=0 // loop_pre_header
    _
  $region3: #{_lambda_.21} parent=0 // loop_header
    %s11 = sphi 0, %s15
    %p12 = scmp.ge.s32.totalorder %s11, 6
    %s21 = sphi 0, %s23
    %s24 = sphi 0, %s21
    %s25 = sphi 0, %s24
    %s41 = sphi 0, %s25
    %s45 = sphi 0, %s45
    %s47 = sphi 0, %s45
    %s48 = sphi 0, %s47
    %s62 = sphi 0, %s48
    %s68 = sphi 0, %s70
    %s71 = sphi 0, %s68
    %s72 = sphi 0, %s71
    %s88 = sphi 0, %s72
    %s94 = sphi 0, %s96
    %s97 = sphi 0, %s94
    %s98 = sphi 0, %s97
    %s114 = sphi 0, %s98
    %s120 = sphi 0, %s122
    %s123 = sphi 0, %s120
    %s124 = sphi 0, %s123
    %s140 = sphi 0, %s124
  $region4: #{_lambda_.21} parent=0 // loop_header_branch
    %14 = sbr.rel (%p12) target = $region8
  $region5: #{_lambda_.21} parent=0 // loop_body
    %s16 = ssub.s32 %s11, 1
    %s17 = ssub.s32 %s11, 2
    %s18 = sadd.s32 %s11, 1
    %s19 = ssub.s32 %s11, %s18
    %p20 = scmp.eq.s32.totalorder %s19, 0
    %s22 = sadd.s32 %s21, 1
    %s23 = scalar_select %p20, %s21, %s22
    %p26 = pneg %p20
    %p27 = scmp.eq.s32.totalorder %s11, 3
    %p28 = por %p26, %p27
    %p29 = scmp.ne.s32.totalorder %s21, %s24
    %p30 = scmp.eq.s32.totalorder %s11, 0
    %p31 = por %p29, %p30
    %p32 = scmp.ne.s32.totalorder %s21, %s24
    %p33 = scmp.eq.s32.totalorder %s16, 3
    %p34 = por %p32, %p33
    %p35 = scmp.ne.s32.totalorder %s24, %s25
    %p36 = scmp.eq.s32.totalorder %s16, 0
    %p37 = por %p35, %p36
    %p38 = scmp.ne.s32.totalorder %s24, %s25
    %p39 = scmp.eq.s32.totalorder %s17, 3
    %p40 = por %p38, %p39
    %p42 = scmp.ne.s32.totalorder %s25, %s41
    %p43 = scmp.eq.s32.totalorder %s17, 0
    %p44 = por %p42, %p43
    %s46 = sadd.s32 %s45, 1
    %p49 = scmp.eq.s32.totalorder %s11, 3
    %p50 = scmp.ne.s32.totalorder %s45, %s47
    %p51 = scmp.eq.s32.totalorder %s11, 0
    %p52 = por %p50, %p51
    %p53 = scmp.ne.s32.totalorder %s45, %s47
    %p54 = scmp.eq.s32.totalorder %s16, 3
    %p55 = por %p53, %p54
    %p56 = scmp.ne.s32.totalorder %s47, %s48
    %p57 = scmp.eq.s32.totalorder %s16, 0
    %p58 = por %p56, %p57
    %p59 = scmp.ne.s32.totalorder %s47, %s48
    %p60 = scmp.eq.s32.totalorder %s17, 3
    %p61 = por %p59, %p60
    %p63 = scmp.ne.s32.totalorder %s48, %s62
    %p64 = scmp.eq.s32.totalorder %s17, 0
    %p65 = por %p63, %p64
    %s66 = ssub.s32 %s11, %s18
    %p67 = scmp.eq.s32.totalorder %s66, 0
    %s69 = sadd.s32 %s68, 1
    %s70 = scalar_select %p67, %s68, %s69
    %p73 = pneg %p67
    %p74 = scmp.eq.s32.totalorder %s11, 3
    %p75 = por %p73, %p74
    %p76 = scmp.ne.s32.totalorder %s68, %s71
    %p77 = scmp.eq.s32.totalorder %s11, 0
    %p78 = por %p76, %p77
    %p79 = scmp.ne.s32.totalorder %s68, %s71
    %p80 = scmp.eq.s32.totalorder %s16, 3
    %p81 = por %p79, %p80
    %p82 = scmp.ne.s32.totalorder %s71, %s72
    %p83 = scmp.eq.s32.totalorder %s16, 0
    %p84 = por %p82, %p83
    %p85 = scmp.ne.s32.totalorder %s71, %s72
    %p86 = scmp.eq.s32.totalorder %s17, 3
    %p87 = por %p85, %p86
    %p89 = scmp.ne.s32.totalorder %s72, %s88
    %p90 = scmp.eq.s32.totalorder %s17, 0
    %p91 = por %p89, %p90
    %s92 = ssub.s32 %s11, %s18
    %p93 = scmp.eq.s32.totalorder %s92, 0
    %s95 = sadd.s32 %s94, 1
    %s96 = scalar_select %p93, %s94, %s95
    %p99 = pneg %p93
    %p100 = scmp.eq.s32.totalorder %s11, 3
    %p101 = por %p99, %p100
    %p102 = scmp.ne.s32.totalorder %s94, %s97
    %p103 = scmp.eq.s32.totalorder %s11, 0
    %p104 = por %p102, %p103
    %p105 = scmp.ne.s32.totalorder %s94, %s97
    %p106 = scmp.eq.s32.totalorder %s16, 3
    %p107 = por %p105, %p106
    %p108 = scmp.ne.s32.totalorder %s97, %s98
    %p109 = scmp.eq.s32.totalorder %s16, 0
    %p110 = por %p108, %p109
    %p111 = scmp.ne.s32.totalorder %s97, %s98
    %p112 = scmp.eq.s32.totalorder %s17, 3
    %p113 = por %p111, %p112
    %p115 = scmp.ne.s32.totalorder %s98, %s114
    %p116 = scmp.eq.s32.totalorder %s17, 0
    %p117 = por %p115, %p116
    %s118 = ssub.s32 %s11, %s18
    %p119 = scmp.eq.s32.totalorder %s118, 0
    %s121 = sadd.s32 %s120, 1
    %s122 = scalar_select %p119, %s120, %s121
    %p125 = pneg %p119
    %p126 = scmp.eq.s32.totalorder %s11, 3
    %p127 = por %p125, %p126
    %p128 = scmp.ne.s32.totalorder %s120, %s123
    %p129 = scmp.eq.s32.totalorder %s11, 0
    %p130 = por %p128, %p129
    %p131 = scmp.ne.s32.totalorder %s120, %s123
    %p132 = scmp.eq.s32.totalorder %s16, 3
    %p133 = por %p131, %p132
    %p134 = scmp.ne.s32.totalorder %s123, %s124
    %p135 = scmp.eq.s32.totalorder %s16, 0
    %p136 = por %p134, %p135
    %p137 = scmp.ne.s32.totalorder %s123, %s124
    %p138 = scmp.eq.s32.totalorder %s17, 3
    %p139 = por %p137, %p138
    %p141 = scmp.ne.s32.totalorder %s124, %s140
    %p142 = scmp.eq.s32.totalorder %s17, 0
    %p143 = por %p141, %p142
    %p144 = scmp.le.s32.totalorder 1, %s11
    %p145 = scmp.lt.s32.totalorder %s11, 5
    %p146 = pnand %p144, %p145
    %p147 = pneg %p146
    // Predicated region
    $region9: #{_lambda_.21} parent=5 // pred_check
      _
    $region10: #{_lambda_.21} parent=5 // pred_check_branch
      %149 = sbr.rel (%p146) target = $region12
    $region11: #{_lambda_.21} parent=5 // pred_region
      %s150 = ssub.s32 %s11, 1
      // Predicated region
      $region13: #{_lambda_.21} parent=11 // pred_check
        %p151 = pneg %p58
      $region14: #{_lambda_.21} parent=11 // pred_check_branch
        %153 = sbr.rel (%p151) target = $region16
      $region15: #{_lambda_.21} parent=11 // pred_region
        _
      $region16: #{_lambda_.21} parent=11 // pred_fallthru
        _
    $region12: #{_lambda_.21} parent=5 // pred_fallthru
      _
    %p154 = scmp.lt.s32.totalorder %s11, 4
    // Predicated region
    $region17: #{_lambda_.21} parent=5 // pred_check
      %p155 = pneg %p154
    $region18: #{_lambda_.21} parent=5 // pred_check_branch
      %157 = sbr.rel (%p155) target = $region20
    $region19: #{_lambda_.21} parent=5 // pred_region
      // Predicated region
      $region21: #{_lambda_.21} parent=19 // pred_check
        %p158 = pneg %p31
      $region22: #{_lambda_.21} parent=19 // pred_check_branch
        %160 = sbr.rel (%p158) target = $region24
      $region23: #{_lambda_.21} parent=19 // pred_region
        %s161 = smul.u32 8, %s11
        %p162 = scmp.lt.s32.totalorder %s161, 31
        %s163 = scalar_select %p162, %s161, 31
        %s164 = smul.addr %s163, 3
        %s165 = smul.addr %s164, 4
        %s166 = scalar_lea.vmem %s0, %s165
        %s167 = smul.u32 8, %s11
      $region24: #{_lambda_.21} parent=19 // pred_fallthru
        _
    $region20: #{_lambda_.21} parent=5 // pred_fallthru
      _
    %p168 = scmp.le.s32.totalorder 1, %s11
    %p169 = scmp.lt.s32.totalorder %s11, 5
    %p170 = pnand %p168, %p169
    %p171 = pneg %p170
    // Predicated region
    $region25: #{_lambda_.21} parent=5 // pred_check
      _
    $region26: #{_lambda_.21} parent=5 // pred_check_branch
      %173 = sbr.rel (%p170) target = $region28
    $region27: #{_lambda_.21} parent=5 // pred_region
      %s174 = ssub.s32 %s11, 1
      %s175 = smul.u32 8, %s16
      %p176 = scmp.lt.s32.totalorder %s175, 31
      %s177 = scalar_select %p176, %s175, 31
      %s178 = smul.addr %s177, 3
      %s179 = smul.addr %s178, 4
      %s180 = scalar_lea.vmem %s0, %s179
      %p181 = pneg %p37
      %p182 = pneg %p34
      %p183 = pneg %p58
      %p184 = pneg %p55
      %p185 = pneg %p84
      %p186 = pneg %p81
      %s187 = smul.u32 16, %s16
      %p188 = scmp.lt.s32.totalorder %s187, 63
      %s189 = scalar_select %p188, %s187, 63
      %s190 = smul.addr %s189, 8
      %s191 = scalar_lea.vmem %s2, %s190
      %p192 = pneg %p110
      %p193 = pneg %p107
      %p194 = scmp.lt.s32.totalorder %s16, 3
      %s195 = scalar_select %p194, %s16, 3
      %s196 = scalar_lea.vmem %s3, %s195
      %p197 = pneg %p136
      %p198 = pneg %p133
      %p199 = scmp.lt.s32.totalorder %s16, 3
      %s200 = scalar_select %p199, %s16, 3
      %s201 = scalar_lea.vmem %s4, %s200
      %s202 = smul.u32 8, %s16
      %p203 = scmp.lt.s32.totalorder %s202, 31
      %s204 = scalar_select %p203, %s202, 31
      %s205 = smul.addr %s204, 3
      %s206 = smul.addr %s205, 4
      %s207 = scalar_lea.vmem %s0, %s206
      %s208 = smul.u32 8, %s16
      %s209 = smul.u32 16, %s16
      %p210 = scmp.lt.s32.totalorder %s209, 63
      %s211 = scalar_select %p210, %s209, 63
      %s212 = smul.addr %s211, 8
      %s213 = scalar_lea.vmem %s2, %s212
      %s214 = smul.u32 16, %s16
      %p215 = scmp.lt.s32.totalorder %s16, 3
      %s216 = scalar_select %p215, %s16, 3
      %s217 = scalar_lea.vmem %s3, %s216
      %p218 = scmp.lt.s32.totalorder %s16, 3
      %s219 = scalar_select %p218, %s16, 3
      %s220 = scalar_lea.vmem %s4, %s219
      %v222 = vld [vmem:[%s207] sm:$0xf]
      %v223 = vld [vmem:[%s207 + $0x4] sm:$0xf]
      %v224 = vld [vmem:[%s207 + $0xc] sm:$0xf]
      %v225 = vld [vmem:[%s207 + $0x10] sm:$0xf]
      %v226 = vld [vmem:[%s207 + $0x18] sm:$0xf]
      %v227 = vld [vmem:[%s207 + $0x1c] sm:$0xf]
      %v228 = vld [vmem:[%s207 + $0x24] sm:$0xf]
      %v229 = vld [vmem:[%s207 + $0x28] sm:$0xf]
      %v230 = vld [vmem:[%s207 + $0x30] sm:$0xf]
      %v231 = vld [vmem:[%s207 + $0x34] sm:$0xf]
      %v232 = vld [vmem:[%s207 + $0x3c] sm:$0xf]
      %v233 = vld [vmem:[%s207 + $0x40] sm:$0xf]
      %v234 = vld [vmem:[%s207 + $0x48] sm:$0xf]
      %v235 = vld [vmem:[%s207 + $0x4c] sm:$0xf]
      %v236 = vld [vmem:[%s207 + $0x54] sm:$0xf]
      %v237 = vld [vmem:[%s207 + $0x58] sm:$0xf]
      %v238 = vld [vmem:[%s1] sm:$0xf]
      %v239 = vld [vmem:[%s1 + $0x4] sm:$0xf]
      %v240 = vld [vmem:[%s1 + $0x8] sm:$0xf]
      %v241 = vld [vmem:[%s1 + $0xc] sm:$0xf]
      %v242 = vld [vmem:[%s1 + $0x10] sm:$0xf]
      %v243 = vld [vmem:[%s1 + $0x14] sm:$0xf]
      %v244 = vld [vmem:[%s1 + $0x18] sm:$0xf]
      %v245 = vld [vmem:[%s1 + $0x1c] sm:$0xf]
      %v246 = vld [vmem:[%s1 + $0x20] sm:$0xf]
      %v247 = vld [vmem:[%s1 + $0x24] sm:$0xf]
      %v248 = vld [vmem:[%s1 + $0x28] sm:$0xf]
      %v249 = vld [vmem:[%s1 + $0x2c] sm:$0xf]
      %v250 = vld [vmem:[%s207 + $0x8] sm:$0x1]
      %v251 = vld [vmem:[%s207 + $0x14] sm:$0x1]
      %v252 = vld [vmem:[%s207 + $0x20] sm:$0x1]
      %v253 = vld [vmem:[%s207 + $0x2c] sm:$0x1]
      %v254 = vld [vmem:[%s207 + $0x38] sm:$0x1]
      %v255 = vld [vmem:[%s207 + $0x44] sm:$0x1]
      %v256 = vld [vmem:[%s207 + $0x50] sm:$0x1]
      %v257 = vld [vmem:[%s207 + $0x5c] sm:$0x1]
      %vm258 = vsmask.f32 3328
      %vm259 = vsmask.f32 7440
      %vm260 = vmor %vm258, %vm259
      %v262 = vshrl.u32 %v222, 16
      %v264 = vrot.slane %v262, 4
      %v265 = vshll.u32 %v222, 16
      %v267 = vrot.slane %v265, 5
      %v268 = vor.u32 %v264, %v267
      %v269 = vrot.slane %v268, 4
      %v271 = vshll.u32 %v223, 16
      %v273 = vrot.slane %v271, 5
      %v274 = vsel %vm260, %v269, %v273
      %v275 = vshrl.u32 %v223, 16
      %v277 = vrot.slane %v275, 4
      %v278 = vor.u32 %v277, %v273
      %v279 = vrot.slane %v278, 4
      %v281 = vshll.u32 %v250, 16
      %v283 = vrot.slane %v281, 5
      %v284 = vsel %vm260, %v279, %v283
      %v286 = vshrl.u32 %v224, 16
      %v288 = vrot.slane %v286, 4
      %v289 = vshll.u32 %v224, 16
      %v291 = vrot.slane %v289, 5
      %v292 = vor.u32 %v288, %v291
      %v293 = vrot.slane %v292, 4
      %v295 = vshll.u32 %v225, 16
      %v297 = vrot.slane %v295, 5
      %v298 = vsel %vm260, %v293, %v297
      %v299 = vshrl.u32 %v225, 16
      %v301 = vrot.slane %v299, 4
      %v302 = vor.u32 %v301, %v297
      %v303 = vrot.slane %v302, 4
      %v305 = vshll.u32 %v251, 16
      %v307 = vrot.slane %v305, 5
      %v308 = vsel %vm260, %v303, %v307
      %v310 = vshrl.u32 %v226, 16
      %v312 = vrot.slane %v310, 4
      %v313 = vshll.u32 %v226, 16
      %v315 = vrot.slane %v313, 5
      %v316 = vor.u32 %v312, %v315
      %v317 = vrot.slane %v316, 4
      %v319 = vshll.u32 %v227, 16
      %v321 = vrot.slane %v319, 5
      %v322 = vsel %vm260, %v317, %v321
      %v323 = vshrl.u32 %v227, 16
      %v325 = vrot.slane %v323, 4
      %v326 = vor.u32 %v325, %v321
      %v327 = vrot.slane %v326, 4
      %v329 = vshll.u32 %v252, 16
      %v331 = vrot.slane %v329, 5
      %v332 = vsel %vm260, %v327, %v331
      %v334 = vshrl.u32 %v228, 16
      %v336 = vrot.slane %v334, 4
      %v337 = vshll.u32 %v228, 16
      %v339 = vrot.slane %v337, 5
      %v340 = vor.u32 %v336, %v339
      %v341 = vrot.slane %v340, 4
      %v343 = vshll.u32 %v229, 16
      %v345 = vrot.slane %v343, 5
      %v346 = vsel %vm260, %v341, %v345
      %v347 = vshrl.u32 %v229, 16
      %v349 = vrot.slane %v347, 4
      %v350 = vor.u32 %v349, %v345
      %v351 = vrot.slane %v350, 4
      %v353 = vshll.u32 %v253, 16
      %v355 = vrot.slane %v353, 5
      %v356 = vsel %vm260, %v351, %v355
      %v358 = vshrl.u32 %v230, 16
      %v360 = vrot.slane %v358, 4
      %v361 = vshll.u32 %v230, 16
      %v363 = vrot.slane %v361, 5
      %v364 = vor.u32 %v360, %v363
      %v365 = vrot.slane %v364, 4
      %v367 = vshll.u32 %v231, 16
      %v369 = vrot.slane %v367, 5
      %v370 = vsel %vm260, %v365, %v369
      %v371 = vshrl.u32 %v231, 16
      %v373 = vrot.slane %v371, 4
      %v374 = vor.u32 %v373, %v369
      %v375 = vrot.slane %v374, 4
      %v377 = vshll.u32 %v254, 16
      %v379 = vrot.slane %v377, 5
      %v380 = vsel %vm260, %v375, %v379
      %v382 = vshrl.u32 %v232, 16
      %v384 = vrot.slane %v382, 4
      %v385 = vshll.u32 %v232, 16
      %v387 = vrot.slane %v385, 5
      %v388 = vor.u32 %v384, %v387
      %v389 = vrot.slane %v388, 4
      %v391 = vshll.u32 %v233, 16
      %v393 = vrot.slane %v391, 5
      %v394 = vsel %vm260, %v389, %v393
      %v395 = vshrl.u32 %v233, 16
      %v397 = vrot.slane %v395, 4
      %v398 = vor.u32 %v397, %v393
      %v399 = vrot.slane %v398, 4
      %v401 = vshll.u32 %v255, 16
      %v403 = vrot.slane %v401, 5
      %v404 = vsel %vm260, %v399, %v403
      %v406 = vshrl.u32 %v234, 16
      %v408 = vrot.slane %v406, 4
      %v409 = vshll.u32 %v234, 16
      %v411 = vrot.slane %v409, 5
      %v412 = vor.u32 %v408, %v411
      %v413 = vrot.slane %v412, 4
      %v415 = vshll.u32 %v235, 16
      %v417 = vrot.slane %v415, 5
      %v418 = vsel %vm260, %v413, %v417
      %v419 = vshrl.u32 %v235, 16
      %v421 = vrot.slane %v419, 4
      %v422 = vor.u32 %v421, %v417
      %v423 = vrot.slane %v422, 4
      %v425 = vshll.u32 %v256, 16
      %v427 = vrot.slane %v425, 5
      %v428 = vsel %vm260, %v423, %v427
      %v430 = vshrl.u32 %v236, 16
      %v432 = vrot.slane %v430, 4
      %v433 = vshll.u32 %v236, 16
      %v435 = vrot.slane %v433, 5
      %v436 = vor.u32 %v432, %v435
      %v437 = vrot.slane %v436, 4
      %v439 = vshll.u32 %v237, 16
      %v441 = vrot.slane %v439, 5
      %v442 = vsel %vm260, %v437, %v441
      %v443 = vshrl.u32 %v237, 16
      %v445 = vrot.slane %v443, 4
      %v446 = vor.u32 %v445, %v441
      %v447 = vrot.slane %v446, 4
      %v449 = vshll.u32 %v257, 16
      %v451 = vrot.slane %v449, 5
      %v452 = vsel %vm260, %v447, %v451
      %s453 = scalar_lea.vmem %s1, 48
      %v454 = vld [vmem:[%s453] sm:$0xf]
      %v455 = vld [vmem:[%s453 + $0x4] sm:$0xf]
      %v456 = vld [vmem:[%s453 + $0x8] sm:$0xf]
      %v457 = vld [vmem:[%s453 + $0xc] sm:$0xf]
      %v458 = vld [vmem:[%s453 + $0x10] sm:$0xf]
      %v459 = vld [vmem:[%s453 + $0x14] sm:$0xf]
      %v460 = vld [vmem:[%s453 + $0x18] sm:$0xf]
      %v461 = vld [vmem:[%s453 + $0x1c] sm:$0xf]
      %v462 = vld [vmem:[%s453 + $0x20] sm:$0xf]
      %v463 = vld [vmem:[%s453 + $0x24] sm:$0xf]
      %v464 = vld [vmem:[%s453 + $0x28] sm:$0xf]
      %v465 = vld [vmem:[%s453 + $0x2c] sm:$0xf]
      %v466 = vunpack.c.l.b16 %v274
      %v467 = vunpack.c.l.b16 %v284
      %v468 = vunpack.c.l.b16 %v298
      %v469 = vunpack.c.l.b16 %v308
      %v470 = vunpack.c.l.b16 %v322
      %v471 = vunpack.c.l.b16 %v332
      %v472 = vunpack.c.l.b16 %v346
      %v473 = vunpack.c.l.b16 %v356
      %v474 = vunpack.c.l.b16 %v370
      %v475 = vunpack.c.l.b16 %v380
      %v476 = vunpack.c.l.b16 %v394
      %v477 = vunpack.c.l.b16 %v404
      %v478 = vunpack.c.l.b16 %v418
      %v479 = vunpack.c.l.b16 %v428
      %v480 = vunpack.c.l.b16 %v442
      %v481 = vunpack.c.l.b16 %v452
      %v482 = vpack.c.b16 %v467, %v466
      %v483 = vpack.c.b16 %v469, %v468
      %v484 = vpack.c.b16 %v471, %v470
      %v485 = vpack.c.b16 %v473, %v472
      %v486 = vpack.c.b16 %v475, %v474
      %v487 = vpack.c.b16 %v477, %v476
      %v488 = vpack.c.b16 %v479, %v478
      %v489 = vpack.c.b16 %v481, %v480
      %v502 = vunpack.c.l.b16 %v454
      %v503 = vunpack.c.l.b16 %v455
      %v504 = vunpack.c.l.b16 %v456
      %v505 = vunpack.c.l.b16 %v457
      %v506 = vunpack.c.l.b16 %v458
      %v507 = vunpack.c.l.b16 %v459
      %v508 = vunpack.c.l.b16 %v460
      %v509 = vunpack.c.l.b16 %v461
      %v510 = vunpack.c.l.b16 %v462
      %v511 = vunpack.c.l.b16 %v463
      %v512 = vunpack.c.l.b16 %v464
      %v513 = vunpack.c.l.b16 %v465
      %v514 = vpack.c.b16 %v503, %v502
      %v515 = vpack.c.b16 %v505, %v504
      %v516 = vpack.c.b16 %v507, %v506
      %v517 = vpack.c.b16 %v509, %v508
      %v518 = vpack.c.b16 %v511, %v510
      %v519 = vpack.c.b16 %v513, %v512
      %vm526 = vcmask 785408
      %v528 = vsel %vm526, %v482, 0
      %v531 = vsel %vm526, %v483, 0
      %v534 = vsel %vm526, %v484, 0
      %v537 = vsel %vm526, %v485, 0
      %v540 = vsel %vm526, %v486, 0
      %v543 = vsel %vm526, %v487, 0
      %v546 = vsel %vm526, %v488, 0
      %v549 = vsel %vm526, %v489, 0
      %551 = vmatpush.bf16.msra.mxu0 0
      %552 = vmatpush.bf16.msra.mxu0 0
      %553 = vmatpush.bf16.msra.mxu0 %v519
      %554 = vmatpush.bf16.msra.mxu0 %v518
      %555 = vmatpush.bf16.msra.mxu0 %v517
      %556 = vmatpush.bf16.msra.mxu0 %v516
      %557 = vmatpush.bf16.msra.mxu0 %v515
      %558 = vmatpush.bf16.msra.mxu0 %v514
      %559 = vmatmul.bf16.gmra.mxu0 %v528
      %v560 = vpop.f32.mrf.mxu0
      %v561 = vadd.f32 0.0, %v560
      %v562 = vpop.f32.mrf.mxu0
      %v563 = vadd.f32 0.0, %v562
      %564 = vmatmul.bf16.gmra.mxu0 %v531
      %v565 = vpop.f32.mrf.mxu0
      %v566 = vadd.f32 0.0, %v565
      %v567 = vpop.f32.mrf.mxu0
      %v568 = vadd.f32 0.0, %v567
      %569 = vmatmul.bf16.gmra.mxu0 %v534
      %v570 = vpop.f32.mrf.mxu0
      %v571 = vadd.f32 0.0, %v570
      %v572 = vpop.f32.mrf.mxu0
      %v573 = vadd.f32 0.0, %v572
      %574 = vmatmul.bf16.gmra.mxu0 %v537
      %v575 = vpop.f32.mrf.mxu0
      %v576 = vadd.f32 0.0, %v575
      %v577 = vpop.f32.mrf.mxu0
      %v578 = vadd.f32 0.0, %v577
      %579 = vmatmul.bf16.gmra.mxu0 %v540
      %v580 = vpop.f32.mrf.mxu0
      %v581 = vadd.f32 0.0, %v580
      %v582 = vpop.f32.mrf.mxu0
      %v583 = vadd.f32 0.0, %v582
      %584 = vmatmul.bf16.gmra.mxu0 %v543
      %v585 = vpop.f32.mrf.mxu0
      %v586 = vadd.f32 0.0, %v585
      %v587 = vpop.f32.mrf.mxu0
      %v588 = vadd.f32 0.0, %v587
      %589 = vmatmul.bf16.gmra.mxu0 %v546
      %v590 = vpop.f32.mrf.mxu0
      %v591 = vadd.f32 0.0, %v590
      %v592 = vpop.f32.mrf.mxu0
      %v593 = vadd.f32 0.0, %v592
      %594 = vmatmul.bf16.gmra.mxu0 %v549
      %v595 = vpop.f32.mrf.mxu0
      %v596 = vadd.f32 0.0, %v595
      %v597 = vpop.f32.mrf.mxu0
      %v598 = vadd.f32 0.0, %v597
      %599 = vdwg.mxu0
      %v616 = vunpack.c.l.b16 %v222
      %v617 = vunpack.c.l.b16 %v223
      %v618 = vunpack.c.l.b16 %v224
      %v619 = vunpack.c.l.b16 %v225
      %v620 = vunpack.c.l.b16 %v226
      %v621 = vunpack.c.l.b16 %v227
      %v622 = vunpack.c.l.b16 %v228
      %v623 = vunpack.c.l.b16 %v229
      %v624 = vunpack.c.l.b16 %v230
      %v625 = vunpack.c.l.b16 %v231
      %v626 = vunpack.c.l.b16 %v232
      %v627 = vunpack.c.l.b16 %v233
      %v628 = vunpack.c.l.b16 %v234
      %v629 = vunpack.c.l.b16 %v235
      %v630 = vunpack.c.l.b16 %v236
      %v631 = vunpack.c.l.b16 %v237
      %v632 = vpack.c.b16 %v617, %v616
      %v633 = vpack.c.b16 %v619, %v618
      %v634 = vpack.c.b16 %v621, %v620
      %v635 = vpack.c.b16 %v623, %v622
      %v636 = vpack.c.b16 %v625, %v624
      %v637 = vpack.c.b16 %v627, %v626
      %v638 = vpack.c.b16 %v629, %v628
      %v639 = vpack.c.b16 %v631, %v630
      %v652 = vunpack.c.l.b16 %v238
      %v653 = vunpack.c.l.b16 %v239
      %v654 = vunpack.c.l.b16 %v240
      %v655 = vunpack.c.l.b16 %v241
      %v656 = vunpack.c.l.b16 %v242
      %v657 = vunpack.c.l.b16 %v243
      %v658 = vunpack.c.l.b16 %v244
      %v659 = vunpack.c.l.b16 %v245
      %v660 = vunpack.c.l.b16 %v246
      %v661 = vunpack.c.l.b16 %v247
      %v662 = vunpack.c.l.b16 %v248
      %v663 = vunpack.c.l.b16 %v249
      %v664 = vpack.c.b16 %v653, %v652
      %v665 = vpack.c.b16 %v655, %v654
      %v666 = vpack.c.b16 %v657, %v656
      %v667 = vpack.c.b16 %v659, %v658
      %v668 = vpack.c.b16 %v661, %v660
      %v669 = vpack.c.b16 %v663, %v662
      %v677 = vsel %vm526, %v632, 0
      %v680 = vsel %vm526, %v633, 0
      %v683 = vsel %vm526, %v634, 0
      %v686 = vsel %vm526, %v635, 0
      %v689 = vsel %vm526, %v636, 0
      %v692 = vsel %vm526, %v637, 0
      %v695 = vsel %vm526, %v638, 0
      %v698 = vsel %vm526, %v639, 0
      %700 = vmatpush.bf16.msra.mxu0 0
      %701 = vmatpush.bf16.msra.mxu0 0
      %702 = vmatpush.bf16.msra.mxu0 %v669
      %703 = vmatpush.bf16.msra.mxu0 %v668
      %704 = vmatpush.bf16.msra.mxu0 %v667
      %705 = vmatpush.bf16.msra.mxu0 %v666
      %706 = vmatpush.bf16.msra.mxu0 %v665
      %707 = vmatpush.bf16.msra.mxu0 %v664
      %708 = vmatmul.bf16.gmra.mxu0 %v677
      %v709 = vpop.f32.mrf.mxu0
      %v710 = vadd.f32 %v561, %v709
      %v711 = vpop.f32.mrf.mxu0
      %v712 = vadd.f32 %v563, %v711
      %713 = vmatmul.bf16.gmra.mxu0 %v680
      %v714 = vpop.f32.mrf.mxu0
      %v715 = vadd.f32 %v566, %v714
      %v716 = vpop.f32.mrf.mxu0
      %v717 = vadd.f32 %v568, %v716
      %718 = vmatmul.bf16.gmra.mxu0 %v683
      %v719 = vpop.f32.mrf.mxu0
      %v720 = vadd.f32 %v571, %v719
      %v721 = vpop.f32.mrf.mxu0
      %v722 = vadd.f32 %v573, %v721
      %723 = vmatmul.bf16.gmra.mxu0 %v686
      %v724 = vpop.f32.mrf.mxu0
      %v725 = vadd.f32 %v576, %v724
      %v726 = vpop.f32.mrf.mxu0
      %v727 = vadd.f32 %v578, %v726
      %728 = vmatmul.bf16.gmra.mxu0 %v689
      %v729 = vpop.f32.mrf.mxu0
      %v730 = vadd.f32 %v581, %v729
      %v731 = vpop.f32.mrf.mxu0
      %v732 = vadd.f32 %v583, %v731
      %733 = vmatmul.bf16.gmra.mxu0 %v692
      %v734 = vpop.f32.mrf.mxu0
      %v735 = vadd.f32 %v586, %v734
      %v736 = vpop.f32.mrf.mxu0
      %v737 = vadd.f32 %v588, %v736
      %738 = vmatmul.bf16.gmra.mxu0 %v695
      %v739 = vpop.f32.mrf.mxu0
      %v740 = vadd.f32 %v591, %v739
      %v741 = vpop.f32.mrf.mxu0
      %v742 = vadd.f32 %v593, %v741
      %743 = vmatmul.bf16.gmra.mxu0 %v698
      %v744 = vpop.f32.mrf.mxu0
      %v745 = vadd.f32 %v596, %v744
      %v746 = vpop.f32.mrf.mxu0
      %v747 = vadd.f32 %v598, %v746
      %748 = vdwg.mxu0
      %v749 = vld [vmem:[%s207] sm:$0xe]
      %v750 = vld [vmem:[%s207 + $0xc] sm:$0xe]
      %v751 = vld [vmem:[%s207 + $0x18] sm:$0xe]
      %v752 = vld [vmem:[%s207 + $0x24] sm:$0xe]
      %v753 = vld [vmem:[%s207 + $0x30] sm:$0xe]
      %v754 = vld [vmem:[%s207 + $0x3c] sm:$0xe]
      %v755 = vld [vmem:[%s207 + $0x48] sm:$0xe]
      %v756 = vld [vmem:[%s207 + $0x54] sm:$0xe]
      %vm773 = vcmask 1042432
      %vm774 = vcmask 1046532
      %vm775 = vmor %vm773, %vm774
      %v776 = vrot.slane %v749, 5
      %v777 = vrot.slane %v776, 4
      %v778 = vrot.slane %v223, 5
      %v779 = vsel %vm775, %v777, %v778
      %v780 = vrot.slane %v778, 4
      %v781 = vrot.slane %v250, 5
      %v782 = vsel %vm775, %v780, %v781
      %v783 = vrot.slane %v750, 5
      %v784 = vrot.slane %v783, 4
      %v785 = vrot.slane %v225, 5
      %v786 = vsel %vm775, %v784, %v785
      %v787 = vrot.slane %v785, 4
      %v788 = vrot.slane %v251, 5
      %v789 = vsel %vm775, %v787, %v788
      %v790 = vrot.slane %v751, 5
      %v791 = vrot.slane %v790, 4
      %v792 = vrot.slane %v227, 5
      %v793 = vsel %vm775, %v791, %v792
      %v794 = vrot.slane %v792, 4
      %v795 = vrot.slane %v252, 5
      %v796 = vsel %vm775, %v794, %v795
      %v797 = vrot.slane %v752, 5
      %v798 = vrot.slane %v797, 4
      %v799 = vrot.slane %v229, 5
      %v800 = vsel %vm775, %v798, %v799
      %v801 = vrot.slane %v799, 4
      %v802 = vrot.slane %v253, 5
      %v803 = vsel %vm775, %v801, %v802
      %v804 = vrot.slane %v753, 5
      %v805 = vrot.slane %v804, 4
      %v806 = vrot.slane %v231, 5
      %v807 = vsel %vm775, %v805, %v806
      %v808 = vrot.slane %v806, 4
      %v809 = vrot.slane %v254, 5
      %v810 = vsel %vm775, %v808, %v809
      %v811 = vrot.slane %v754, 5
      %v812 = vrot.slane %v811, 4
      %v813 = vrot.slane %v233, 5
      %v814 = vsel %vm775, %v812, %v813
      %v815 = vrot.slane %v813, 4
      %v816 = vrot.slane %v255, 5
      %v817 = vsel %vm775, %v815, %v816
      %v818 = vrot.slane %v755, 5
      %v819 = vrot.slane %v818, 4
      %v820 = vrot.slane %v235, 5
      %v821 = vsel %vm775, %v819, %v820
      %v822 = vrot.slane %v820, 4
      %v823 = vrot.slane %v256, 5
      %v824 = vsel %vm775, %v822, %v823
      %v825 = vrot.slane %v756, 5
      %v826 = vrot.slane %v825, 4
      %v827 = vrot.slane %v237, 5
      %v828 = vsel %vm775, %v826, %v827
      %v829 = vrot.slane %v827, 4
      %v830 = vrot.slane %v257, 5
      %v831 = vsel %vm775, %v829, %v830
      %s832 = scalar_lea.vmem %s1, 96
      %v833 = vld [vmem:[%s832] sm:$0xf]
      %v834 = vld [vmem:[%s832 + $0x4] sm:$0xf]
      %v835 = vld [vmem:[%s832 + $0x8] sm:$0xf]
      %v836 = vld [vmem:[%s832 + $0xc] sm:$0xf]
      %v837 = vld [vmem:[%s832 + $0x10] sm:$0xf]
      %v838 = vld [vmem:[%s832 + $0x14] sm:$0xf]
      %v839 = vld [vmem:[%s832 + $0x18] sm:$0xf]
      %v840 = vld [vmem:[%s832 + $0x1c] sm:$0xf]
      %v841 = vld [vmem:[%s832 + $0x20] sm:$0xf]
      %v842 = vld [vmem:[%s832 + $0x24] sm:$0xf]
      %v843 = vld [vmem:[%s832 + $0x28] sm:$0xf]
      %v844 = vld [vmem:[%s832 + $0x2c] sm:$0xf]
      %v845 = vunpack.c.l.b16 %v779
      %v846 = vunpack.c.l.b16 %v782
      %v847 = vunpack.c.l.b16 %v786
      %v848 = vunpack.c.l.b16 %v789
      %v849 = vunpack.c.l.b16 %v793
      %v850 = vunpack.c.l.b16 %v796
      %v851 = vunpack.c.l.b16 %v800
      %v852 = vunpack.c.l.b16 %v803
      %v853 = vunpack.c.l.b16 %v807
      %v854 = vunpack.c.l.b16 %v810
      %v855 = vunpack.c.l.b16 %v814
      %v856 = vunpack.c.l.b16 %v817
      %v857 = vunpack.c.l.b16 %v821
      %v858 = vunpack.c.l.b16 %v824
      %v859 = vunpack.c.l.b16 %v828
      %v860 = vunpack.c.l.b16 %v831
      %v861 = vpack.c.b16 %v846, %v845
      %v862 = vpack.c.b16 %v848, %v847
      %v863 = vpack.c.b16 %v850, %v849
      %v864 = vpack.c.b16 %v852, %v851
      %v865 = vpack.c.b16 %v854, %v853
      %v866 = vpack.c.b16 %v856, %v855
      %v867 = vpack.c.b16 %v858, %v857
      %v868 = vpack.c.b16 %v860, %v859
      %v881 = vunpack.c.l.b16 %v833
      %v882 = vunpack.c.l.b16 %v834
      %v883 = vunpack.c.l.b16 %v835
      %v884 = vunpack.c.l.b16 %v836
      %v885 = vunpack.c.l.b16 %v837
      %v886 = vunpack.c.l.b16 %v838
      %v887 = vunpack.c.l.b16 %v839
      %v888 = vunpack.c.l.b16 %v840
      %v889 = vunpack.c.l.b16 %v841
      %v890 = vunpack.c.l.b16 %v842
      %v891 = vunpack.c.l.b16 %v843
      %v892 = vunpack.c.l.b16 %v844
      %v893 = vpack.c.b16 %v882, %v881
      %v894 = vpack.c.b16 %v884, %v883
      %v895 = vpack.c.b16 %v886, %v885
      %v896 = vpack.c.b16 %v888, %v887
      %v897 = vpack.c.b16 %v890, %v889
      %v898 = vpack.c.b16 %v892, %v891
      %v906 = vsel %vm526, %v861, 0
      %v909 = vsel %vm526, %v862, 0
      %v912 = vsel %vm526, %v863, 0
      %v915 = vsel %vm526, %v864, 0
      %v918 = vsel %vm526, %v865, 0
      %v921 = vsel %vm526, %v866, 0
      %v924 = vsel %vm526, %v867, 0
      %v927 = vsel %vm526, %v868, 0
      %929 = vmatpush.bf16.msra.mxu0 0
      %930 = vmatpush.bf16.msra.mxu0 0
      %931 = vmatpush.bf16.msra.mxu0 %v898
      %932 = vmatpush.bf16.msra.mxu0 %v897
      %933 = vmatpush.bf16.msra.mxu0 %v896
      %934 = vmatpush.bf16.msra.mxu0 %v895
      %935 = vmatpush.bf16.msra.mxu0 %v894
      %936 = vmatpush.bf16.msra.mxu0 %v893
      %937 = vmatmul.bf16.gmra.mxu0 %v906
      %v938 = vpop.f32.mrf.mxu0
      %v939 = vadd.f32 0.0, %v938
      %v940 = vpop.f32.mrf.mxu0
      %v941 = vadd.f32 0.0, %v940
      %942 = vmatmul.bf16.gmra.mxu0 %v909
      %v943 = vpop.f32.mrf.mxu0
      %v944 = vadd.f32 0.0, %v943
      %v945 = vpop.f32.mrf.mxu0
      %v946 = vadd.f32 0.0, %v945
      %947 = vmatmul.bf16.gmra.mxu0 %v912
      %v948 = vpop.f32.mrf.mxu0
      %v949 = vadd.f32 0.0, %v948
      %v950 = vpop.f32.mrf.mxu0
      %v951 = vadd.f32 0.0, %v950
      %952 = vmatmul.bf16.gmra.mxu0 %v915
      %v953 = vpop.f32.mrf.mxu0
      %v954 = vadd.f32 0.0, %v953
      %v955 = vpop.f32.mrf.mxu0
      %v956 = vadd.f32 0.0, %v955
      %957 = vmatmul.bf16.gmra.mxu0 %v918
      %v958 = vpop.f32.mrf.mxu0
      %v959 = vadd.f32 0.0, %v958
      %v960 = vpop.f32.mrf.mxu0
      %v961 = vadd.f32 0.0, %v960
      %962 = vmatmul.bf16.gmra.mxu0 %v921
      %v963 = vpop.f32.mrf.mxu0
      %v964 = vadd.f32 0.0, %v963
      %v965 = vpop.f32.mrf.mxu0
      %v966 = vadd.f32 0.0, %v965
      %967 = vmatmul.bf16.gmra.mxu0 %v924
      %v968 = vpop.f32.mrf.mxu0
      %v969 = vadd.f32 0.0, %v968
      %v970 = vpop.f32.mrf.mxu0
      %v971 = vadd.f32 0.0, %v970
      %972 = vmatmul.bf16.gmra.mxu0 %v927
      %v973 = vpop.f32.mrf.mxu0
      %v974 = vadd.f32 0.0, %v973
      %v975 = vpop.f32.mrf.mxu0
      %v976 = vadd.f32 0.0, %v975
      %977 = vdwg.mxu0
      %v978 = vadd.f32 %v710, %v939
      %v979 = vadd.f32 %v712, %v941
      %v980 = vadd.f32 %v715, %v944
      %v981 = vadd.f32 %v717, %v946
      %v982 = vadd.f32 %v720, %v949
      %v983 = vadd.f32 %v722, %v951
      %v984 = vadd.f32 %v725, %v954
      %v985 = vadd.f32 %v727, %v956
      %v986 = vadd.f32 %v730, %v959
      %v987 = vadd.f32 %v732, %v961
      %v988 = vadd.f32 %v735, %v964
      %v989 = vadd.f32 %v737, %v966
      %v990 = vadd.f32 %v740, %v969
      %v991 = vadd.f32 %v742, %v971
      %v992 = vadd.f32 %v745, %v974
      %v993 = vadd.f32 %v747, %v976
      %vm994 = vcmask 261120
      %995 = vst.msk [vmem:[%s213] sm:$0xff] %vm994, %v978
      %996 = vst.msk [vmem:[%s213 + $0x8] sm:$0xff] %vm994, %v979
      %997 = vst.msk [vmem:[%s213 + $0x10] sm:$0xff] %vm994, %v980
      %998 = vst.msk [vmem:[%s213 + $0x18] sm:$0xff] %vm994, %v981
      %999 = vst.msk [vmem:[%s213 + $0x20] sm:$0xff] %vm994, %v982
      %1000 = vst.msk [vmem:[%s213 + $0x28] sm:$0xff] %vm994, %v983
      %1001 = vst.msk [vmem:[%s213 + $0x30] sm:$0xff] %vm994, %v984
      %1002 = vst.msk [vmem:[%s213 + $0x38] sm:$0xff] %vm994, %v985
      %1003 = vst.msk [vmem:[%s213 + $0x40] sm:$0xff] %vm994, %v986
      %1004 = vst.msk [vmem:[%s213 + $0x48] sm:$0xff] %vm994, %v987
      %1005 = vst.msk [vmem:[%s213 + $0x50] sm:$0xff] %vm994, %v988
      %1006 = vst.msk [vmem:[%s213 + $0x58] sm:$0xff] %vm994, %v989
      %1007 = vst.msk [vmem:[%s213 + $0x60] sm:$0xff] %vm994, %v990
      %1008 = vst.msk [vmem:[%s213 + $0x68] sm:$0xff] %vm994, %v991
      %1009 = vst.msk [vmem:[%s213 + $0x70] sm:$0xff] %vm994, %v992
      %1010 = vst.msk [vmem:[%s213 + $0x78] sm:$0xff] %vm994, %v993
      %v1011 = vsel %vm994, %v978, 0.0
      %v1012 = vsel %vm994, %v979, 0.0
      %v1013 = vadd.f32 %v1011, %v1012
      %v1014 = vsel %vm994, %v980, 0.0
      %v1015 = vadd.f32 %v1013, %v1014
      %v1016 = vsel %vm994, %v981, 0.0
      %v1017 = vadd.f32 %v1015, %v1016
      %v1018 = vsel %vm994, %v982, 0.0
      %v1019 = vadd.f32 %v1017, %v1018
      %v1020 = vsel %vm994, %v983, 0.0
      %v1021 = vadd.f32 %v1019, %v1020
      %v1022 = vsel %vm994, %v984, 0.0
      %v1023 = vadd.f32 %v1021, %v1022
      %v1024 = vsel %vm994, %v985, 0.0
      %v1025 = vadd.f32 %v1023, %v1024
      %v1026 = vsel %vm994, %v986, 0.0
      %v1027 = vadd.f32 %v1025, %v1026
      %v1028 = vsel %vm994, %v987, 0.0
      %v1029 = vadd.f32 %v1027, %v1028
      %v1030 = vsel %vm994, %v988, 0.0
      %v1031 = vadd.f32 %v1029, %v1030
      %v1032 = vsel %vm994, %v989, 0.0
      %v1033 = vadd.f32 %v1031, %v1032
      %v1034 = vsel %vm994, %v990, 0.0
      %v1035 = vadd.f32 %v1033, %v1034
      %v1036 = vsel %vm994, %v991, 0.0
      %v1037 = vadd.f32 %v1035, %v1036
      %v1038 = vsel %vm994, %v992, 0.0
      %v1039 = vadd.f32 %v1037, %v1038
      %v1040 = vsel %vm994, %v993, 0.0
      %v1041 = vadd.f32 %v1039, %v1040
      %v1042 = vrot.slane %v1041, 4
      %v1043 = vadd.f32 %v1041, %v1042
      %v1044 = vrot.slane %v1043, 2
      %v1045 = vadd.f32 %v1043, %v1044
      %v1046 = vrot.slane %v1045, 1
      %v1047 = vadd.f32 %v1045, %v1046
      %vm1048 = vcmask 253952
      %1049 = vst.msk [vmem:[%s217] sm:$0x1] %vm1048, %v1047
      %v1050 = vmul.f32 %v978, %v978
      %v1051 = vmul.f32 %v979, %v979
      %v1052 = vmul.f32 %v980, %v980
      %v1053 = vmul.f32 %v981, %v981
      %v1054 = vmul.f32 %v982, %v982
      %v1055 = vmul.f32 %v983, %v983
      %v1056 = vmul.f32 %v984, %v984
      %v1057 = vmul.f32 %v985, %v985
      %v1058 = vmul.f32 %v986, %v986
      %v1059 = vmul.f32 %v987, %v987
      %v1060 = vmul.f32 %v988, %v988
      %v1061 = vmul.f32 %v989, %v989
      %v1062 = vmul.f32 %v990, %v990
      %v1063 = vmul.f32 %v991, %v991
      %v1064 = vmul.f32 %v992, %v992
      %v1065 = vmul.f32 %v993, %v993
      %v1066 = vsel %vm994, %v1050, 0.0
      %v1067 = vsel %vm994, %v1051, 0.0
      %v1068 = vadd.f32 %v1066, %v1067
      %v1069 = vsel %vm994, %v1052, 0.0
      %v1070 = vadd.f32 %v1068, %v1069
      %v1071 = vsel %vm994, %v1053, 0.0
      %v1072 = vadd.f32 %v1070, %v1071
      %v1073 = vsel %vm994, %v1054, 0.0
      %v1074 = vadd.f32 %v1072, %v1073
      %v1075 = vsel %vm994, %v1055, 0.0
      %v1076 = vadd.f32 %v1074, %v1075
      %v1077 = vsel %vm994, %v1056, 0.0
      %v1078 = vadd.f32 %v1076, %v1077
      %v1079 = vsel %vm994, %v1057, 0.0
      %v1080 = vadd.f32 %v1078, %v1079
      %v1081 = vsel %vm994, %v1058, 0.0
      %v1082 = vadd.f32 %v1080, %v1081
      %v1083 = vsel %vm994, %v1059, 0.0
      %v1084 = vadd.f32 %v1082, %v1083
      %v1085 = vsel %vm994, %v1060, 0.0
      %v1086 = vadd.f32 %v1084, %v1085
      %v1087 = vsel %vm994, %v1061, 0.0
      %v1088 = vadd.f32 %v1086, %v1087
      %v1089 = vsel %vm994, %v1062, 0.0
      %v1090 = vadd.f32 %v1088, %v1089
      %v1091 = vsel %vm994, %v1063, 0.0
      %v1092 = vadd.f32 %v1090, %v1091
      %v1093 = vsel %vm994, %v1064, 0.0
      %v1094 = vadd.f32 %v1092, %v1093
      %v1095 = vsel %vm994, %v1065, 0.0
      %v1096 = vadd.f32 %v1094, %v1095
      %v1097 = vrot.slane %v1096, 4
      %v1098 = vadd.f32 %v1096, %v1097
      %v1099 = vrot.slane %v1098, 2
      %v1100 = vadd.f32 %v1098, %v1099
      %v1101 = vrot.slane %v1100, 1
      %v1102 = vadd.f32 %v1100, %v1101
      %1103 = vst.msk [vmem:[%s220] sm:$0x1] %vm1048, %v1102
      %s1104 = smul.u32 16, %s16
      %p1105 = scmp.lt.s32.totalorder %s1104, 63
      %s1106 = scalar_select %p1105, %s1104, 63
      %s1107 = smul.addr %s1106, 8
      %s1108 = scalar_lea.vmem %s2, %s1107
      %p1109 = scmp.lt.s32.totalorder %s16, 3
      %s1110 = scalar_select %p1109, %s16, 3
      %s1111 = scalar_lea.vmem %s3, %s1110
      %p1112 = scmp.lt.s32.totalorder %s16, 3
      %s1113 = scalar_select %p1112, %s16, 3
      %s1114 = scalar_lea.vmem %s4, %s1113
      // Predicated region
      $region29: #{_lambda_.21} parent=27 // pred_check
        %p1115 = pneg %p81
      $region30: #{_lambda_.21} parent=27 // pred_check_branch
        %1117 = sbr.rel (%p1115) target = $region32
      $region31: #{_lambda_.21} parent=27 // pred_region
        %s1118 = smul.u32 16, %s16
      $region32: #{_lambda_.21} parent=27 // pred_fallthru
        _
      // Predicated region
      $region33: #{_lambda_.21} parent=27 // pred_check
        %p1119 = pneg %p107
      $region34: #{_lambda_.21} parent=27 // pred_check_branch
        %1121 = sbr.rel (%p1119) target = $region36
      $region35: #{_lambda_.21} parent=27 // pred_region
        _
      $region36: #{_lambda_.21} parent=27 // pred_fallthru
        _
      // Predicated region
      $region37: #{_lambda_.21} parent=27 // pred_check
        %p1122 = pneg %p133
      $region38: #{_lambda_.21} parent=27 // pred_check_branch
        %1124 = sbr.rel (%p1122) target = $region40
      $region39: #{_lambda_.21} parent=27 // pred_region
        _
      $region40: #{_lambda_.21} parent=27 // pred_fallthru
        _
    $region28: #{_lambda_.21} parent=5 // pred_fallthru
      _
    %p1125 = scmp.le.s32.totalorder 2, %s11
    // Predicated region
    $region41: #{_lambda_.21} parent=5 // pred_check
      %p1126 = pneg %p1125
    $region42: #{_lambda_.21} parent=5 // pred_check_branch
      %1128 = sbr.rel (%p1126) target = $region44
    $region43: #{_lambda_.21} parent=5 // pred_region
      %s1129 = ssub.s32 %s11, 2
      // Predicated region
      $region45: #{_lambda_.21} parent=43 // pred_check
        %p1130 = pneg %p87
      $region46: #{_lambda_.21} parent=43 // pred_check_branch
        %1132 = sbr.rel (%p1130) target = $region48
      $region47: #{_lambda_.21} parent=43 // pred_region
        %s1133 = smul.u32 16, %s17
        %p1134 = scmp.lt.s32.totalorder %s1133, 63
        %s1135 = scalar_select %p1134, %s1133, 63
        %s1136 = smul.addr %s1135, 8
        %s1137 = scalar_lea.vmem %s2, %s1136
      $region48: #{_lambda_.21} parent=43 // pred_fallthru
        _
      // Predicated region
      $region49: #{_lambda_.21} parent=43 // pred_check
        %p1138 = pneg %p113
      $region50: #{_lambda_.21} parent=43 // pred_check_branch
        %1140 = sbr.rel (%p1138) target = $region52
      $region51: #{_lambda_.21} parent=43 // pred_region
        %p1141 = scmp.lt.s32.totalorder %s17, 3
        %s1142 = scalar_select %p1141, %s17, 3
        %s1143 = scalar_lea.vmem %s3, %s1142
      $region52: #{_lambda_.21} parent=43 // pred_fallthru
        _
      // Predicated region
      $region53: #{_lambda_.21} parent=43 // pred_check
        %p1144 = pneg %p139
      $region54: #{_lambda_.21} parent=43 // pred_check_branch
        %1146 = sbr.rel (%p1144) target = $region56
      $region55: #{_lambda_.21} parent=43 // pred_region
        %p1147 = scmp.lt.s32.totalorder %s17, 3
        %s1148 = scalar_select %p1147, %s17, 3
        %s1149 = scalar_lea.vmem %s4, %s1148
      $region56: #{_lambda_.21} parent=43 // pred_fallthru
        _
    $region44: #{_lambda_.21} parent=5 // pred_fallthru
      _
  $region6: #{_lambda_.21} parent=0 // loop_footer
    %s15 = sadd.s32 1, %s11
  $region7: #{_lambda_.21} parent=0 // loop_footer_branch
    %10 = sbr.rel target = $region3
  $region8: #{_lambda_.21} parent=0 // loop_exit
    _

// kernel: _lambda_.24
$region0: #{_lambda_.24}
  #allocation0 [shape = 'u32[]', space=smem, size = 0x4, offset = 0x4, fixed_abs, tag = 'smem constant byte address 0x4 - core index']
  #allocation1 [shape = 'u32[72,128]{1,0:T(1,128)}', space=vmem, size = 0x9000, scoped, tag = 'internal scratch']
  %s0 = inlined_call_operand.vmem [shape: f32[128,128], index: 0, kind: input, shape index: {}]
  %s1 = inlined_call_operand.vmem [shape: f32[4,1,32], index: 1, kind: input, shape index: {}]
  %s2 = inlined_call_operand.vmem [shape: f32[4,1,32], index: 2, kind: input, shape index: {}]
  %s3 = inlined_call_operand.vmem [shape: f32[1,32], index: 3, kind: input, shape index: {}]
  %s4 = inlined_call_operand.vmem [shape: f32[1,32], index: 4, kind: input, shape index: {}]
  %s5 = inlined_call_operand.vmem [shape: f32[32,128], index: 5, kind: input, shape index: {}]
  %s6 = inlined_call_operand.vmem [shape: f32[128,128], index: 6, kind: input, shape index: {}, may-alias: {6,7}]
  %s7 = inlined_call_operand.vmem [shape: f32[128,128], index: 7, kind: output, shape index: {}, may-alias: {6,7}]
  %s8 = sld [smem:[#allocation0]]
  $region61: #{_lambda_.24} parent=0
    _
  %s10 = ssub.s32 1, %s8
  %s11 = scalar_select 0, %s10, %s8
  loop: start=0, step=1, limit=6
  $region2: #{_lambda_.24} parent=0 // loop_pre_header
    _
  $region3: #{_lambda_.24} parent=0 // loop_header
    %s13 = sphi 0, %s17
    %p14 = scmp.ge.s32.totalorder %s13, 6
    %s23 = sphi 0, %s25
    %s26 = sphi 0, %s23
    %s27 = sphi 0, %s26
    %s43 = sphi 0, %s27
    %s47 = sphi 0, %s47
    %s49 = sphi 0, %s47
    %s50 = sphi 0, %s49
    %s64 = sphi 0, %s50
    %s68 = sphi 0, %s68
    %s70 = sphi 0, %s68
    %s71 = sphi 0, %s70
    %s85 = sphi 0, %s71
    %s89 = sphi 0, %s89
    %s91 = sphi 0, %s89
    %s92 = sphi 0, %s91
    %s106 = sphi 0, %s92
    %s110 = sphi 0, %s110
    %s112 = sphi 0, %s110
    %s113 = sphi 0, %s112
    %s127 = sphi 0, %s113
    %s131 = sphi 0, %s131
    %s133 = sphi 0, %s131
    %s134 = sphi 0, %s133
    %s148 = sphi 0, %s134
    %s154 = sphi 0, %s156
    %s157 = sphi 0, %s154
    %s158 = sphi 0, %s157
    %s174 = sphi 0, %s158
    %s180 = sphi 0, %s182
    %s183 = sphi 0, %s180
    %s184 = sphi 0, %s183
    %s200 = sphi 0, %s184
  $region4: #{_lambda_.24} parent=0 // loop_header_branch
    %16 = sbr.rel (%p14) target = $region8
  $region5: #{_lambda_.24} parent=0 // loop_body
    %s18 = ssub.s32 %s13, 1
    %s19 = ssub.s32 %s13, 2
    %s20 = sadd.s32 %s13, 1
    %s21 = ssub.s32 %s13, %s20
    %p22 = scmp.eq.s32.totalorder %s21, 0
    %s24 = sadd.s32 %s23, 1
    %s25 = scalar_select %p22, %s23, %s24
    %p28 = pneg %p22
    %p29 = scmp.eq.s32.totalorder %s13, 3
    %p30 = por %p28, %p29
    %p31 = scmp.ne.s32.totalorder %s23, %s26
    %p32 = scmp.eq.s32.totalorder %s13, 0
    %p33 = por %p31, %p32
    %p34 = scmp.ne.s32.totalorder %s23, %s26
    %p35 = scmp.eq.s32.totalorder %s18, 3
    %p36 = por %p34, %p35
    %p37 = scmp.ne.s32.totalorder %s26, %s27
    %p38 = scmp.eq.s32.totalorder %s18, 0
    %p39 = por %p37, %p38
    %p40 = scmp.ne.s32.totalorder %s26, %s27
    %p41 = scmp.eq.s32.totalorder %s19, 3
    %p42 = por %p40, %p41
    %p44 = scmp.ne.s32.totalorder %s27, %s43
    %p45 = scmp.eq.s32.totalorder %s19, 0
    %p46 = por %p44, %p45
    %s48 = sadd.s32 %s47, 1
    %p51 = scmp.eq.s32.totalorder %s13, 3
    %p52 = scmp.ne.s32.totalorder %s47, %s49
    %p53 = scmp.eq.s32.totalorder %s13, 0
    %p54 = por %p52, %p53
    %p55 = scmp.ne.s32.totalorder %s47, %s49
    %p56 = scmp.eq.s32.totalorder %s18, 3
    %p57 = por %p55, %p56
    %p58 = scmp.ne.s32.totalorder %s49, %s50
    %p59 = scmp.eq.s32.totalorder %s18, 0
    %p60 = por %p58, %p59
    %p61 = scmp.ne.s32.totalorder %s49, %s50
    %p62 = scmp.eq.s32.totalorder %s19, 3
    %p63 = por %p61, %p62
    %p65 = scmp.ne.s32.totalorder %s50, %s64
    %p66 = scmp.eq.s32.totalorder %s19, 0
    %p67 = por %p65, %p66
    %s69 = sadd.s32 %s68, 1
    %p72 = scmp.eq.s32.totalorder %s13, 3
    %p73 = scmp.ne.s32.totalorder %s68, %s70
    %p74 = scmp.eq.s32.totalorder %s13, 0
    %p75 = por %p73, %p74
    %p76 = scmp.ne.s32.totalorder %s68, %s70
    %p77 = scmp.eq.s32.totalorder %s18, 3
    %p78 = por %p76, %p77
    %p79 = scmp.ne.s32.totalorder %s70, %s71
    %p80 = scmp.eq.s32.totalorder %s18, 0
    %p81 = por %p79, %p80
    %p82 = scmp.ne.s32.totalorder %s70, %s71
    %p83 = scmp.eq.s32.totalorder %s19, 3
    %p84 = por %p82, %p83
    %p86 = scmp.ne.s32.totalorder %s71, %s85
    %p87 = scmp.eq.s32.totalorder %s19, 0
    %p88 = por %p86, %p87
    %s90 = sadd.s32 %s89, 1
    %p93 = scmp.eq.s32.totalorder %s13, 3
    %p94 = scmp.ne.s32.totalorder %s89, %s91
    %p95 = scmp.eq.s32.totalorder %s13, 0
    %p96 = por %p94, %p95
    %p97 = scmp.ne.s32.totalorder %s89, %s91
    %p98 = scmp.eq.s32.totalorder %s18, 3
    %p99 = por %p97, %p98
    %p100 = scmp.ne.s32.totalorder %s91, %s92
    %p101 = scmp.eq.s32.totalorder %s18, 0
    %p102 = por %p100, %p101
    %p103 = scmp.ne.s32.totalorder %s91, %s92
    %p104 = scmp.eq.s32.totalorder %s19, 3
    %p105 = por %p103, %p104
    %p107 = scmp.ne.s32.totalorder %s92, %s106
    %p108 = scmp.eq.s32.totalorder %s19, 0
    %p109 = por %p107, %p108
    %s111 = sadd.s32 %s110, 1
    %p114 = scmp.eq.s32.totalorder %s13, 3
    %p115 = scmp.ne.s32.totalorder %s110, %s112
    %p116 = scmp.eq.s32.totalorder %s13, 0
    %p117 = por %p115, %p116
    %p118 = scmp.ne.s32.totalorder %s110, %s112
    %p119 = scmp.eq.s32.totalorder %s18, 3
    %p120 = por %p118, %p119
    %p121 = scmp.ne.s32.totalorder %s112, %s113
    %p122 = scmp.eq.s32.totalorder %s18, 0
    %p123 = por %p121, %p122
    %p124 = scmp.ne.s32.totalorder %s112, %s113
    %p125 = scmp.eq.s32.totalorder %s19, 3
    %p126 = por %p124, %p125
    %p128 = scmp.ne.s32.totalorder %s113, %s127
    %p129 = scmp.eq.s32.totalorder %s19, 0
    %p130 = por %p128, %p129
    %s132 = sadd.s32 %s131, 1
    %p135 = scmp.eq.s32.totalorder %s13, 3
    %p136 = scmp.ne.s32.totalorder %s131, %s133
    %p137 = scmp.eq.s32.totalorder %s13, 0
    %p138 = por %p136, %p137
    %p139 = scmp.ne.s32.totalorder %s131, %s133
    %p140 = scmp.eq.s32.totalorder %s18, 3
    %p141 = por %p139, %p140
    %p142 = scmp.ne.s32.totalorder %s133, %s134
    %p143 = scmp.eq.s32.totalorder %s18, 0
    %p144 = por %p142, %p143
    %p145 = scmp.ne.s32.totalorder %s133, %s134
    %p146 = scmp.eq.s32.totalorder %s19, 3
    %p147 = por %p145, %p146
    %p149 = scmp.ne.s32.totalorder %s134, %s148
    %p150 = scmp.eq.s32.totalorder %s19, 0
    %p151 = por %p149, %p150
    %s152 = ssub.s32 %s13, %s20
    %p153 = scmp.eq.s32.totalorder %s152, 0
    %s155 = sadd.s32 %s154, 1
    %s156 = scalar_select %p153, %s154, %s155
    %p159 = pneg %p153
    %p160 = scmp.eq.s32.totalorder %s13, 3
    %p161 = por %p159, %p160
    %p162 = scmp.ne.s32.totalorder %s154, %s157
    %p163 = scmp.eq.s32.totalorder %s13, 0
    %p164 = por %p162, %p163
    %p165 = scmp.ne.s32.totalorder %s154, %s157
    %p166 = scmp.eq.s32.totalorder %s18, 3
    %p167 = por %p165, %p166
    %p168 = scmp.ne.s32.totalorder %s157, %s158
    %p169 = scmp.eq.s32.totalorder %s18, 0
    %p170 = por %p168, %p169
    %p171 = scmp.ne.s32.totalorder %s157, %s158
    %p172 = scmp.eq.s32.totalorder %s19, 3
    %p173 = por %p171, %p172
    %p175 = scmp.ne.s32.totalorder %s158, %s174
    %p176 = scmp.eq.s32.totalorder %s19, 0
    %p177 = por %p175, %p176
    %s178 = ssub.s32 %s13, %s20
    %p179 = scmp.eq.s32.totalorder %s178, 0
    %s181 = sadd.s32 %s180, 1
    %s182 = scalar_select %p179, %s180, %s181
    %p185 = pneg %p179
    %p186 = scmp.eq.s32.totalorder %s13, 3
    %p187 = por %p185, %p186
    %p188 = scmp.ne.s32.totalorder %s180, %s183
    %p189 = scmp.eq.s32.totalorder %s13, 0
    %p190 = por %p188, %p189
    %p191 = scmp.ne.s32.totalorder %s180, %s183
    %p192 = scmp.eq.s32.totalorder %s18, 3
    %p193 = por %p191, %p192
    %p194 = scmp.ne.s32.totalorder %s183, %s184
    %p195 = scmp.eq.s32.totalorder %s18, 0
    %p196 = por %p194, %p195
    %p197 = scmp.ne.s32.totalorder %s183, %s184
    %p198 = scmp.eq.s32.totalorder %s19, 3
    %p199 = por %p197, %p198
    %p201 = scmp.ne.s32.totalorder %s184, %s200
    %p202 = scmp.eq.s32.totalorder %s19, 0
    %p203 = por %p201, %p202
    %p204 = scmp.le.s32.totalorder 1, %s13
    %p205 = scmp.lt.s32.totalorder %s13, 5
    %p206 = pnand %p204, %p205
    %p207 = pneg %p206
    // Predicated region
    $region9: #{_lambda_.24} parent=5 // pred_check
      _
    $region10: #{_lambda_.24} parent=5 // pred_check_branch
      %209 = sbr.rel (%p206) target = $region12
    $region11: #{_lambda_.24} parent=5 // pred_region
      %s210 = ssub.s32 %s13, 1
      // Predicated region
      $region13: #{_lambda_.24} parent=11 // pred_check
        %p211 = pneg %p60
      $region14: #{_lambda_.24} parent=11 // pred_check_branch
        %213 = sbr.rel (%p211) target = $region16
      $region15: #{_lambda_.24} parent=11 // pred_region
        _
      $region16: #{_lambda_.24} parent=11 // pred_fallthru
        _
      // Predicated region
      $region17: #{_lambda_.24} parent=11 // pred_check
        %p214 = pneg %p81
      $region18: #{_lambda_.24} parent=11 // pred_check_branch
        %216 = sbr.rel (%p214) target = $region20
      $region19: #{_lambda_.24} parent=11 // pred_region
        _
      $region20: #{_lambda_.24} parent=11 // pred_fallthru
        _
      // Predicated region
      $region21: #{_lambda_.24} parent=11 // pred_check
        %p217 = pneg %p102
      $region22: #{_lambda_.24} parent=11 // pred_check_branch
        %219 = sbr.rel (%p217) target = $region24
      $region23: #{_lambda_.24} parent=11 // pred_region
        _
      $region24: #{_lambda_.24} parent=11 // pred_fallthru
        _
      // Predicated region
      $region25: #{_lambda_.24} parent=11 // pred_check
        %p220 = pneg %p123
      $region26: #{_lambda_.24} parent=11 // pred_check_branch
        %222 = sbr.rel (%p220) target = $region28
      $region27: #{_lambda_.24} parent=11 // pred_region
        _
      $region28: #{_lambda_.24} parent=11 // pred_fallthru
        _
      // Predicated region
      $region29: #{_lambda_.24} parent=11 // pred_check
        %p223 = pneg %p144
      $region30: #{_lambda_.24} parent=11 // pred_check_branch
        %225 = sbr.rel (%p223) target = $region32
      $region31: #{_lambda_.24} parent=11 // pred_region
        _
      $region32: #{_lambda_.24} parent=11 // pred_fallthru
        _
    $region12: #{_lambda_.24} parent=5 // pred_fallthru
      _
    %p226 = scmp.lt.s32.totalorder %s13, 4
    // Predicated region
    $region33: #{_lambda_.24} parent=5 // pred_check
      %p227 = pneg %p226
    $region34: #{_lambda_.24} parent=5 // pred_check_branch
      %229 = sbr.rel (%p227) target = $region36
    $region35: #{_lambda_.24} parent=5 // pred_region
      // Predicated region
      $region37: #{_lambda_.24} parent=35 // pred_check
        %p230 = pneg %p33
      $region38: #{_lambda_.24} parent=35 // pred_check_branch
        %232 = sbr.rel (%p230) target = $region40
      $region39: #{_lambda_.24} parent=35 // pred_region
        %s233 = smul.u32 4, %s13
        %p234 = scmp.lt.s32.totalorder %s233, 15
        %s235 = scalar_select %p234, %s233, 15
        %s236 = smul.addr %s235, 8
        %s237 = scalar_lea.vmem %s0, %s236
        %s238 = smul.u32 4, %s13
      $region40: #{_lambda_.24} parent=35 // pred_fallthru
        _
      // Predicated region
      $region41: #{_lambda_.24} parent=35 // pred_check
        %p239 = pneg %p164
      $region42: #{_lambda_.24} parent=35 // pred_check_branch
        %241 = sbr.rel (%p239) target = $region44
      $region43: #{_lambda_.24} parent=35 // pred_region
        %s242 = smul.u32 4, %s13
        %p243 = scmp.lt.s32.totalorder %s242, 15
        %s244 = scalar_select %p243, %s242, 15
        %s245 = smul.addr %s244, 8
        %s246 = scalar_lea.vmem %s6, %s245
        %s247 = smul.u32 4, %s13
      $region44: #{_lambda_.24} parent=35 // pred_fallthru
        _
    $region36: #{_lambda_.24} parent=5 // pred_fallthru
      _
    %p248 = scmp.le.s32.totalorder 1, %s13
    %p249 = scmp.lt.s32.totalorder %s13, 5
    %p250 = pnand %p248, %p249
    %p251 = pneg %p250
    // Predicated region
    $region45: #{_lambda_.24} parent=5 // pred_check
      _
    $region46: #{_lambda_.24} parent=5 // pred_check_branch
      %253 = sbr.rel (%p250) target = $region48
    $region47: #{_lambda_.24} parent=5 // pred_region
      %s254 = ssub.s32 %s13, 1
      %s255 = smul.u32 4, %s18
      %p256 = scmp.lt.s32.totalorder %s255, 15
      %s257 = scalar_select %p256, %s255, 15
      %s258 = smul.addr %s257, 8
      %s259 = scalar_lea.vmem %s0, %s258
      %p260 = pneg %p39
      %p261 = pneg %p36
      %p262 = pneg %p60
      %p263 = pneg %p57
      %p264 = pneg %p81
      %p265 = pneg %p78
      %p266 = pneg %p102
      %p267 = pneg %p99
      %p268 = pneg %p123
      %p269 = pneg %p120
      %p270 = pneg %p144
      %p271 = pneg %p141
      %s272 = smul.u32 4, %s18
      %p273 = scmp.lt.s32.totalorder %s272, 15
      %s274 = scalar_select %p273, %s272, 15
      %s275 = smul.addr %s274, 8
      %s276 = scalar_lea.vmem %s6, %s275
      %p277 = pneg %p170
      %p278 = pneg %p167
      %p279 = pneg %p196
      %p280 = pneg %p193
      %s281 = smul.u32 4, %s18
      %p282 = scmp.lt.s32.totalorder %s281, 15
      %s283 = scalar_select %p282, %s281, 15
      %s284 = smul.addr %s283, 8
      %s285 = scalar_lea.vmem %s7, %s284
      %s286 = smul.u32 4, %s18
      %p287 = scmp.lt.s32.totalorder %s286, 15
      %s288 = scalar_select %p287, %s286, 15
      %s289 = smul.addr %s288, 8
      %s290 = scalar_lea.vmem %s0, %s289
      %s291 = smul.u32 4, %s18
      %s292 = smul.u32 4, %s18
      %p293 = scmp.lt.s32.totalorder %s292, 15
      %s294 = scalar_select %p293, %s292, 15
      %s295 = smul.addr %s294, 8
      %s296 = scalar_lea.vmem %s6, %s295
      %s297 = smul.u32 4, %s18
      %s298 = smul.u32 4, %s18
      %p299 = scmp.lt.s32.totalorder %s298, 15
      %s300 = scalar_select %p299, %s298, 15
      %s301 = smul.addr %s300, 8
      %s302 = scalar_lea.vmem %s7, %s301
      %s303 = smul.u32 4, %s18
      %v304 = vld [vmem:[%s1] sm:$0x1]
      %v305 = vld [vmem:[%s1 + $0x1] sm:$0x1]
      %v306 = vld [vmem:[%s1 + $0x2] sm:$0x1]
      %v307 = vld [vmem:[%s1 + $0x3] sm:$0x1]
      %vm308 = vcmask 253952
      %v309 = vsel %vm308, %v304, 0.0
      %v310 = vsel %vm308, %v305, 0.0
      %v311 = vadd.f32 %v309, %v310
      %v312 = vsel %vm308, %v306, 0.0
      %v313 = vadd.f32 %v311, %v312
      %v314 = vsel %vm308, %v307, 0.0
      %v315 = vadd.f32 %v313, %v314
      %v316 = vmul.f32 %v315, 0.001953125
      %v317 = vld [vmem:[%s2] sm:$0x1]
      %v318 = vld [vmem:[%s2 + $0x1] sm:$0x1]
      %v319 = vld [vmem:[%s2 + $0x2] sm:$0x1]
      %v320 = vld [vmem:[%s2 + $0x3] sm:$0x1]
      %v321 = vsel %vm308, %v317, 0.0
      %v322 = vsel %vm308, %v318, 0.0
      %v323 = vadd.f32 %v321, %v322
      %v324 = vsel %vm308, %v319, 0.0
      %v325 = vadd.f32 %v323, %v324
      %v326 = vsel %vm308, %v320, 0.0
      %v327 = vadd.f32 %v325, %v326
      %v328 = vmul.f32 %v327, 0.001953125
      %v329 = vmul.f32 %v316, %v316
      %v330 = vsub.f32 %v328, %v329
      %v331 = vmax.f32 %v330, 0.0
      %v332 = vadd.f32 %v331, 1e-05
      %v333 = vrsqrt.pop %v332
      %v334 = vmul.f32 %v333, %v332
      %v335 = vmul.f32 %v334, %v333
      %v336 = vmul.f32 0.5, %v335
      %v337 = vsub.f32 1.5, %v336
      %v338 = vmul.f32 %v333, %v337
      %vm339 = vweird.f32 %v332
      %vm340 = vweird.f32 %v333
      %vm341 = vmor %vm339, %vm340
      %v342 = vsel %vm341, %v333, %v338
      %v343 = vld [vmem:[%s3] sm:$0x1]
      %v344 = vmul.f32 %v343, %v342
      %v345 = vld [vmem:[%s4] sm:$0x1]
      %v346 = vmul.f32 %v316, %v344
      %v347 = vsub.f32 %v345, %v346
      %v349 = vperm.slane %v344, 0
      %v351 = vperm.slane %v347, 0
      %v352 = vld [vmem:[%s5] sm:$0xff]
      %v353 = vld [vmem:[%s5 + $0x8] sm:$0xff]
      %v354 = vld [vmem:[%s5 + $0x10] sm:$0xff]
      %v355 = vld [vmem:[%s5 + $0x18] sm:$0xff]
      %vm356 = vcmask 261120
      %v357 = vsel %vm356, %v349, 0
      %359 = vmatpush.msra.mxu0 0.0
      %360 = vmatpush.msra.mxu0 0.0
      %361 = vmatpush.msra.mxu0 0.0
      %362 = vmatpush.msra.mxu0 0.0
      %363 = vmatpush.msra.mxu0 0.0
      %364 = vmatpush.msra.mxu0 0.0
      %365 = vmatpush.msra.mxu0 0.0
      %366 = vmatpush.msra.mxu0 0.0
      %367 = vmatpush.msra.mxu0 0.0
      %368 = vmatpush.msra.mxu0 0.0
      %369 = vmatpush.msra.mxu0 0.0
      %370 = vmatpush.msra.mxu0 0.0
      %371 = vmatpush.msra.mxu0 %v355
      %372 = vmatpush.msra.mxu0 %v354
      %373 = vmatpush.msra.mxu0 %v353
      %374 = vmatpush.msra.mxu0 %v352
      %375 = vmatmul.f32.gmra.mxu0 %v357
      %v376 = vpop.f32.mrf.mxu0
      %v377 = vadd.f32 0.0, %v376
      %378 = vdwg.mxu0
      %v379 = vsel %vm356, %v351, 0
      %381 = vmatpush.msra.mxu0 0.0
      %382 = vmatpush.msra.mxu0 0.0
      %383 = vmatpush.msra.mxu0 0.0
      %384 = vmatpush.msra.mxu0 0.0
      %385 = vmatpush.msra.mxu0 0.0
      %386 = vmatpush.msra.mxu0 0.0
      %387 = vmatpush.msra.mxu0 0.0
      %388 = vmatpush.msra.mxu0 0.0
      %389 = vmatpush.msra.mxu0 0.0
      %390 = vmatpush.msra.mxu0 0.0
      %391 = vmatpush.msra.mxu0 0.0
      %392 = vmatpush.msra.mxu0 0.0
      %393 = vmatpush.msra.mxu0 %v355
      %394 = vmatpush.msra.mxu0 %v354
      %395 = vmatpush.msra.mxu0 %v353
      %396 = vmatpush.msra.mxu0 %v352
      %397 = vmatmul.f32.gmra.mxu0 %v379
      %v398 = vpop.f32.mrf.mxu0
      %v399 = vadd.f32 0.0, %v398
      %400 = vdwg.mxu0
      %v401 = vld [vmem:[%s290] sm:$0xff]
      %v402 = vld [vmem:[%s290 + $0x8] sm:$0xff]
      %v403 = vld [vmem:[%s290 + $0x10] sm:$0xff]
      %v404 = vld [vmem:[%s290 + $0x18] sm:$0xff]
      %v405 = vperm.slane %v377, 0
      %v406 = vmul.f32 %v401, %v405
      %v407 = vmul.f32 %v402, %v405
      %v408 = vmul.f32 %v403, %v405
      %v409 = vmul.f32 %v404, %v405
      %v410 = vperm.slane %v399, 0
      %v411 = vadd.f32 %v406, %v410
      %v412 = vadd.f32 %v407, %v410
      %v413 = vadd.f32 %v408, %v410
      %v414 = vadd.f32 %v409, %v410
      %v415 = vld [vmem:[%s296] sm:$0xff]
      %v416 = vld [vmem:[%s296 + $0x8] sm:$0xff]
      %v417 = vld [vmem:[%s296 + $0x10] sm:$0xff]
      %v418 = vld [vmem:[%s296 + $0x18] sm:$0xff]
      %v419 = vadd.f32 %v411, %v415
      %v420 = vadd.f32 %v412, %v416
      %v421 = vadd.f32 %v413, %v417
      %v422 = vadd.f32 %v414, %v418
      %423 = vst [vmem:[%s302] sm:$0xff] %v419
      %424 = vst [vmem:[%s302 + $0x8] sm:$0xff] %v420
      %425 = vst [vmem:[%s302 + $0x10] sm:$0xff] %v421
      %426 = vst [vmem:[%s302 + $0x18] sm:$0xff] %v422
      %s427 = smul.u32 4, %s18
      %p428 = scmp.lt.s32.totalorder %s427, 15
      %s429 = scalar_select %p428, %s427, 15
      %s430 = smul.addr %s429, 8
      %s431 = scalar_lea.vmem %s7, %s430
      // Predicated region
      $region49: #{_lambda_.24} parent=47 // pred_check
        %p432 = pneg %p193
      $region50: #{_lambda_.24} parent=47 // pred_check_branch
        %434 = sbr.rel (%p432) target = $region52
      $region51: #{_lambda_.24} parent=47 // pred_region
        %s435 = smul.u32 4, %s18
      $region52: #{_lambda_.24} parent=47 // pred_fallthru
        _
    $region48: #{_lambda_.24} parent=5 // pred_fallthru
      _
    %p436 = scmp.le.s32.totalorder 2, %s13
    // Predicated region
    $region53: #{_lambda_.24} parent=5 // pred_check
      %p437 = pneg %p436
    $region54: #{_lambda_.24} parent=5 // pred_check_branch
      %439 = sbr.rel (%p437) target = $region56
    $region55: #{_lambda_.24} parent=5 // pred_region
      %s440 = ssub.s32 %s13, 2
      // Predicated region
      $region57: #{_lambda_.24} parent=55 // pred_check
        %p441 = pneg %p199
      $region58: #{_lambda_.24} parent=55 // pred_check_branch
        %443 = sbr.rel (%p441) target = $region60
      $region59: #{_lambda_.24} parent=55 // pred_region
        %s444 = smul.u32 4, %s19
        %p445 = scmp.lt.s32.totalorder %s444, 15
        %s446 = scalar_select %p445, %s444, 15
        %s447 = smul.addr %s446, 8
        %s448 = scalar_lea.vmem %s7, %s447
      $region60: #{_lambda_.24} parent=55 // pred_fallthru
        _
    $region56: #{_lambda_.24} parent=5 // pred_fallthru
      _
  $region6: #{_lambda_.24} parent=0 // loop_footer
    %s17 = sadd.s32 1, %s13
  $region7: #{_lambda_.24} parent=0 // loop_footer_branch
    %12 = sbr.rel target = $region3
  $region8: #{_lambda_.24} parent=0 // loop_exit
    _

// kernel: _lambda_.39
$region0: #{_lambda_.39}
  #allocation0 [shape = 'u32[]', space=smem, size = 0x4, offset = 0x4, fixed_abs, tag = 'smem constant byte address 0x4 - core index']
  #allocation1 [shape = 'u32[72,128]{1,0:T(1,128)}', space=vmem, size = 0x9000, scoped, tag = 'internal scratch']
  %s0 = inlined_call_operand.vmem [shape: bf16[32,18,96], index: 0, kind: input, shape index: {}]
  %s1 = inlined_call_operand.vmem [shape: bf16[3,96,3], index: 1, kind: input, shape index: {}]
  %s2 = inlined_call_operand.vmem [shape: f32[1,3], index: 2, kind: input, shape index: {}]
  %s3 = inlined_call_operand.vmem [shape: f32[512,3], index: 3, kind: output, shape index: {}]
  %s4 = sld [smem:[#allocation0]]
  $region45: #{_lambda_.39} parent=0
    _
  %s6 = ssub.s32 1, %s4
  %s7 = scalar_select 0, %s6, %s4
  loop: start=0, step=1, limit=6
  $region2: #{_lambda_.39} parent=0 // loop_pre_header
    _
  $region3: #{_lambda_.39} parent=0 // loop_header
    %s9 = sphi 0, %s13
    %p10 = scmp.ge.s32.totalorder %s9, 6
    %s19 = sphi 0, %s21
    %s22 = sphi 0, %s19
    %s23 = sphi 0, %s22
    %s39 = sphi 0, %s23
    %s43 = sphi 0, %s43
    %s45 = sphi 0, %s43
    %s46 = sphi 0, %s45
    %s60 = sphi 0, %s46
    %s64 = sphi 0, %s64
    %s66 = sphi 0, %s64
    %s67 = sphi 0, %s66
    %s81 = sphi 0, %s67
    %s87 = sphi 0, %s89
    %s90 = sphi 0, %s87
    %s91 = sphi 0, %s90
    %s107 = sphi 0, %s91
  $region4: #{_lambda_.39} parent=0 // loop_header_branch
    %12 = sbr.rel (%p10) target = $region8
  $region5: #{_lambda_.39} parent=0 // loop_body
    %s14 = ssub.s32 %s9, 1
    %s15 = ssub.s32 %s9, 2
    %s16 = sadd.s32 %s9, 1
    %s17 = ssub.s32 %s9, %s16
    %p18 = scmp.eq.s32.totalorder %s17, 0
    %s20 = sadd.s32 %s19, 1
    %s21 = scalar_select %p18, %s19, %s20
    %p24 = pneg %p18
    %p25 = scmp.eq.s32.totalorder %s9, 3
    %p26 = por %p24, %p25
    %p27 = scmp.ne.s32.totalorder %s19, %s22
    %p28 = scmp.eq.s32.totalorder %s9, 0
    %p29 = por %p27, %p28
    %p30 = scmp.ne.s32.totalorder %s19, %s22
    %p31 = scmp.eq.s32.totalorder %s14, 3
    %p32 = por %p30, %p31
    %p33 = scmp.ne.s32.totalorder %s22, %s23
    %p34 = scmp.eq.s32.totalorder %s14, 0
    %p35 = por %p33, %p34
    %p36 = scmp.ne.s32.totalorder %s22, %s23
    %p37 = scmp.eq.s32.totalorder %s15, 3
    %p38 = por %p36, %p37
    %p40 = scmp.ne.s32.totalorder %s23, %s39
    %p41 = scmp.eq.s32.totalorder %s15, 0
    %p42 = por %p40, %p41
    %s44 = sadd.s32 %s43, 1
    %p47 = scmp.eq.s32.totalorder %s9, 3
    %p48 = scmp.ne.s32.totalorder %s43, %s45
    %p49 = scmp.eq.s32.totalorder %s9, 0
    %p50 = por %p48, %p49
    %p51 = scmp.ne.s32.totalorder %s43, %s45
    %p52 = scmp.eq.s32.totalorder %s14, 3
    %p53 = por %p51, %p52
    %p54 = scmp.ne.s32.totalorder %s45, %s46
    %p55 = scmp.eq.s32.totalorder %s14, 0
    %p56 = por %p54, %p55
    %p57 = scmp.ne.s32.totalorder %s45, %s46
    %p58 = scmp.eq.s32.totalorder %s15, 3
    %p59 = por %p57, %p58
    %p61 = scmp.ne.s32.totalorder %s46, %s60
    %p62 = scmp.eq.s32.totalorder %s15, 0
    %p63 = por %p61, %p62
    %s65 = sadd.s32 %s64, 1
    %p68 = scmp.eq.s32.totalorder %s9, 3
    %p69 = scmp.ne.s32.totalorder %s64, %s66
    %p70 = scmp.eq.s32.totalorder %s9, 0
    %p71 = por %p69, %p70
    %p72 = scmp.ne.s32.totalorder %s64, %s66
    %p73 = scmp.eq.s32.totalorder %s14, 3
    %p74 = por %p72, %p73
    %p75 = scmp.ne.s32.totalorder %s66, %s67
    %p76 = scmp.eq.s32.totalorder %s14, 0
    %p77 = por %p75, %p76
    %p78 = scmp.ne.s32.totalorder %s66, %s67
    %p79 = scmp.eq.s32.totalorder %s15, 3
    %p80 = por %p78, %p79
    %p82 = scmp.ne.s32.totalorder %s67, %s81
    %p83 = scmp.eq.s32.totalorder %s15, 0
    %p84 = por %p82, %p83
    %s85 = ssub.s32 %s9, %s16
    %p86 = scmp.eq.s32.totalorder %s85, 0
    %s88 = sadd.s32 %s87, 1
    %s89 = scalar_select %p86, %s87, %s88
    %p92 = pneg %p86
    %p93 = scmp.eq.s32.totalorder %s9, 3
    %p94 = por %p92, %p93
    %p95 = scmp.ne.s32.totalorder %s87, %s90
    %p96 = scmp.eq.s32.totalorder %s9, 0
    %p97 = por %p95, %p96
    %p98 = scmp.ne.s32.totalorder %s87, %s90
    %p99 = scmp.eq.s32.totalorder %s14, 3
    %p100 = por %p98, %p99
    %p101 = scmp.ne.s32.totalorder %s90, %s91
    %p102 = scmp.eq.s32.totalorder %s14, 0
    %p103 = por %p101, %p102
    %p104 = scmp.ne.s32.totalorder %s90, %s91
    %p105 = scmp.eq.s32.totalorder %s15, 3
    %p106 = por %p104, %p105
    %p108 = scmp.ne.s32.totalorder %s91, %s107
    %p109 = scmp.eq.s32.totalorder %s15, 0
    %p110 = por %p108, %p109
    %p111 = scmp.le.s32.totalorder 1, %s9
    %p112 = scmp.lt.s32.totalorder %s9, 5
    %p113 = pnand %p111, %p112
    %p114 = pneg %p113
    // Predicated region
    $region9: #{_lambda_.39} parent=5 // pred_check
      _
    $region10: #{_lambda_.39} parent=5 // pred_check_branch
      %116 = sbr.rel (%p113) target = $region12
    $region11: #{_lambda_.39} parent=5 // pred_region
      %s117 = ssub.s32 %s9, 1
      // Predicated region
      $region13: #{_lambda_.39} parent=11 // pred_check
        %p118 = pneg %p56
      $region14: #{_lambda_.39} parent=11 // pred_check_branch
        %120 = sbr.rel (%p118) target = $region16
      $region15: #{_lambda_.39} parent=11 // pred_region
        _
      $region16: #{_lambda_.39} parent=11 // pred_fallthru
        _
      // Predicated region
      $region17: #{_lambda_.39} parent=11 // pred_check
        %p121 = pneg %p77
      $region18: #{_lambda_.39} parent=11 // pred_check_branch
        %123 = sbr.rel (%p121) target = $region20
      $region19: #{_lambda_.39} parent=11 // pred_region
        _
      $region20: #{_lambda_.39} parent=11 // pred_fallthru
        _
    $region12: #{_lambda_.39} parent=5 // pred_fallthru
      _
    %p124 = scmp.lt.s32.totalorder %s9, 4
    // Predicated region
    $region21: #{_lambda_.39} parent=5 // pred_check
      %p125 = pneg %p124
    $region22: #{_lambda_.39} parent=5 // pred_check_branch
      %127 = sbr.rel (%p125) target = $region24
    $region23: #{_lambda_.39} parent=5 // pred_region
      // Predicated region
      $region25: #{_lambda_.39} parent=23 // pred_check
        %p128 = pneg %p29
      $region26: #{_lambda_.39} parent=23 // pred_check_branch
        %130 = sbr.rel (%p128) target = $region28
      $region27: #{_lambda_.39} parent=23 // pred_region
        %s131 = smul.u32 8, %s9
        %p132 = scmp.lt.s32.totalorder %s131, 31
        %s133 = scalar_select %p132, %s131, 31
        %s134 = smul.addr %s133, 3
        %s135 = smul.addr %s134, 4
        %s136 = scalar_lea.vmem %s0, %s135
        %s137 = smul.u32 8, %s9
      $region28: #{_lambda_.39} parent=23 // pred_fallthru
        _
    $region24: #{_lambda_.39} parent=5 // pred_fallthru
      _
    %p138 = scmp.le.s32.totalorder 1, %s9
    %p139 = scmp.lt.s32.totalorder %s9, 5
    %p140 = pnand %p138, %p139
    %p141 = pneg %p140
    // Predicated region
    $region29: #{_lambda_.39} parent=5 // pred_check
      _
    $region30: #{_lambda_.39} parent=5 // pred_check_branch
      %143 = sbr.rel (%p140) target = $region32
    $region31: #{_lambda_.39} parent=5 // pred_region
      %s144 = ssub.s32 %s9, 1
      %s145 = smul.u32 8, %s14
      %p146 = scmp.lt.s32.totalorder %s145, 31
      %s147 = scalar_select %p146, %s145, 31
      %s148 = smul.addr %s147, 3
      %s149 = smul.addr %s148, 4
      %s150 = scalar_lea.vmem %s0, %s149
      %p151 = pneg %p35
      %p152 = pneg %p32
      %p153 = pneg %p56
      %p154 = pneg %p53
      %p155 = pneg %p77
      %p156 = pneg %p74
      %p157 = pneg %p103
      %p158 = pneg %p100
      %s159 = smul.u32 16, %s14
      %p160 = scmp.lt.s32.totalorder %s159, 63
      %s161 = scalar_select %p160, %s159, 63
      %s162 = smul.addr %s161, 8
      %s163 = scalar_lea.vmem %s3, %s162
      %s164 = smul.u32 8, %s14
      %p165 = scmp.lt.s32.totalorder %s164, 31
      %s166 = scalar_select %p165, %s164, 31
      %s167 = smul.addr %s166, 3
      %s168 = smul.addr %s167, 4
      %s169 = scalar_lea.vmem %s0, %s168
      %s170 = smul.u32 8, %s14
      %s171 = smul.u32 16, %s14
      %p172 = scmp.lt.s32.totalorder %s171, 63
      %s173 = scalar_select %p172, %s171, 63
      %s174 = smul.addr %s173, 8
      %s175 = scalar_lea.vmem %s3, %s174
      %s176 = smul.u32 16, %s14
      %v178 = vld [vmem:[%s169] sm:$0xf]
      %v179 = vld [vmem:[%s169 + $0x4] sm:$0xf]
      %v180 = vld [vmem:[%s169 + $0xc] sm:$0xf]
      %v181 = vld [vmem:[%s169 + $0x10] sm:$0xf]
      %v182 = vld [vmem:[%s169 + $0x18] sm:$0xf]
      %v183 = vld [vmem:[%s169 + $0x1c] sm:$0xf]
      %v184 = vld [vmem:[%s169 + $0x24] sm:$0xf]
      %v185 = vld [vmem:[%s169 + $0x28] sm:$0xf]
      %v186 = vld [vmem:[%s169 + $0x30] sm:$0xf]
      %v187 = vld [vmem:[%s169 + $0x34] sm:$0xf]
      %v188 = vld [vmem:[%s169 + $0x3c] sm:$0xf]
      %v189 = vld [vmem:[%s169 + $0x40] sm:$0xf]
      %v190 = vld [vmem:[%s169 + $0x48] sm:$0xf]
      %v191 = vld [vmem:[%s169 + $0x4c] sm:$0xf]
      %v192 = vld [vmem:[%s169 + $0x54] sm:$0xf]
      %v193 = vld [vmem:[%s169 + $0x58] sm:$0xf]
      %v194 = vld [vmem:[%s1] sm:$0xf]
      %v195 = vld [vmem:[%s1 + $0x4] sm:$0xf]
      %v196 = vld [vmem:[%s1 + $0x8] sm:$0xf]
      %v197 = vld [vmem:[%s1 + $0xc] sm:$0xf]
      %v198 = vld [vmem:[%s1 + $0x10] sm:$0xf]
      %v199 = vld [vmem:[%s1 + $0x14] sm:$0xf]
      %v200 = vld [vmem:[%s1 + $0x18] sm:$0xf]
      %v201 = vld [vmem:[%s1 + $0x1c] sm:$0xf]
      %v202 = vld [vmem:[%s1 + $0x20] sm:$0xf]
      %v203 = vld [vmem:[%s1 + $0x24] sm:$0xf]
      %v204 = vld [vmem:[%s1 + $0x28] sm:$0xf]
      %v205 = vld [vmem:[%s1 + $0x2c] sm:$0xf]
      %v206 = vld [vmem:[%s169 + $0x8] sm:$0x1]
      %v207 = vld [vmem:[%s169 + $0x14] sm:$0x1]
      %v208 = vld [vmem:[%s169 + $0x20] sm:$0x1]
      %v209 = vld [vmem:[%s169 + $0x2c] sm:$0x1]
      %v210 = vld [vmem:[%s169 + $0x38] sm:$0x1]
      %v211 = vld [vmem:[%s169 + $0x44] sm:$0x1]
      %v212 = vld [vmem:[%s169 + $0x50] sm:$0x1]
      %v213 = vld [vmem:[%s169 + $0x5c] sm:$0x1]
      %vm214 = vsmask.f32 3328
      %vm215 = vsmask.f32 7440
      %vm216 = vmor %vm214, %vm215
      %v218 = vshrl.u32 %v178, 16
      %v220 = vrot.slane %v218, 4
      %v221 = vshll.u32 %v178, 16
      %v223 = vrot.slane %v221, 5
      %v224 = vor.u32 %v220, %v223
      %v225 = vrot.slane %v224, 4
      %v227 = vshll.u32 %v179, 16
      %v229 = vrot.slane %v227, 5
      %v230 = vsel %vm216, %v225, %v229
      %v231 = vshrl.u32 %v179, 16
      %v233 = vrot.slane %v231, 4
      %v234 = vor.u32 %v233, %v229
      %v235 = vrot.slane %v234, 4
      %v237 = vshll.u32 %v206, 16
      %v239 = vrot.slane %v237, 5
      %v240 = vsel %vm216, %v235, %v239
      %v242 = vshrl.u32 %v180, 16
      %v244 = vrot.slane %v242, 4
      %v245 = vshll.u32 %v180, 16
      %v247 = vrot.slane %v245, 5
      %v248 = vor.u32 %v244, %v247
      %v249 = vrot.slane %v248, 4
      %v251 = vshll.u32 %v181, 16
      %v253 = vrot.slane %v251, 5
      %v254 = vsel %vm216, %v249, %v253
      %v255 = vshrl.u32 %v181, 16
      %v257 = vrot.slane %v255, 4
      %v258 = vor.u32 %v257, %v253
      %v259 = vrot.slane %v258, 4
      %v261 = vshll.u32 %v207, 16
      %v263 = vrot.slane %v261, 5
      %v264 = vsel %vm216, %v259, %v263
      %v266 = vshrl.u32 %v182, 16
      %v268 = vrot.slane %v266, 4
      %v269 = vshll.u32 %v182, 16
      %v271 = vrot.slane %v269, 5
      %v272 = vor.u32 %v268, %v271
      %v273 = vrot.slane %v272, 4
      %v275 = vshll.u32 %v183, 16
      %v277 = vrot.slane %v275, 5
      %v278 = vsel %vm216, %v273, %v277
      %v279 = vshrl.u32 %v183, 16
      %v281 = vrot.slane %v279, 4
      %v282 = vor.u32 %v281, %v277
      %v283 = vrot.slane %v282, 4
      %v285 = vshll.u32 %v208, 16
      %v287 = vrot.slane %v285, 5
      %v288 = vsel %vm216, %v283, %v287
      %v290 = vshrl.u32 %v184, 16
      %v292 = vrot.slane %v290, 4
      %v293 = vshll.u32 %v184, 16
      %v295 = vrot.slane %v293, 5
      %v296 = vor.u32 %v292, %v295
      %v297 = vrot.slane %v296, 4
      %v299 = vshll.u32 %v185, 16
      %v301 = vrot.slane %v299, 5
      %v302 = vsel %vm216, %v297, %v301
      %v303 = vshrl.u32 %v185, 16
      %v305 = vrot.slane %v303, 4
      %v306 = vor.u32 %v305, %v301
      %v307 = vrot.slane %v306, 4
      %v309 = vshll.u32 %v209, 16
      %v311 = vrot.slane %v309, 5
      %v312 = vsel %vm216, %v307, %v311
      %v314 = vshrl.u32 %v186, 16
      %v316 = vrot.slane %v314, 4
      %v317 = vshll.u32 %v186, 16
      %v319 = vrot.slane %v317, 5
      %v320 = vor.u32 %v316, %v319
      %v321 = vrot.slane %v320, 4
      %v323 = vshll.u32 %v187, 16
      %v325 = vrot.slane %v323, 5
      %v326 = vsel %vm216, %v321, %v325
      %v327 = vshrl.u32 %v187, 16
      %v329 = vrot.slane %v327, 4
      %v330 = vor.u32 %v329, %v325
      %v331 = vrot.slane %v330, 4
      %v333 = vshll.u32 %v210, 16
      %v335 = vrot.slane %v333, 5
      %v336 = vsel %vm216, %v331, %v335
      %v338 = vshrl.u32 %v188, 16
      %v340 = vrot.slane %v338, 4
      %v341 = vshll.u32 %v188, 16
      %v343 = vrot.slane %v341, 5
      %v344 = vor.u32 %v340, %v343
      %v345 = vrot.slane %v344, 4
      %v347 = vshll.u32 %v189, 16
      %v349 = vrot.slane %v347, 5
      %v350 = vsel %vm216, %v345, %v349
      %v351 = vshrl.u32 %v189, 16
      %v353 = vrot.slane %v351, 4
      %v354 = vor.u32 %v353, %v349
      %v355 = vrot.slane %v354, 4
      %v357 = vshll.u32 %v211, 16
      %v359 = vrot.slane %v357, 5
      %v360 = vsel %vm216, %v355, %v359
      %v362 = vshrl.u32 %v190, 16
      %v364 = vrot.slane %v362, 4
      %v365 = vshll.u32 %v190, 16
      %v367 = vrot.slane %v365, 5
      %v368 = vor.u32 %v364, %v367
      %v369 = vrot.slane %v368, 4
      %v371 = vshll.u32 %v191, 16
      %v373 = vrot.slane %v371, 5
      %v374 = vsel %vm216, %v369, %v373
      %v375 = vshrl.u32 %v191, 16
      %v377 = vrot.slane %v375, 4
      %v378 = vor.u32 %v377, %v373
      %v379 = vrot.slane %v378, 4
      %v381 = vshll.u32 %v212, 16
      %v383 = vrot.slane %v381, 5
      %v384 = vsel %vm216, %v379, %v383
      %v386 = vshrl.u32 %v192, 16
      %v388 = vrot.slane %v386, 4
      %v389 = vshll.u32 %v192, 16
      %v391 = vrot.slane %v389, 5
      %v392 = vor.u32 %v388, %v391
      %v393 = vrot.slane %v392, 4
      %v395 = vshll.u32 %v193, 16
      %v397 = vrot.slane %v395, 5
      %v398 = vsel %vm216, %v393, %v397
      %v399 = vshrl.u32 %v193, 16
      %v401 = vrot.slane %v399, 4
      %v402 = vor.u32 %v401, %v397
      %v403 = vrot.slane %v402, 4
      %v405 = vshll.u32 %v213, 16
      %v407 = vrot.slane %v405, 5
      %v408 = vsel %vm216, %v403, %v407
      %s409 = scalar_lea.vmem %s1, 48
      %v410 = vld [vmem:[%s409] sm:$0xf]
      %v411 = vld [vmem:[%s409 + $0x4] sm:$0xf]
      %v412 = vld [vmem:[%s409 + $0x8] sm:$0xf]
      %v413 = vld [vmem:[%s409 + $0xc] sm:$0xf]
      %v414 = vld [vmem:[%s409 + $0x10] sm:$0xf]
      %v415 = vld [vmem:[%s409 + $0x14] sm:$0xf]
      %v416 = vld [vmem:[%s409 + $0x18] sm:$0xf]
      %v417 = vld [vmem:[%s409 + $0x1c] sm:$0xf]
      %v418 = vld [vmem:[%s409 + $0x20] sm:$0xf]
      %v419 = vld [vmem:[%s409 + $0x24] sm:$0xf]
      %v420 = vld [vmem:[%s409 + $0x28] sm:$0xf]
      %v421 = vld [vmem:[%s409 + $0x2c] sm:$0xf]
      %v422 = vunpack.c.l.b16 %v230
      %v423 = vunpack.c.l.b16 %v240
      %v424 = vunpack.c.l.b16 %v254
      %v425 = vunpack.c.l.b16 %v264
      %v426 = vunpack.c.l.b16 %v278
      %v427 = vunpack.c.l.b16 %v288
      %v428 = vunpack.c.l.b16 %v302
      %v429 = vunpack.c.l.b16 %v312
      %v430 = vunpack.c.l.b16 %v326
      %v431 = vunpack.c.l.b16 %v336
      %v432 = vunpack.c.l.b16 %v350
      %v433 = vunpack.c.l.b16 %v360
      %v434 = vunpack.c.l.b16 %v374
      %v435 = vunpack.c.l.b16 %v384
      %v436 = vunpack.c.l.b16 %v398
      %v437 = vunpack.c.l.b16 %v408
      %v438 = vpack.c.b16 %v423, %v422
      %v439 = vpack.c.b16 %v425, %v424
      %v440 = vpack.c.b16 %v427, %v426
      %v441 = vpack.c.b16 %v429, %v428
      %v442 = vpack.c.b16 %v431, %v430
      %v443 = vpack.c.b16 %v433, %v432
      %v444 = vpack.c.b16 %v435, %v434
      %v445 = vpack.c.b16 %v437, %v436
      %v458 = vunpack.c.l.b16 %v410
      %v459 = vunpack.c.l.b16 %v411
      %v460 = vunpack.c.l.b16 %v412
      %v461 = vunpack.c.l.b16 %v413
      %v462 = vunpack.c.l.b16 %v414
      %v463 = vunpack.c.l.b16 %v415
      %v464 = vunpack.c.l.b16 %v416
      %v465 = vunpack.c.l.b16 %v417
      %v466 = vunpack.c.l.b16 %v418
      %v467 = vunpack.c.l.b16 %v419
      %v468 = vunpack.c.l.b16 %v420
      %v469 = vunpack.c.l.b16 %v421
      %v470 = vpack.c.b16 %v459, %v458
      %v471 = vpack.c.b16 %v461, %v460
      %v472 = vpack.c.b16 %v463, %v462
      %v473 = vpack.c.b16 %v465, %v464
      %v474 = vpack.c.b16 %v467, %v466
      %v475 = vpack.c.b16 %v469, %v468
      %vm482 = vcmask 785408
      %v484 = vsel %vm482, %v438, 0
      %v487 = vsel %vm482, %v439, 0
      %v490 = vsel %vm482, %v440, 0
      %v493 = vsel %vm482, %v441, 0
      %v496 = vsel %vm482, %v442, 0
      %v499 = vsel %vm482, %v443, 0
      %v502 = vsel %vm482, %v444, 0
      %v505 = vsel %vm482, %v445, 0
      %507 = vmatpush.bf16.msra.mxu0 0
      %508 = vmatpush.bf16.msra.mxu0 0
      %509 = vmatpush.bf16.msra.mxu0 %v475
      %510 = vmatpush.bf16.msra.mxu0 %v474
      %511 = vmatpush.bf16.msra.mxu0 %v473
      %512 = vmatpush.bf16.msra.mxu0 %v472
      %513 = vmatpush.bf16.msra.mxu0 %v471
      %514 = vmatpush.bf16.msra.mxu0 %v470
      %515 = vmatmul.bf16.gmra.mxu0 %v484
      %v516 = vpop.f32.mrf.mxu0
      %v517 = vadd.f32 0.0, %v516
      %v518 = vpop.f32.mrf.mxu0
      %v519 = vadd.f32 0.0, %v518
      %520 = vmatmul.bf16.gmra.mxu0 %v487
      %v521 = vpop.f32.mrf.mxu0
      %v522 = vadd.f32 0.0, %v521
      %v523 = vpop.f32.mrf.mxu0
      %v524 = vadd.f32 0.0, %v523
      %525 = vmatmul.bf16.gmra.mxu0 %v490
      %v526 = vpop.f32.mrf.mxu0
      %v527 = vadd.f32 0.0, %v526
      %v528 = vpop.f32.mrf.mxu0
      %v529 = vadd.f32 0.0, %v528
      %530 = vmatmul.bf16.gmra.mxu0 %v493
      %v531 = vpop.f32.mrf.mxu0
      %v532 = vadd.f32 0.0, %v531
      %v533 = vpop.f32.mrf.mxu0
      %v534 = vadd.f32 0.0, %v533
      %535 = vmatmul.bf16.gmra.mxu0 %v496
      %v536 = vpop.f32.mrf.mxu0
      %v537 = vadd.f32 0.0, %v536
      %v538 = vpop.f32.mrf.mxu0
      %v539 = vadd.f32 0.0, %v538
      %540 = vmatmul.bf16.gmra.mxu0 %v499
      %v541 = vpop.f32.mrf.mxu0
      %v542 = vadd.f32 0.0, %v541
      %v543 = vpop.f32.mrf.mxu0
      %v544 = vadd.f32 0.0, %v543
      %545 = vmatmul.bf16.gmra.mxu0 %v502
      %v546 = vpop.f32.mrf.mxu0
      %v547 = vadd.f32 0.0, %v546
      %v548 = vpop.f32.mrf.mxu0
      %v549 = vadd.f32 0.0, %v548
      %550 = vmatmul.bf16.gmra.mxu0 %v505
      %v551 = vpop.f32.mrf.mxu0
      %v552 = vadd.f32 0.0, %v551
      %v553 = vpop.f32.mrf.mxu0
      %v554 = vadd.f32 0.0, %v553
      %555 = vdwg.mxu0
      %v572 = vunpack.c.l.b16 %v178
      %v573 = vunpack.c.l.b16 %v179
      %v574 = vunpack.c.l.b16 %v180
      %v575 = vunpack.c.l.b16 %v181
      %v576 = vunpack.c.l.b16 %v182
      %v577 = vunpack.c.l.b16 %v183
      %v578 = vunpack.c.l.b16 %v184
      %v579 = vunpack.c.l.b16 %v185
      %v580 = vunpack.c.l.b16 %v186
      %v581 = vunpack.c.l.b16 %v187
      %v582 = vunpack.c.l.b16 %v188
      %v583 = vunpack.c.l.b16 %v189
      %v584 = vunpack.c.l.b16 %v190
      %v585 = vunpack.c.l.b16 %v191
      %v586 = vunpack.c.l.b16 %v192
      %v587 = vunpack.c.l.b16 %v193
      %v588 = vpack.c.b16 %v573, %v572
      %v589 = vpack.c.b16 %v575, %v574
      %v590 = vpack.c.b16 %v577, %v576
      %v591 = vpack.c.b16 %v579, %v578
      %v592 = vpack.c.b16 %v581, %v580
      %v593 = vpack.c.b16 %v583, %v582
      %v594 = vpack.c.b16 %v585, %v584
      %v595 = vpack.c.b16 %v587, %v586
      %v608 = vunpack.c.l.b16 %v194
      %v609 = vunpack.c.l.b16 %v195
      %v610 = vunpack.c.l.b16 %v196
      %v611 = vunpack.c.l.b16 %v197
      %v612 = vunpack.c.l.b16 %v198
      %v613 = vunpack.c.l.b16 %v199
      %v614 = vunpack.c.l.b16 %v200
      %v615 = vunpack.c.l.b16 %v201
      %v616 = vunpack.c.l.b16 %v202
      %v617 = vunpack.c.l.b16 %v203
      %v618 = vunpack.c.l.b16 %v204
      %v619 = vunpack.c.l.b16 %v205
      %v620 = vpack.c.b16 %v609, %v608
      %v621 = vpack.c.b16 %v611, %v610
      %v622 = vpack.c.b16 %v613, %v612
      %v623 = vpack.c.b16 %v615, %v614
      %v624 = vpack.c.b16 %v617, %v616
      %v625 = vpack.c.b16 %v619, %v618
      %v633 = vsel %vm482, %v588, 0
      %v636 = vsel %vm482, %v589, 0
      %v639 = vsel %vm482, %v590, 0
      %v642 = vsel %vm482, %v591, 0
      %v645 = vsel %vm482, %v592, 0
      %v648 = vsel %vm482, %v593, 0
      %v651 = vsel %vm482, %v594, 0
      %v654 = vsel %vm482, %v595, 0
      %656 = vmatpush.bf16.msra.mxu0 0
      %657 = vmatpush.bf16.msra.mxu0 0
      %658 = vmatpush.bf16.msra.mxu0 %v625
      %659 = vmatpush.bf16.msra.mxu0 %v624
      %660 = vmatpush.bf16.msra.mxu0 %v623
      %661 = vmatpush.bf16.msra.mxu0 %v622
      %662 = vmatpush.bf16.msra.mxu0 %v621
      %663 = vmatpush.bf16.msra.mxu0 %v620
      %664 = vmatmul.bf16.gmra.mxu0 %v633
      %v665 = vpop.f32.mrf.mxu0
      %v666 = vadd.f32 %v517, %v665
      %v667 = vpop.f32.mrf.mxu0
      %v668 = vadd.f32 %v519, %v667
      %669 = vmatmul.bf16.gmra.mxu0 %v636
      %v670 = vpop.f32.mrf.mxu0
      %v671 = vadd.f32 %v522, %v670
      %v672 = vpop.f32.mrf.mxu0
      %v673 = vadd.f32 %v524, %v672
      %674 = vmatmul.bf16.gmra.mxu0 %v639
      %v675 = vpop.f32.mrf.mxu0
      %v676 = vadd.f32 %v527, %v675
      %v677 = vpop.f32.mrf.mxu0
      %v678 = vadd.f32 %v529, %v677
      %679 = vmatmul.bf16.gmra.mxu0 %v642
      %v680 = vpop.f32.mrf.mxu0
      %v681 = vadd.f32 %v532, %v680
      %v682 = vpop.f32.mrf.mxu0
      %v683 = vadd.f32 %v534, %v682
      %684 = vmatmul.bf16.gmra.mxu0 %v645
      %v685 = vpop.f32.mrf.mxu0
      %v686 = vadd.f32 %v537, %v685
      %v687 = vpop.f32.mrf.mxu0
      %v688 = vadd.f32 %v539, %v687
      %689 = vmatmul.bf16.gmra.mxu0 %v648
      %v690 = vpop.f32.mrf.mxu0
      %v691 = vadd.f32 %v542, %v690
      %v692 = vpop.f32.mrf.mxu0
      %v693 = vadd.f32 %v544, %v692
      %694 = vmatmul.bf16.gmra.mxu0 %v651
      %v695 = vpop.f32.mrf.mxu0
      %v696 = vadd.f32 %v547, %v695
      %v697 = vpop.f32.mrf.mxu0
      %v698 = vadd.f32 %v549, %v697
      %699 = vmatmul.bf16.gmra.mxu0 %v654
      %v700 = vpop.f32.mrf.mxu0
      %v701 = vadd.f32 %v552, %v700
      %v702 = vpop.f32.mrf.mxu0
      %v703 = vadd.f32 %v554, %v702
      %704 = vdwg.mxu0
      %v705 = vld [vmem:[%s169] sm:$0xe]
      %v706 = vld [vmem:[%s169 + $0xc] sm:$0xe]
      %v707 = vld [vmem:[%s169 + $0x18] sm:$0xe]
      %v708 = vld [vmem:[%s169 + $0x24] sm:$0xe]
      %v709 = vld [vmem:[%s169 + $0x30] sm:$0xe]
      %v710 = vld [vmem:[%s169 + $0x3c] sm:$0xe]
      %v711 = vld [vmem:[%s169 + $0x48] sm:$0xe]
      %v712 = vld [vmem:[%s169 + $0x54] sm:$0xe]
      %vm729 = vcmask 1042432
      %vm730 = vcmask 1046532
      %vm731 = vmor %vm729, %vm730
      %v732 = vrot.slane %v705, 5
      %v733 = vrot.slane %v732, 4
      %v734 = vrot.slane %v179, 5
      %v735 = vsel %vm731, %v733, %v734
      %v736 = vrot.slane %v734, 4
      %v737 = vrot.slane %v206, 5
      %v738 = vsel %vm731, %v736, %v737
      %v739 = vrot.slane %v706, 5
      %v740 = vrot.slane %v739, 4
      %v741 = vrot.slane %v181, 5
      %v742 = vsel %vm731, %v740, %v741
      %v743 = vrot.slane %v741, 4
      %v744 = vrot.slane %v207, 5
      %v745 = vsel %vm731, %v743, %v744
      %v746 = vrot.slane %v707, 5
      %v747 = vrot.slane %v746, 4
      %v748 = vrot.slane %v183, 5
      %v749 = vsel %vm731, %v747, %v748
      %v750 = vrot.slane %v748, 4
      %v751 = vrot.slane %v208, 5
      %v752 = vsel %vm731, %v750, %v751
      %v753 = vrot.slane %v708, 5
      %v754 = vrot.slane %v753, 4
      %v755 = vrot.slane %v185, 5
      %v756 = vsel %vm731, %v754, %v755
      %v757 = vrot.slane %v755, 4
      %v758 = vrot.slane %v209, 5
      %v759 = vsel %vm731, %v757, %v758
      %v760 = vrot.slane %v709, 5
      %v761 = vrot.slane %v760, 4
      %v762 = vrot.slane %v187, 5
      %v763 = vsel %vm731, %v761, %v762
      %v764 = vrot.slane %v762, 4
      %v765 = vrot.slane %v210, 5
      %v766 = vsel %vm731, %v764, %v765
      %v767 = vrot.slane %v710, 5
      %v768 = vrot.slane %v767, 4
      %v769 = vrot.slane %v189, 5
      %v770 = vsel %vm731, %v768, %v769
      %v771 = vrot.slane %v769, 4
      %v772 = vrot.slane %v211, 5
      %v773 = vsel %vm731, %v771, %v772
      %v774 = vrot.slane %v711, 5
      %v775 = vrot.slane %v774, 4
      %v776 = vrot.slane %v191, 5
      %v777 = vsel %vm731, %v775, %v776
      %v778 = vrot.slane %v776, 4
      %v779 = vrot.slane %v212, 5
      %v780 = vsel %vm731, %v778, %v779
      %v781 = vrot.slane %v712, 5
      %v782 = vrot.slane %v781, 4
      %v783 = vrot.slane %v193, 5
      %v784 = vsel %vm731, %v782, %v783
      %v785 = vrot.slane %v783, 4
      %v786 = vrot.slane %v213, 5
      %v787 = vsel %vm731, %v785, %v786
      %s788 = scalar_lea.vmem %s1, 96
      %v789 = vld [vmem:[%s788] sm:$0xf]
      %v790 = vld [vmem:[%s788 + $0x4] sm:$0xf]
      %v791 = vld [vmem:[%s788 + $0x8] sm:$0xf]
      %v792 = vld [vmem:[%s788 + $0xc] sm:$0xf]
      %v793 = vld [vmem:[%s788 + $0x10] sm:$0xf]
      %v794 = vld [vmem:[%s788 + $0x14] sm:$0xf]
      %v795 = vld [vmem:[%s788 + $0x18] sm:$0xf]
      %v796 = vld [vmem:[%s788 + $0x1c] sm:$0xf]
      %v797 = vld [vmem:[%s788 + $0x20] sm:$0xf]
      %v798 = vld [vmem:[%s788 + $0x24] sm:$0xf]
      %v799 = vld [vmem:[%s788 + $0x28] sm:$0xf]
      %v800 = vld [vmem:[%s788 + $0x2c] sm:$0xf]
      %v801 = vunpack.c.l.b16 %v735
      %v802 = vunpack.c.l.b16 %v738
      %v803 = vunpack.c.l.b16 %v742
      %v804 = vunpack.c.l.b16 %v745
      %v805 = vunpack.c.l.b16 %v749
      %v806 = vunpack.c.l.b16 %v752
      %v807 = vunpack.c.l.b16 %v756
      %v808 = vunpack.c.l.b16 %v759
      %v809 = vunpack.c.l.b16 %v763
      %v810 = vunpack.c.l.b16 %v766
      %v811 = vunpack.c.l.b16 %v770
      %v812 = vunpack.c.l.b16 %v773
      %v813 = vunpack.c.l.b16 %v777
      %v814 = vunpack.c.l.b16 %v780
      %v815 = vunpack.c.l.b16 %v784
      %v816 = vunpack.c.l.b16 %v787
      %v817 = vpack.c.b16 %v802, %v801
      %v818 = vpack.c.b16 %v804, %v803
      %v819 = vpack.c.b16 %v806, %v805
      %v820 = vpack.c.b16 %v808, %v807
      %v821 = vpack.c.b16 %v810, %v809
      %v822 = vpack.c.b16 %v812, %v811
      %v823 = vpack.c.b16 %v814, %v813
      %v824 = vpack.c.b16 %v816, %v815
      %v837 = vunpack.c.l.b16 %v789
      %v838 = vunpack.c.l.b16 %v790
      %v839 = vunpack.c.l.b16 %v791
      %v840 = vunpack.c.l.b16 %v792
      %v841 = vunpack.c.l.b16 %v793
      %v842 = vunpack.c.l.b16 %v794
      %v843 = vunpack.c.l.b16 %v795
      %v844 = vunpack.c.l.b16 %v796
      %v845 = vunpack.c.l.b16 %v797
      %v846 = vunpack.c.l.b16 %v798
      %v847 = vunpack.c.l.b16 %v799
      %v848 = vunpack.c.l.b16 %v800
      %v849 = vpack.c.b16 %v838, %v837
      %v850 = vpack.c.b16 %v840, %v839
      %v851 = vpack.c.b16 %v842, %v841
      %v852 = vpack.c.b16 %v844, %v843
      %v853 = vpack.c.b16 %v846, %v845
      %v854 = vpack.c.b16 %v848, %v847
      %v862 = vsel %vm482, %v817, 0
      %v865 = vsel %vm482, %v818, 0
      %v868 = vsel %vm482, %v819, 0
      %v871 = vsel %vm482, %v820, 0
      %v874 = vsel %vm482, %v821, 0
      %v877 = vsel %vm482, %v822, 0
      %v880 = vsel %vm482, %v823, 0
      %v883 = vsel %vm482, %v824, 0
      %885 = vmatpush.bf16.msra.mxu0 0
      %886 = vmatpush.bf16.msra.mxu0 0
      %887 = vmatpush.bf16.msra.mxu0 %v854
      %888 = vmatpush.bf16.msra.mxu0 %v853
      %889 = vmatpush.bf16.msra.mxu0 %v852
      %890 = vmatpush.bf16.msra.mxu0 %v851
      %891 = vmatpush.bf16.msra.mxu0 %v850
      %892 = vmatpush.bf16.msra.mxu0 %v849
      %893 = vmatmul.bf16.gmra.mxu0 %v862
      %v894 = vpop.f32.mrf.mxu0
      %v895 = vadd.f32 0.0, %v894
      %v896 = vpop.f32.mrf.mxu0
      %v897 = vadd.f32 0.0, %v896
      %898 = vmatmul.bf16.gmra.mxu0 %v865
      %v899 = vpop.f32.mrf.mxu0
      %v900 = vadd.f32 0.0, %v899
      %v901 = vpop.f32.mrf.mxu0
      %v902 = vadd.f32 0.0, %v901
      %903 = vmatmul.bf16.gmra.mxu0 %v868
      %v904 = vpop.f32.mrf.mxu0
      %v905 = vadd.f32 0.0, %v904
      %v906 = vpop.f32.mrf.mxu0
      %v907 = vadd.f32 0.0, %v906
      %908 = vmatmul.bf16.gmra.mxu0 %v871
      %v909 = vpop.f32.mrf.mxu0
      %v910 = vadd.f32 0.0, %v909
      %v911 = vpop.f32.mrf.mxu0
      %v912 = vadd.f32 0.0, %v911
      %913 = vmatmul.bf16.gmra.mxu0 %v874
      %v914 = vpop.f32.mrf.mxu0
      %v915 = vadd.f32 0.0, %v914
      %v916 = vpop.f32.mrf.mxu0
      %v917 = vadd.f32 0.0, %v916
      %918 = vmatmul.bf16.gmra.mxu0 %v877
      %v919 = vpop.f32.mrf.mxu0
      %v920 = vadd.f32 0.0, %v919
      %v921 = vpop.f32.mrf.mxu0
      %v922 = vadd.f32 0.0, %v921
      %923 = vmatmul.bf16.gmra.mxu0 %v880
      %v924 = vpop.f32.mrf.mxu0
      %v925 = vadd.f32 0.0, %v924
      %v926 = vpop.f32.mrf.mxu0
      %v927 = vadd.f32 0.0, %v926
      %928 = vmatmul.bf16.gmra.mxu0 %v883
      %v929 = vpop.f32.mrf.mxu0
      %v930 = vadd.f32 0.0, %v929
      %v931 = vpop.f32.mrf.mxu0
      %v932 = vadd.f32 0.0, %v931
      %933 = vdwg.mxu0
      %v934 = vadd.f32 %v666, %v895
      %v935 = vadd.f32 %v668, %v897
      %v936 = vadd.f32 %v671, %v900
      %v937 = vadd.f32 %v673, %v902
      %v938 = vadd.f32 %v676, %v905
      %v939 = vadd.f32 %v678, %v907
      %v940 = vadd.f32 %v681, %v910
      %v941 = vadd.f32 %v683, %v912
      %v942 = vadd.f32 %v686, %v915
      %v943 = vadd.f32 %v688, %v917
      %v944 = vadd.f32 %v691, %v920
      %v945 = vadd.f32 %v693, %v922
      %v946 = vadd.f32 %v696, %v925
      %v947 = vadd.f32 %v698, %v927
      %v948 = vadd.f32 %v701, %v930
      %v949 = vadd.f32 %v703, %v932
      %v950 = vld [vmem:[%s2] sm:$0x1]
      %v952 = vperm.slane %v950, 0
      %v954 = vadd.f32 %v934, %v952
      %v955 = vadd.f32 %v935, %v952
      %v956 = vadd.f32 %v936, %v952
      %v957 = vadd.f32 %v937, %v952
      %v958 = vadd.f32 %v938, %v952
      %v959 = vadd.f32 %v939, %v952
      %v960 = vadd.f32 %v940, %v952
      %v961 = vadd.f32 %v941, %v952
      %v962 = vadd.f32 %v942, %v952
      %v963 = vadd.f32 %v943, %v952
      %v964 = vadd.f32 %v944, %v952
      %v965 = vadd.f32 %v945, %v952
      %v966 = vadd.f32 %v946, %v952
      %v967 = vadd.f32 %v947, %v952
      %v968 = vadd.f32 %v948, %v952
      %v969 = vadd.f32 %v949, %v952
      %vm970 = vcmask 23552
      %971 = vst.msk [vmem:[%s175] sm:$0xff] %vm970, %v954
      %972 = vst.msk [vmem:[%s175 + $0x8] sm:$0xff] %vm970, %v955
      %973 = vst.msk [vmem:[%s175 + $0x10] sm:$0xff] %vm970, %v956
      %974 = vst.msk [vmem:[%s175 + $0x18] sm:$0xff] %vm970, %v957
      %975 = vst.msk [vmem:[%s175 + $0x20] sm:$0xff] %vm970, %v958
      %976 = vst.msk [vmem:[%s175 + $0x28] sm:$0xff] %vm970, %v959
      %977 = vst.msk [vmem:[%s175 + $0x30] sm:$0xff] %vm970, %v960
      %978 = vst.msk [vmem:[%s175 + $0x38] sm:$0xff] %vm970, %v961
      %979 = vst.msk [vmem:[%s175 + $0x40] sm:$0xff] %vm970, %v962
      %980 = vst.msk [vmem:[%s175 + $0x48] sm:$0xff] %vm970, %v963
      %981 = vst.msk [vmem:[%s175 + $0x50] sm:$0xff] %vm970, %v964
      %982 = vst.msk [vmem:[%s175 + $0x58] sm:$0xff] %vm970, %v965
      %983 = vst.msk [vmem:[%s175 + $0x60] sm:$0xff] %vm970, %v966
      %984 = vst.msk [vmem:[%s175 + $0x68] sm:$0xff] %vm970, %v967
      %985 = vst.msk [vmem:[%s175 + $0x70] sm:$0xff] %vm970, %v968
      %986 = vst.msk [vmem:[%s175 + $0x78] sm:$0xff] %vm970, %v969
      %s987 = smul.u32 16, %s14
      %p988 = scmp.lt.s32.totalorder %s987, 63
      %s989 = scalar_select %p988, %s987, 63
      %s990 = smul.addr %s989, 8
      %s991 = scalar_lea.vmem %s3, %s990
      // Predicated region
      $region33: #{_lambda_.39} parent=31 // pred_check
        %p992 = pneg %p100
      $region34: #{_lambda_.39} parent=31 // pred_check_branch
        %994 = sbr.rel (%p992) target = $region36
      $region35: #{_lambda_.39} parent=31 // pred_region
        %s995 = smul.u32 16, %s14
      $region36: #{_lambda_.39} parent=31 // pred_fallthru
        _
    $region32: #{_lambda_.39} parent=5 // pred_fallthru
      _
    %p996 = scmp.le.s32.totalorder 2, %s9
    // Predicated region
    $region37: #{_lambda_.39} parent=5 // pred_check
      %p997 = pneg %p996
    $region38: #{_lambda_.39} parent=5 // pred_check_branch
      %999 = sbr.rel (%p997) target = $region40
    $region39: #{_lambda_.39} parent=5 // pred_region
      %s1000 = ssub.s32 %s9, 2
      // Predicated region
      $region41: #{_lambda_.39} parent=39 // pred_check
        %p1001 = pneg %p106
      $region42: #{_lambda_.39} parent=39 // pred_check_branch
        %1003 = sbr.rel (%p1001) target = $region44
      $region43: #{_lambda_.39} parent=39 // pred_region
        %s1004 = smul.u32 16, %s15
        %p1005 = scmp.lt.s32.totalorder %s1004, 63
        %s1006 = scalar_select %p1005, %s1004, 63
        %s1007 = smul.addr %s1006, 8
        %s1008 = scalar_lea.vmem %s3, %s1007
      $region44: #{_lambda_.39} parent=39 // pred_fallthru
        _
    $region40: #{_lambda_.39} parent=5 // pred_fallthru
      _
  $region6: #{_lambda_.39} parent=0 // loop_footer
    %s13 = sadd.s32 1, %s9
  $region7: #{_lambda_.39} parent=0 // loop_footer_branch
    %8 = sbr.rel target = $region3
  $region8: #{_lambda_.39} parent=0 // loop_exit
    _

</llo_original>
